<compile_context>
chip_gen: v7x
topology: tpu7x:2x2x1
jax: 0.10.0
libtpu: 0.0.40
codegen_flags: <defaults>
</compile_context>

<pallas_src>
import functools
import math

import jax
import jax.numpy as jnp
from jax.experimental import pallas as pl
from jax.experimental.pallas import tpu as pltpu

GROUP = 8     # f32 sublane tile: each 3-channel feature map is padded to 8 rows
MARGIN = 3    # max conv padding in the net (e_conv4 is 7x7 / pad 3)


# ---------------------------------------------------------------------------
# In-kernel helpers
# ---------------------------------------------------------------------------
def _extend(x, S):
    """Zero-extend the flat lane axis by S on both sides so taps never go OOB."""
    z = jnp.zeros((x.shape[0], S), x.dtype)
    return jnp.concatenate([z, x, z], axis=1)


def _same_conv(ext, w, b, k, *, Wp, Lp, S):
    """'Same' conv (stride 1, pad k//2) + ReLU as a single MXU matmul.

    ext : (C, Lp + 2*S) zero-extended padded-flat input maps (C multiple of 8,
          margin/dummy rows already zero)
    w   : (8, k*k*C)    flattened weights (rows >=3 and dummy-channel cols = 0)
    b   : (8, 1)        bias (rows >= 3 are 0)
    returns (8, Lp) padded-flat output (rows >= 3 are exactly 0 after ReLU)
    """
    pad = k // 2
    taps = []
    for dy in range(k):
        for dx in range(k):
            off = S + (dy - pad) * Wp + (dx - pad)
            taps.append(ext[:, off:off + Lp])          # contiguous lane slice
    col = taps[0] if len(taps) == 1 else jnp.concatenate(taps, axis=0)
    y = jnp.dot(w, col, preferred_element_type=jnp.float32)   # MXU, f32 acc
    return jnp.maximum(y + b, 0.0)


# ---------------------------------------------------------------------------
# Pallas kernel: full AOD-Net forward for one batch element
# ---------------------------------------------------------------------------
def aod_kernel(x_ref, mask_ref, w1, b1, w2, b2, w3, b3, w4, b4, w5, b5,
               out_ref, *, Wp, Lp, S):
    x0 = x_ref[0]                 # (8, Lp); channels 3..7 are zero
    mask = mask_ref[...]          # (1, Lp); 1 inside the valid HxW window

    conv = functools.partial(_same_conv, Wp=Wp, Lp=Lp, S=S)

    # Mask re-zeroes the padded frame margin so the next conv sees true
    # zero-padding (conv outputs are garbage in the margin / tail lanes).
    x1 = conv(_extend(x0, S), w1[...], b1[...], 1) * mask
    x2 = conv(_extend(x1, S), w2[...], b2[...], 3) * mask
    x3 = conv(_extend(jnp.concatenate([x1, x2], axis=0), S),
              w3[...], b3[...], 5) * mask
    x4 = conv(_extend(jnp.concatenate([x2, x3], axis=0), S),
              w4[...], b4[...], 7) * mask
    x5 = conv(_extend(jnp.concatenate([x1, x2, x3, x4], axis=0), S),
              w5[...], b5[...], 3)

    clean = jnp.maximum(x5 * x0 - x5 + 1.0, 0.0)
    out_ref[0] = clean.astype(out_ref.dtype)


# ---------------------------------------------------------------------------
# Wrapper (layout plumbing + weight flattening happen in plain XLA)
# ---------------------------------------------------------------------------
def _prep_weights(w, b):
    """(c_out, c_in, k, k) torch-layout conv params -> flattened MXU operands.

    Weight matrix shape: (8, k*k*n_groups*8), column index
    ((dy*k + dx)*n_groups + g)*8 + r, matching the in-kernel im2col row order.
    Padded output rows and dummy input channels are zero.
    """
    c_out, c_in, k, _ = w.shape
    n_g = c_in // 3
    wt = jnp.transpose(w.astype(jnp.float32), (0, 2, 3, 1))      # (o, dy, dx, ci)
    wt = wt.reshape(c_out, k, k, n_g, 3)                          # ci -> (g, r)
    wp = jnp.zeros((GROUP, k, k, n_g, GROUP), jnp.float32)
    wp = wp.at[:c_out, :, :, :, :3].set(wt)
    wp = wp.reshape(GROUP, k * k * n_g * GROUP)
    bp = jnp.zeros((GROUP, 1), jnp.float32).at[:c_out, 0].set(b.astype(jnp.float32))
    return wp, bp


def aod_net_pallas(x, params):
    N, C, H, W = x.shape
    assert C == 3
    Hp, Wp = H + 2 * MARGIN, W + 2 * MARGIN
    L = Hp * Wp
    Lp = ((L + 127) // 128) * 128          # lane-dense flat length
    S = MARGIN * Wp + MARGIN               # max |tap offset| in flat coordinates

    # Padded-flat, channel-padded, lane-dense input: (N, 8, Lp).
    xf = jnp.pad(x.astype(jnp.float32),
                 ((0, 0), (0, GROUP - C), (MARGIN, MARGIN), (MARGIN, MARGIN)))
    xf = xf.reshape(N, GROUP, L)
    xf = jnp.pad(xf, ((0, 0), (0, 0), (0, Lp - L)))

    # 1.0 inside the valid HxW window of the padded frame, 0 elsewhere.
    mask2d = jnp.zeros((Hp, Wp), jnp.float32)
    mask2d = mask2d.at[MARGIN:MARGIN + H, MARGIN:MARGIN + W].set(1.0)
    mask = jnp.pad(mask2d.reshape(1, L), ((0, 0), (0, Lp - L)))

    flat = []
    for wgt, bias in params:
        wm, bm = _prep_weights(wgt, bias)
        flat += [wm, bm]

    kern = functools.partial(aod_kernel, Wp=Wp, Lp=Lp, S=S)

    def const_spec(a):
        return pl.BlockSpec(a.shape, lambda n: (0,) * a.ndim)

    in_specs = ([pl.BlockSpec((1, GROUP, Lp), lambda n: (n, 0, 0)),
                 const_spec(mask)] + [const_spec(a) for a in flat])
    out_specs = pl.BlockSpec((1, GROUP, Lp), lambda n: (n, 0, 0))

    out_flat = pl.pallas_call(
        kern,
        out_shape=jax.ShapeDtypeStruct((N, GROUP, Lp), jnp.float32),
        grid=(N,),
        in_specs=in_specs,
        out_specs=out_specs,
        compiler_params=pltpu.CompilerParams(
            dimension_semantics=("parallel",),
            vmem_limit_bytes=32 * 1024 * 1024),
    )(xf, mask, *flat)

    out = out_flat[:, :C, :L].reshape(N, C, Hp, Wp)
    return out[:, :, MARGIN:MARGIN + H, MARGIN:MARGIN + W]


# ---------------------------------------------------------------------------
# Pure-JAX reference (f32-exact) for the correctness check
# ---------------------------------------------------------------------------
def aod_net_ref(x, params):
    def conv(h, w, b, pad):
        y = jax.lax.conv_general_dilated(
            h, w, window_strides=(1, 1), padding=[(pad, pad), (pad, pad)],
            dimension_numbers=("NCHW", "OIHW", "NCHW"),
            precision=jax.lax.Precision.HIGHEST)
        return jax.nn.relu(y + b[None, :, None, None])

    (w1, b1), (w2, b2), (w3, b3), (w4, b4), (w5, b5) = params
    x1 = conv(x, w1, b1, 0)
    x2 = conv(x1, w2, b2, 1)
    x3 = conv(jnp.concatenate([x1, x2], 1), w3, b3, 2)
    x4 = conv(jnp.concatenate([x2, x3], 1), w4, b4, 3)
    x5 = conv(jnp.concatenate([x1, x2, x3, x4], 1), w5, b5, 1)
    return jax.nn.relu(x5 * x - x5 + 1.0)


# ---------------------------------------------------------------------------
# Deterministic parameter init (PyTorch Conv2d-style uniform bounds)
# ---------------------------------------------------------------------------
def init_conv(key, c_out, c_in, k):
    kw, kb = jax.random.split(key)
    bound = 1.0 / math.sqrt(c_in * k * k)
    w = jax.random.uniform(kw, (c_out, c_in, k, k), jnp.float32, -bound, bound)
    b = jax.random.uniform(kb, (c_out,), jnp.float32, -bound, bound)
    return w, b


if __name__ == "__main__":
    key = jax.random.PRNGKey(0)
    kx, k1, k2, k3, k4, k5 = jax.random.split(key, 6)

    # Small input consistent with the module: batch=2, 3 channels, 16x16 spatial.
    x = jax.random.uniform(kx, (2, 3, 16, 16), jnp.float32)

    params = [
        init_conv(k1, 3, 3, 1),    # e_conv1
        init_conv(k2, 3, 3, 3),    # e_conv2
        init_conv(k3, 3, 6, 5),    # e_conv3
        init_conv(k4, 3, 6, 7),    # e_conv4
        init_conv(k5, 3, 12, 3),   # e_conv5
    ]

    out = jax.block_until_ready(aod_net_pallas(x, params))
    ref = jax.block_until_ready(aod_net_ref(x, params))

    assert out.shape == ref.shape == (2, 3, 16, 16)
    max_err = float(jnp.max(jnp.abs(out - ref)))
    # The MXU matmul's accumulation/rounding differs slightly from the f32-exact
    # reference; 2e-2 is far above rounding noise but far below what any
    # structural bug (wrong tap / weight / mask) would produce.
    assert max_err < 2e-2, f"Pallas output mismatch vs reference (max err {max_err})"

    print("KERNEL_OK")
</pallas_src>

<mosaic_0001>
module attributes {stable_mosaic.version = 11 : i64} {
  func.func @aod_kernel(%arg0: i32, %arg1: memref<1x8x512xf32, #tpu.memory_space<vmem>>, %arg2: memref<1x512xf32, #tpu.memory_space<vmem>>, %arg3: memref<8x8xf32, #tpu.memory_space<vmem>>, %arg4: memref<8x1xf32, #tpu.memory_space<vmem>>, %arg5: memref<8x72xf32, #tpu.memory_space<vmem>>, %arg6: memref<8x1xf32, #tpu.memory_space<vmem>>, %arg7: memref<8x400xf32, #tpu.memory_space<vmem>>, %arg8: memref<8x1xf32, #tpu.memory_space<vmem>>, %arg9: memref<8x784xf32, #tpu.memory_space<vmem>>, %arg10: memref<8x1xf32, #tpu.memory_space<vmem>>, %arg11: memref<8x288xf32, #tpu.memory_space<vmem>>, %arg12: memref<8x1xf32, #tpu.memory_space<vmem>>, %arg13: memref<1x8x512xf32, #tpu.memory_space<vmem>>) attributes {dimension_semantics = [#tpu.dimension_semantics<parallel>], iteration_bounds = array<i64: 2>, scalar_prefetch = 0 : i64, scratch_operands = 0 : i64, tpu.core_type = #tpu.core_type<tc>, window_params = [{transform_indices = @transform_0, window_bounds = array<i64: 1, 8, 512>}, {pipeline_mode = #tpu.pipeline_mode<synchronous>, transform_indices = @transform_1, window_bounds = array<i64: 1, 512>}, {pipeline_mode = #tpu.pipeline_mode<synchronous>, transform_indices = @transform_2, window_bounds = array<i64: 8, 8>}, {pipeline_mode = #tpu.pipeline_mode<synchronous>, transform_indices = @transform_3, window_bounds = array<i64: 8, 1>}, {pipeline_mode = #tpu.pipeline_mode<synchronous>, transform_indices = @transform_4, window_bounds = array<i64: 8, 72>}, {pipeline_mode = #tpu.pipeline_mode<synchronous>, transform_indices = @transform_5, window_bounds = array<i64: 8, 1>}, {pipeline_mode = #tpu.pipeline_mode<synchronous>, transform_indices = @transform_6, window_bounds = array<i64: 8, 400>}, {pipeline_mode = #tpu.pipeline_mode<synchronous>, transform_indices = @transform_7, window_bounds = array<i64: 8, 1>}, {pipeline_mode = #tpu.pipeline_mode<synchronous>, transform_indices = @transform_8, window_bounds = array<i64: 8, 784>}, {pipeline_mode = #tpu.pipeline_mode<synchronous>, transform_indices = @transform_9, window_bounds = array<i64: 8, 1>}, {pipeline_mode = #tpu.pipeline_mode<synchronous>, transform_indices = @transform_10, window_bounds = array<i64: 8, 288>}, {pipeline_mode = #tpu.pipeline_mode<synchronous>, transform_indices = @transform_11, window_bounds = array<i64: 8, 1>}, {transform_indices = @transform_12, window_bounds = array<i64: 1, 8, 512>}]} {
    %c0 = arith.constant 0 : index
    %c0_0 = arith.constant 0 : index
    %c0_1 = arith.constant 0 : index
    %0 = vector.load %arg1[%c0, %c0_0, %c0_1] : memref<1x8x512xf32, #tpu.memory_space<vmem>>, vector<1x8x512xf32>
    %1 = vector.shape_cast %0 : vector<1x8x512xf32> to vector<8x512xf32>
    %c0_2 = arith.constant 0 : index
    %c0_3 = arith.constant 0 : index
    %2 = vector.load %arg2[%c0_2, %c0_3] : memref<1x512xf32, #tpu.memory_space<vmem>>, vector<1x512xf32>
    %cst = arith.constant 0.000000e+00 : f32
    %3 = vector.broadcast %cst : f32 to vector<8x69xf32>
    %4 = tpu.concatenate %3, %1, %3 in 1 : vector<8x69xf32>, vector<8x512xf32>, vector<8x69xf32> -> vector<8x650xf32>
    %c0_4 = arith.constant 0 : index
    %c0_5 = arith.constant 0 : index
    %5 = vector.load %arg3[%c0_4, %c0_5] : memref<8x8xf32, #tpu.memory_space<vmem>>, vector<8x8xf32>
    %c0_6 = arith.constant 0 : index
    %c0_7 = arith.constant 0 : index
    %6 = vector.load %arg4[%c0_6, %c0_7] : memref<8x1xf32, #tpu.memory_space<vmem>>, vector<8x1xf32>
    %7 = vector.extract_strided_slice %4 {offsets = [0, 69], sizes = [8, 512], strides = [1, 1]} : vector<8x650xf32> to vector<8x512xf32>
    %cst_8 = arith.constant dense<0.000000e+00> : vector<8x512xf32>
    %8 = tpu.matmul %5, %7, %cst_8 {dimension_numbers = #tpu.dot_dimension_numbers<[1], [0], [0], [1], [0, 0, 1, 1], [], []>} : vector<8x8xf32>, vector<8x512xf32>, vector<8x512xf32> -> vector<8x512xf32>
    %9 = vector.broadcast %6 : vector<8x1xf32> to vector<8x512xf32>
    %10 = arith.addf %8, %9 : vector<8x512xf32>
    %cst_9 = arith.constant 0.000000e+00 : f32
    %11 = vector.broadcast %cst_9 : f32 to vector<8x512xf32>
    %12 = arith.maximumf %10, %11 : vector<8x512xf32>
    %13 = vector.broadcast %2 : vector<1x512xf32> to vector<8x512xf32>
    %14 = arith.mulf %12, %13 : vector<8x512xf32>
    %cst_10 = arith.constant 0.000000e+00 : f32
    %15 = vector.broadcast %cst_10 : f32 to vector<8x69xf32>
    %16 = tpu.concatenate %15, %14, %15 in 1 : vector<8x69xf32>, vector<8x512xf32>, vector<8x69xf32> -> vector<8x650xf32>
    %c0_11 = arith.constant 0 : index
    %c0_12 = arith.constant 0 : index
    %17 = vector.load %arg5[%c0_11, %c0_12] : memref<8x72xf32, #tpu.memory_space<vmem>>, vector<8x72xf32>
    %c0_13 = arith.constant 0 : index
    %c0_14 = arith.constant 0 : index
    %18 = vector.load %arg6[%c0_13, %c0_14] : memref<8x1xf32, #tpu.memory_space<vmem>>, vector<8x1xf32>
    %19 = vector.extract_strided_slice %16 {offsets = [0, 46], sizes = [8, 512], strides = [1, 1]} : vector<8x650xf32> to vector<8x512xf32>
    %20 = vector.extract_strided_slice %16 {offsets = [0, 47], sizes = [8, 512], strides = [1, 1]} : vector<8x650xf32> to vector<8x512xf32>
    %21 = vector.extract_strided_slice %16 {offsets = [0, 48], sizes = [8, 512], strides = [1, 1]} : vector<8x650xf32> to vector<8x512xf32>
    %22 = vector.extract_strided_slice %16 {offsets = [0, 68], sizes = [8, 512], strides = [1, 1]} : vector<8x650xf32> to vector<8x512xf32>
    %23 = vector.extract_strided_slice %16 {offsets = [0, 69], sizes = [8, 512], strides = [1, 1]} : vector<8x650xf32> to vector<8x512xf32>
    %24 = vector.extract_strided_slice %16 {offsets = [0, 70], sizes = [8, 512], strides = [1, 1]} : vector<8x650xf32> to vector<8x512xf32>
    %25 = vector.extract_strided_slice %16 {offsets = [0, 90], sizes = [8, 512], strides = [1, 1]} : vector<8x650xf32> to vector<8x512xf32>
    %26 = vector.extract_strided_slice %16 {offsets = [0, 91], sizes = [8, 512], strides = [1, 1]} : vector<8x650xf32> to vector<8x512xf32>
    %27 = vector.extract_strided_slice %16 {offsets = [0, 92], sizes = [8, 512], strides = [1, 1]} : vector<8x650xf32> to vector<8x512xf32>
    %28 = tpu.concatenate %19, %20, %21, %22, %23, %24, %25, %26, %27 in 0 : vector<8x512xf32>, vector<8x512xf32>, vector<8x512xf32>, vector<8x512xf32>, vector<8x512xf32>, vector<8x512xf32>, vector<8x512xf32>, vector<8x512xf32>, vector<8x512xf32> -> vector<72x512xf32>
    %cst_15 = arith.constant dense<0.000000e+00> : vector<8x512xf32>
    %29 = tpu.matmul %17, %28, %cst_15 {dimension_numbers = #tpu.dot_dimension_numbers<[1], [0], [0], [1], [0, 0, 1, 1], [], []>} : vector<8x72xf32>, vector<72x512xf32>, vector<8x512xf32> -> vector<8x512xf32>
    %30 = vector.broadcast %18 : vector<8x1xf32> to vector<8x512xf32>
    %31 = arith.addf %29, %30 : vector<8x512xf32>
    %cst_16 = arith.constant 0.000000e+00 : f32
    %32 = vector.broadcast %cst_16 : f32 to vector<8x512xf32>
    %33 = arith.maximumf %31, %32 : vector<8x512xf32>
    %34 = vector.broadcast %2 : vector<1x512xf32> to vector<8x512xf32>
    %35 = arith.mulf %33, %34 : vector<8x512xf32>
    %36 = tpu.concatenate %14, %35 in 0 : vector<8x512xf32>, vector<8x512xf32> -> vector<16x512xf32>
    %cst_17 = arith.constant 0.000000e+00 : f32
    %37 = vector.broadcast %cst_17 : f32 to vector<16x69xf32>
    %38 = tpu.concatenate %37, %36, %37 in 1 : vector<16x69xf32>, vector<16x512xf32>, vector<16x69xf32> -> vector<16x650xf32>
    %c0_18 = arith.constant 0 : index
    %c0_19 = arith.constant 0 : index
    %39 = vector.load %arg7[%c0_18, %c0_19] : memref<8x400xf32, #tpu.memory_space<vmem>>, vector<8x400xf32>
    %c0_20 = arith.constant 0 : index
    %c0_21 = arith.constant 0 : index
    %40 = vector.load %arg8[%c0_20, %c0_21] : memref<8x1xf32, #tpu.memory_space<vmem>>, vector<8x1xf32>
    %41 = vector.extract_strided_slice %38 {offsets = [0, 23], sizes = [16, 512], strides = [1, 1]} : vector<16x650xf32> to vector<16x512xf32>
    %42 = vector.extract_strided_slice %38 {offsets = [0, 24], sizes = [16, 512], strides = [1, 1]} : vector<16x650xf32> to vector<16x512xf32>
    %43 = vector.extract_strided_slice %38 {offsets = [0, 25], sizes = [16, 512], strides = [1, 1]} : vector<16x650xf32> to vector<16x512xf32>
    %44 = vector.extract_strided_slice %38 {offsets = [0, 26], sizes = [16, 512], strides = [1, 1]} : vector<16x650xf32> to vector<16x512xf32>
    %45 = vector.extract_strided_slice %38 {offsets = [0, 27], sizes = [16, 512], strides = [1, 1]} : vector<16x650xf32> to vector<16x512xf32>
    %46 = vector.extract_strided_slice %38 {offsets = [0, 45], sizes = [16, 512], strides = [1, 1]} : vector<16x650xf32> to vector<16x512xf32>
    %47 = vector.extract_strided_slice %38 {offsets = [0, 46], sizes = [16, 512], strides = [1, 1]} : vector<16x650xf32> to vector<16x512xf32>
    %48 = vector.extract_strided_slice %38 {offsets = [0, 47], sizes = [16, 512], strides = [1, 1]} : vector<16x650xf32> to vector<16x512xf32>
    %49 = vector.extract_strided_slice %38 {offsets = [0, 48], sizes = [16, 512], strides = [1, 1]} : vector<16x650xf32> to vector<16x512xf32>
    %50 = vector.extract_strided_slice %38 {offsets = [0, 49], sizes = [16, 512], strides = [1, 1]} : vector<16x650xf32> to vector<16x512xf32>
    %51 = vector.extract_strided_slice %38 {offsets = [0, 67], sizes = [16, 512], strides = [1, 1]} : vector<16x650xf32> to vector<16x512xf32>
    %52 = vector.extract_strided_slice %38 {offsets = [0, 68], sizes = [16, 512], strides = [1, 1]} : vector<16x650xf32> to vector<16x512xf32>
    %53 = vector.extract_strided_slice %38 {offsets = [0, 69], sizes = [16, 512], strides = [1, 1]} : vector<16x650xf32> to vector<16x512xf32>
    %54 = vector.extract_strided_slice %38 {offsets = [0, 70], sizes = [16, 512], strides = [1, 1]} : vector<16x650xf32> to vector<16x512xf32>
    %55 = vector.extract_strided_slice %38 {offsets = [0, 71], sizes = [16, 512], strides = [1, 1]} : vector<16x650xf32> to vector<16x512xf32>
    %56 = vector.extract_strided_slice %38 {offsets = [0, 89], sizes = [16, 512], strides = [1, 1]} : vector<16x650xf32> to vector<16x512xf32>
    %57 = vector.extract_strided_slice %38 {offsets = [0, 90], sizes = [16, 512], strides = [1, 1]} : vector<16x650xf32> to vector<16x512xf32>
    %58 = vector.extract_strided_slice %38 {offsets = [0, 91], sizes = [16, 512], strides = [1, 1]} : vector<16x650xf32> to vector<16x512xf32>
    %59 = vector.extract_strided_slice %38 {offsets = [0, 92], sizes = [16, 512], strides = [1, 1]} : vector<16x650xf32> to vector<16x512xf32>
    %60 = vector.extract_strided_slice %38 {offsets = [0, 93], sizes = [16, 512], strides = [1, 1]} : vector<16x650xf32> to vector<16x512xf32>
    %61 = vector.extract_strided_slice %38 {offsets = [0, 111], sizes = [16, 512], strides = [1, 1]} : vector<16x650xf32> to vector<16x512xf32>
    %62 = vector.extract_strided_slice %38 {offsets = [0, 112], sizes = [16, 512], strides = [1, 1]} : vector<16x650xf32> to vector<16x512xf32>
    %63 = vector.extract_strided_slice %38 {offsets = [0, 113], sizes = [16, 512], strides = [1, 1]} : vector<16x650xf32> to vector<16x512xf32>
    %64 = vector.extract_strided_slice %38 {offsets = [0, 114], sizes = [16, 512], strides = [1, 1]} : vector<16x650xf32> to vector<16x512xf32>
    %65 = vector.extract_strided_slice %38 {offsets = [0, 115], sizes = [16, 512], strides = [1, 1]} : vector<16x650xf32> to vector<16x512xf32>
    %66 = tpu.concatenate %41, %42, %43, %44, %45, %46, %47, %48, %49, %50, %51, %52, %53, %54, %55, %56 in 0 : vector<16x512xf32>, vector<16x512xf32>, vector<16x512xf32>, vector<16x512xf32>, vector<16x512xf32>, vector<16x512xf32>, vector<16x512xf32>, vector<16x512xf32>, vector<16x512xf32>, vector<16x512xf32>, vector<16x512xf32>, vector<16x512xf32>, vector<16x512xf32>, vector<16x512xf32>, vector<16x512xf32>, vector<16x512xf32> -> vector<256x512xf32>
    %67 = tpu.concatenate %57, %58, %59, %60, %61, %62, %63, %64, %65 in 0 : vector<16x512xf32>, vector<16x512xf32>, vector<16x512xf32>, vector<16x512xf32>, vector<16x512xf32>, vector<16x512xf32>, vector<16x512xf32>, vector<16x512xf32>, vector<16x512xf32> -> vector<144x512xf32>
    %68 = tpu.concatenate %66, %67 in 0 : vector<256x512xf32>, vector<144x512xf32> -> vector<400x512xf32>
    %cst_22 = arith.constant dense<0.000000e+00> : vector<8x512xf32>
    %69 = tpu.matmul %39, %68, %cst_22 {dimension_numbers = #tpu.dot_dimension_numbers<[1], [0], [0], [1], [0, 0, 1, 1], [], []>} : vector<8x400xf32>, vector<400x512xf32>, vector<8x512xf32> -> vector<8x512xf32>
    %70 = vector.broadcast %40 : vector<8x1xf32> to vector<8x512xf32>
    %71 = arith.addf %69, %70 : vector<8x512xf32>
    %cst_23 = arith.constant 0.000000e+00 : f32
    %72 = vector.broadcast %cst_23 : f32 to vector<8x512xf32>
    %73 = arith.maximumf %71, %72 : vector<8x512xf32>
    %74 = vector.broadcast %2 : vector<1x512xf32> to vector<8x512xf32>
    %75 = arith.mulf %73, %74 : vector<8x512xf32>
    %76 = tpu.concatenate %35, %75 in 0 : vector<8x512xf32>, vector<8x512xf32> -> vector<16x512xf32>
    %cst_24 = arith.constant 0.000000e+00 : f32
    %77 = vector.broadcast %cst_24 : f32 to vector<16x69xf32>
    %78 = tpu.concatenate %77, %76, %77 in 1 : vector<16x69xf32>, vector<16x512xf32>, vector<16x69xf32> -> vector<16x650xf32>
    %c0_25 = arith.constant 0 : index
    %c0_26 = arith.constant 0 : index
    %79 = vector.load %arg9[%c0_25, %c0_26] : memref<8x784xf32, #tpu.memory_space<vmem>>, vector<8x784xf32>
    %c0_27 = arith.constant 0 : index
    %c0_28 = arith.constant 0 : index
    %80 = vector.load %arg10[%c0_27, %c0_28] : memref<8x1xf32, #tpu.memory_space<vmem>>, vector<8x1xf32>
    %81 = vector.extract_strided_slice %78 {offsets = [0, 0], sizes = [16, 512], strides = [1, 1]} : vector<16x650xf32> to vector<16x512xf32>
    %82 = vector.extract_strided_slice %78 {offsets = [0, 1], sizes = [16, 512], strides = [1, 1]} : vector<16x650xf32> to vector<16x512xf32>
    %83 = vector.extract_strided_slice %78 {offsets = [0, 2], sizes = [16, 512], strides = [1, 1]} : vector<16x650xf32> to vector<16x512xf32>
    %84 = vector.extract_strided_slice %78 {offsets = [0, 3], sizes = [16, 512], strides = [1, 1]} : vector<16x650xf32> to vector<16x512xf32>
    %85 = vector.extract_strided_slice %78 {offsets = [0, 4], sizes = [16, 512], strides = [1, 1]} : vector<16x650xf32> to vector<16x512xf32>
    %86 = vector.extract_strided_slice %78 {offsets = [0, 5], sizes = [16, 512], strides = [1, 1]} : vector<16x650xf32> to vector<16x512xf32>
    %87 = vector.extract_strided_slice %78 {offsets = [0, 6], sizes = [16, 512], strides = [1, 1]} : vector<16x650xf32> to vector<16x512xf32>
    %88 = vector.extract_strided_slice %78 {offsets = [0, 22], sizes = [16, 512], strides = [1, 1]} : vector<16x650xf32> to vector<16x512xf32>
    %89 = vector.extract_strided_slice %78 {offsets = [0, 23], sizes = [16, 512], strides = [1, 1]} : vector<16x650xf32> to vector<16x512xf32>
    %90 = vector.extract_strided_slice %78 {offsets = [0, 24], sizes = [16, 512], strides = [1, 1]} : vector<16x650xf32> to vector<16x512xf32>
    %91 = vector.extract_strided_slice %78 {offsets = [0, 25], sizes = [16, 512], strides = [1, 1]} : vector<16x650xf32> to vector<16x512xf32>
    %92 = vector.extract_strided_slice %78 {offsets = [0, 26], sizes = [16, 512], strides = [1, 1]} : vector<16x650xf32> to vector<16x512xf32>
    %93 = vector.extract_strided_slice %78 {offsets = [0, 27], sizes = [16, 512], strides = [1, 1]} : vector<16x650xf32> to vector<16x512xf32>
    %94 = vector.extract_strided_slice %78 {offsets = [0, 28], sizes = [16, 512], strides = [1, 1]} : vector<16x650xf32> to vector<16x512xf32>
    %95 = vector.extract_strided_slice %78 {offsets = [0, 44], sizes = [16, 512], strides = [1, 1]} : vector<16x650xf32> to vector<16x512xf32>
    %96 = vector.extract_strided_slice %78 {offsets = [0, 45], sizes = [16, 512], strides = [1, 1]} : vector<16x650xf32> to vector<16x512xf32>
    %97 = vector.extract_strided_slice %78 {offsets = [0, 46], sizes = [16, 512], strides = [1, 1]} : vector<16x650xf32> to vector<16x512xf32>
    %98 = vector.extract_strided_slice %78 {offsets = [0, 47], sizes = [16, 512], strides = [1, 1]} : vector<16x650xf32> to vector<16x512xf32>
    %99 = vector.extract_strided_slice %78 {offsets = [0, 48], sizes = [16, 512], strides = [1, 1]} : vector<16x650xf32> to vector<16x512xf32>
    %100 = vector.extract_strided_slice %78 {offsets = [0, 49], sizes = [16, 512], strides = [1, 1]} : vector<16x650xf32> to vector<16x512xf32>
    %101 = vector.extract_strided_slice %78 {offsets = [0, 50], sizes = [16, 512], strides = [1, 1]} : vector<16x650xf32> to vector<16x512xf32>
    %102 = vector.extract_strided_slice %78 {offsets = [0, 66], sizes = [16, 512], strides = [1, 1]} : vector<16x650xf32> to vector<16x512xf32>
    %103 = vector.extract_strided_slice %78 {offsets = [0, 67], sizes = [16, 512], strides = [1, 1]} : vector<16x650xf32> to vector<16x512xf32>
    %104 = vector.extract_strided_slice %78 {offsets = [0, 68], sizes = [16, 512], strides = [1, 1]} : vector<16x650xf32> to vector<16x512xf32>
    %105 = vector.extract_strided_slice %78 {offsets = [0, 69], sizes = [16, 512], strides = [1, 1]} : vector<16x650xf32> to vector<16x512xf32>
    %106 = vector.extract_strided_slice %78 {offsets = [0, 70], sizes = [16, 512], strides = [1, 1]} : vector<16x650xf32> to vector<16x512xf32>
    %107 = vector.extract_strided_slice %78 {offsets = [0, 71], sizes = [16, 512], strides = [1, 1]} : vector<16x650xf32> to vector<16x512xf32>
    %108 = vector.extract_strided_slice %78 {offsets = [0, 72], sizes = [16, 512], strides = [1, 1]} : vector<16x650xf32> to vector<16x512xf32>
    %109 = vector.extract_strided_slice %78 {offsets = [0, 88], sizes = [16, 512], strides = [1, 1]} : vector<16x650xf32> to vector<16x512xf32>
    %110 = vector.extract_strided_slice %78 {offsets = [0, 89], sizes = [16, 512], strides = [1, 1]} : vector<16x650xf32> to vector<16x512xf32>
    %111 = vector.extract_strided_slice %78 {offsets = [0, 90], sizes = [16, 512], strides = [1, 1]} : vector<16x650xf32> to vector<16x512xf32>
    %112 = vector.extract_strided_slice %78 {offsets = [0, 91], sizes = [16, 512], strides = [1, 1]} : vector<16x650xf32> to vector<16x512xf32>
    %113 = vector.extract_strided_slice %78 {offsets = [0, 92], sizes = [16, 512], strides = [1, 1]} : vector<16x650xf32> to vector<16x512xf32>
    %114 = vector.extract_strided_slice %78 {offsets = [0, 93], sizes = [16, 512], strides = [1, 1]} : vector<16x650xf32> to vector<16x512xf32>
    %115 = vector.extract_strided_slice %78 {offsets = [0, 94], sizes = [16, 512], strides = [1, 1]} : vector<16x650xf32> to vector<16x512xf32>
    %116 = vector.extract_strided_slice %78 {offsets = [0, 110], sizes = [16, 512], strides = [1, 1]} : vector<16x650xf32> to vector<16x512xf32>
    %117 = vector.extract_strided_slice %78 {offsets = [0, 111], sizes = [16, 512], strides = [1, 1]} : vector<16x650xf32> to vector<16x512xf32>
    %118 = vector.extract_strided_slice %78 {offsets = [0, 112], sizes = [16, 512], strides = [1, 1]} : vector<16x650xf32> to vector<16x512xf32>
    %119 = vector.extract_strided_slice %78 {offsets = [0, 113], sizes = [16, 512], strides = [1, 1]} : vector<16x650xf32> to vector<16x512xf32>
    %120 = vector.extract_strided_slice %78 {offsets = [0, 114], sizes = [16, 512], strides = [1, 1]} : vector<16x650xf32> to vector<16x512xf32>
    %121 = vector.extract_strided_slice %78 {offsets = [0, 115], sizes = [16, 512], strides = [1, 1]} : vector<16x650xf32> to vector<16x512xf32>
    %122 = vector.extract_strided_slice %78 {offsets = [0, 116], sizes = [16, 512], strides = [1, 1]} : vector<16x650xf32> to vector<16x512xf32>
    %123 = vector.extract_strided_slice %78 {offsets = [0, 132], sizes = [16, 512], strides = [1, 1]} : vector<16x650xf32> to vector<16x512xf32>
    %124 = vector.extract_strided_slice %78 {offsets = [0, 133], sizes = [16, 512], strides = [1, 1]} : vector<16x650xf32> to vector<16x512xf32>
    %125 = vector.extract_strided_slice %78 {offsets = [0, 134], sizes = [16, 512], strides = [1, 1]} : vector<16x650xf32> to vector<16x512xf32>
    %126 = vector.extract_strided_slice %78 {offsets = [0, 135], sizes = [16, 512], strides = [1, 1]} : vector<16x650xf32> to vector<16x512xf32>
    %127 = vector.extract_strided_slice %78 {offsets = [0, 136], sizes = [16, 512], strides = [1, 1]} : vector<16x650xf32> to vector<16x512xf32>
    %128 = vector.extract_strided_slice %78 {offsets = [0, 137], sizes = [16, 512], strides = [1, 1]} : vector<16x650xf32> to vector<16x512xf32>
    %129 = vector.extract_strided_slice %78 {offsets = [0, 138], sizes = [16, 512], strides = [1, 1]} : vector<16x650xf32> to vector<16x512xf32>
    %130 = tpu.concatenate %81, %82, %83, %84, %85, %86, %87, %88, %89, %90, %91, %92, %93, %94, %95, %96 in 0 : vector<16x512xf32>, vector<16x512xf32>, vector<16x512xf32>, vector<16x512xf32>, vector<16x512xf32>, vector<16x512xf32>, vector<16x512xf32>, vector<16x512xf32>, vector<16x512xf32>, vector<16x512xf32>, vector<16x512xf32>, vector<16x512xf32>, vector<16x512xf32>, vector<16x512xf32>, vector<16x512xf32>, vector<16x512xf32> -> vector<256x512xf32>
    %131 = tpu.concatenate %97, %98, %99, %100, %101, %102, %103, %104, %105, %106, %107, %108, %109, %110, %111, %112 in 0 : vector<16x512xf32>, vector<16x512xf32>, vector<16x512xf32>, vector<16x512xf32>, vector<16x512xf32>, vector<16x512xf32>, vector<16x512xf32>, vector<16x512xf32>, vector<16x512xf32>, vector<16x512xf32>, vector<16x512xf32>, vector<16x512xf32>, vector<16x512xf32>, vector<16x512xf32>, vector<16x512xf32>, vector<16x512xf32> -> vector<256x512xf32>
    %132 = tpu.concatenate %113, %114, %115, %116, %117, %118, %119, %120, %121, %122, %123, %124, %125, %126, %127, %128 in 0 : vector<16x512xf32>, vector<16x512xf32>, vector<16x512xf32>, vector<16x512xf32>, vector<16x512xf32>, vector<16x512xf32>, vector<16x512xf32>, vector<16x512xf32>, vector<16x512xf32>, vector<16x512xf32>, vector<16x512xf32>, vector<16x512xf32>, vector<16x512xf32>, vector<16x512xf32>, vector<16x512xf32>, vector<16x512xf32> -> vector<256x512xf32>
    %133 = tpu.concatenate %130, %131, %132, %129 in 0 : vector<256x512xf32>, vector<256x512xf32>, vector<256x512xf32>, vector<16x512xf32> -> vector<784x512xf32>
    %cst_29 = arith.constant dense<0.000000e+00> : vector<8x512xf32>
    %134 = tpu.matmul %79, %133, %cst_29 {dimension_numbers = #tpu.dot_dimension_numbers<[1], [0], [0], [1], [0, 0, 1, 1], [], []>} : vector<8x784xf32>, vector<784x512xf32>, vector<8x512xf32> -> vector<8x512xf32>
    %135 = vector.broadcast %80 : vector<8x1xf32> to vector<8x512xf32>
    %136 = arith.addf %134, %135 : vector<8x512xf32>
    %cst_30 = arith.constant 0.000000e+00 : f32
    %137 = vector.broadcast %cst_30 : f32 to vector<8x512xf32>
    %138 = arith.maximumf %136, %137 : vector<8x512xf32>
    %139 = vector.broadcast %2 : vector<1x512xf32> to vector<8x512xf32>
    %140 = arith.mulf %138, %139 : vector<8x512xf32>
    %141 = tpu.concatenate %14, %35, %75, %140 in 0 : vector<8x512xf32>, vector<8x512xf32>, vector<8x512xf32>, vector<8x512xf32> -> vector<32x512xf32>
    %cst_31 = arith.constant 0.000000e+00 : f32
    %142 = vector.broadcast %cst_31 : f32 to vector<32x69xf32>
    %143 = tpu.concatenate %142, %141, %142 in 1 : vector<32x69xf32>, vector<32x512xf32>, vector<32x69xf32> -> vector<32x650xf32>
    %c0_32 = arith.constant 0 : index
    %c0_33 = arith.constant 0 : index
    %144 = vector.load %arg11[%c0_32, %c0_33] : memref<8x288xf32, #tpu.memory_space<vmem>>, vector<8x288xf32>
    %c0_34 = arith.constant 0 : index
    %c0_35 = arith.constant 0 : index
    %145 = vector.load %arg12[%c0_34, %c0_35] : memref<8x1xf32, #tpu.memory_space<vmem>>, vector<8x1xf32>
    %146 = vector.extract_strided_slice %143 {offsets = [0, 46], sizes = [32, 512], strides = [1, 1]} : vector<32x650xf32> to vector<32x512xf32>
    %147 = vector.extract_strided_slice %143 {offsets = [0, 47], sizes = [32, 512], strides = [1, 1]} : vector<32x650xf32> to vector<32x512xf32>
    %148 = vector.extract_strided_slice %143 {offsets = [0, 48], sizes = [32, 512], strides = [1, 1]} : vector<32x650xf32> to vector<32x512xf32>
    %149 = vector.extract_strided_slice %143 {offsets = [0, 68], sizes = [32, 512], strides = [1, 1]} : vector<32x650xf32> to vector<32x512xf32>
    %150 = vector.extract_strided_slice %143 {offsets = [0, 69], sizes = [32, 512], strides = [1, 1]} : vector<32x650xf32> to vector<32x512xf32>
    %151 = vector.extract_strided_slice %143 {offsets = [0, 70], sizes = [32, 512], strides = [1, 1]} : vector<32x650xf32> to vector<32x512xf32>
    %152 = vector.extract_strided_slice %143 {offsets = [0, 90], sizes = [32, 512], strides = [1, 1]} : vector<32x650xf32> to vector<32x512xf32>
    %153 = vector.extract_strided_slice %143 {offsets = [0, 91], sizes = [32, 512], strides = [1, 1]} : vector<32x650xf32> to vector<32x512xf32>
    %154 = vector.extract_strided_slice %143 {offsets = [0, 92], sizes = [32, 512], strides = [1, 1]} : vector<32x650xf32> to vector<32x512xf32>
    %155 = tpu.concatenate %146, %147, %148, %149, %150, %151, %152, %153, %154 in 0 : vector<32x512xf32>, vector<32x512xf32>, vector<32x512xf32>, vector<32x512xf32>, vector<32x512xf32>, vector<32x512xf32>, vector<32x512xf32>, vector<32x512xf32>, vector<32x512xf32> -> vector<288x512xf32>
    %cst_36 = arith.constant dense<0.000000e+00> : vector<8x512xf32>
    %156 = tpu.matmul %144, %155, %cst_36 {dimension_numbers = #tpu.dot_dimension_numbers<[1], [0], [0], [1], [0, 0, 1, 1], [], []>} : vector<8x288xf32>, vector<288x512xf32>, vector<8x512xf32> -> vector<8x512xf32>
    %157 = vector.broadcast %145 : vector<8x1xf32> to vector<8x512xf32>
    %158 = arith.addf %156, %157 : vector<8x512xf32>
    %cst_37 = arith.constant 0.000000e+00 : f32
    %159 = vector.broadcast %cst_37 : f32 to vector<8x512xf32>
    %160 = arith.maximumf %158, %159 : vector<8x512xf32>
    %161 = arith.mulf %160, %1 : vector<8x512xf32>
    %162 = arith.subf %161, %160 : vector<8x512xf32>
    %cst_38 = arith.constant 1.000000e+00 : f32
    %163 = vector.broadcast %cst_38 : f32 to vector<8x512xf32>
    %164 = arith.addf %162, %163 : vector<8x512xf32>
    %cst_39 = arith.constant 0.000000e+00 : f32
    %165 = vector.broadcast %cst_39 : f32 to vector<8x512xf32>
    %166 = arith.maximumf %164, %165 : vector<8x512xf32>
    %c0_40 = arith.constant 0 : index
    %c0_41 = arith.constant 0 : index
    %c0_42 = arith.constant 0 : index
    %167 = vector.load %arg13[%c0_40, %c0_41, %c0_42] : memref<1x8x512xf32, #tpu.memory_space<vmem>>, vector<1x8x512xf32>
    %168 = vector.shape_cast %167 : vector<1x8x512xf32> to vector<8x512xf32>
    %169 = vector.shape_cast %166 : vector<8x512xf32> to vector<1x8x512xf32>
    tpu.vector_store %arg13[%c0_40, %c0_41, %c0_42], %169 {strides = array<i32>} : memref<1x8x512xf32, #tpu.memory_space<vmem>>, vector<1x8x512xf32>,
    return
  }
  func.func @transform_0(%arg0: i32) -> (i32, i32, i32) {
    %c0_i32 = arith.constant 0 : i32
    %c0_i32_0 = arith.constant 0 : i32
    %c0_i32_1 = arith.constant 0 : i32
    return %arg0, %c0_i32, %c0_i32_0 : i32, i32, i32
  }
  func.func @transform_1(%arg0: i32) -> (i32, i32) {
    %c0_i32 = arith.constant 0 : i32
    %c0_i32_0 = arith.constant 0 : i32
    %c0_i32_1 = arith.constant 0 : i32
    return %c0_i32, %c0_i32_0 : i32, i32
  }
  func.func @transform_2(%arg0: i32) -> (i32, i32) {
    %c0_i32 = arith.constant 0 : i32
    %c0_i32_0 = arith.constant 0 : i32
    %c0_i32_1 = arith.constant 0 : i32
    return %c0_i32, %c0_i32_0 : i32, i32
  }
  func.func @transform_3(%arg0: i32) -> (i32, i32) {
    %c0_i32 = arith.constant 0 : i32
    %c0_i32_0 = arith.constant 0 : i32
    %c0_i32_1 = arith.constant 0 : i32
    return %c0_i32, %c0_i32_0 : i32, i32
  }
  func.func @transform_4(%arg0: i32) -> (i32, i32) {
    %c0_i32 = arith.constant 0 : i32
    %c0_i32_0 = arith.constant 0 : i32
    %c0_i32_1 = arith.constant 0 : i32
    return %c0_i32, %c0_i32_0 : i32, i32
  }
  func.func @transform_5(%arg0: i32) -> (i32, i32) {
    %c0_i32 = arith.constant 0 : i32
    %c0_i32_0 = arith.constant 0 : i32
    %c0_i32_1 = arith.constant 0 : i32
    return %c0_i32, %c0_i32_0 : i32, i32
  }
  func.func @transform_6(%arg0: i32) -> (i32, i32) {
    %c0_i32 = arith.constant 0 : i32
    %c0_i32_0 = arith.constant 0 : i32
    %c0_i32_1 = arith.constant 0 : i32
    return %c0_i32, %c0_i32_0 : i32, i32
  }
  func.func @transform_7(%arg0: i32) -> (i32, i32) {
    %c0_i32 = arith.constant 0 : i32
    %c0_i32_0 = arith.constant 0 : i32
    %c0_i32_1 = arith.constant 0 : i32
    return %c0_i32, %c0_i32_0 : i32, i32
  }
  func.func @transform_8(%arg0: i32) -> (i32, i32) {
    %c0_i32 = arith.constant 0 : i32
    %c0_i32_0 = arith.constant 0 : i32
    %c0_i32_1 = arith.constant 0 : i32
    return %c0_i32, %c0_i32_0 : i32, i32
  }
  func.func @transform_9(%arg0: i32) -> (i32, i32) {
    %c0_i32 = arith.constant 0 : i32
    %c0_i32_0 = arith.constant 0 : i32
    %c0_i32_1 = arith.constant 0 : i32
    return %c0_i32, %c0_i32_0 : i32, i32
  }
  func.func @transform_10(%arg0: i32) -> (i32, i32) {
    %c0_i32 = arith.constant 0 : i32
    %c0_i32_0 = arith.constant 0 : i32
    %c0_i32_1 = arith.constant 0 : i32
    return %c0_i32, %c0_i32_0 : i32, i32
  }
  func.func @transform_11(%arg0: i32) -> (i32, i32) {
    %c0_i32 = arith.constant 0 : i32
    %c0_i32_0 = arith.constant 0 : i32
    %c0_i32_1 = arith.constant 0 : i32
    return %c0_i32, %c0_i32_0 : i32, i32
  }
  func.func @transform_12(%arg0: i32) -> (i32, i32, i32) {
    %c0_i32 = arith.constant 0 : i32
    %c0_i32_0 = arith.constant 0 : i32
    %c0_i32_1 = arith.constant 0 : i32
    return %arg0, %c0_i32, %c0_i32_0 : i32, i32, i32
  }
}

</mosaic_0001>

<llo_original>
// kernel: tpu_custom_call.1
$region0: #{tpu_custom_call.1}
  #allocation0 [shape = 'u32[]', space=smem, size = 0x4, offset = 0x4, fixed_abs, tag = 'smem constant byte address 0x4 - core index']
  #allocation1 [shape = 'u32[144,128]{1,0:T(1,128)}', space=vmem, size = 0x12000, scoped, tag = 'internal scratch']
  %s0 = inlined_call_operand.hbm [shape: f32[2,8,512], index: 0, kind: input, shape index: {}]
  %s1 = inlined_call_operand.hbm [shape: f32[1,512], index: 1, kind: input, shape index: {}]
  %s2 = inlined_call_operand.hbm [shape: f32[8,8], index: 2, kind: input, shape index: {}]
  %s3 = inlined_call_operand.vmem [shape: f32[8,1], index: 3, kind: input, shape index: {}]
  %s4 = inlined_call_operand.hbm [shape: f32[8,72], index: 4, kind: input, shape index: {}]
  %s5 = inlined_call_operand.vmem [shape: f32[8,1], index: 5, kind: input, shape index: {}]
  %s6 = inlined_call_operand.hbm [shape: f32[8,400], index: 6, kind: input, shape index: {}]
  %s7 = inlined_call_operand.vmem [shape: f32[8,1], index: 7, kind: input, shape index: {}]
  %s8 = inlined_call_operand.vmem [shape: f32[8,784], index: 8, kind: input, shape index: {}]
  %s9 = inlined_call_operand.vmem [shape: f32[8,1], index: 9, kind: input, shape index: {}]
  %s10 = inlined_call_operand.vmem [shape: f32[8,288], index: 10, kind: input, shape index: {}]
  %s11 = inlined_call_operand.vmem [shape: f32[8,1], index: 11, kind: input, shape index: {}]
  %s12 = inlined_call_operand.hbm [shape: f32[2,8,512], index: 12, kind: output, shape index: {}]
  %s13 = sld [smem:[#allocation0]]
  $region101: #{tpu_custom_call.1} parent=0
    _
  %s15 = ssub.s32 1, %s13
  %s16 = scalar_select 0, %s15, %s13
  $region1: #{tpu_custom_call.1} parent=0
    #allocation2 [shape = 'u8[32768]{0}', space=vmem, size = 0x8000, scoped, tag = 'input window, operand 0']
    #allocation3 [shape = 's32[2]{0}', space=sflag, size = 0x8, scoped, tag = 'scoped memory for tpu_custom_call.1']
    #allocation4 [shape = 's32[2]{0}', space=sflag, size = 0x8, scoped, tag = 'scoped memory for tpu_custom_call.1']
    #allocation5 [shape = 'u8[2048]{0}', space=vmem, size = 0x800, scoped, tag = 'input window, operand 1, single buffered']
    #allocation6 [shape = 's32[1]{0}', space=sflag, size = 0x4, scoped, tag = 'scoped memory for tpu_custom_call.1']
    #allocation7 [shape = 'u8[4096]{0}', space=vmem, size = 0x1000, scoped, tag = 'input window, operand 2, single buffered']
    #allocation8 [shape = 'u8[4096]{0}', space=vmem, size = 0x1000, scoped, tag = 'input window, operand 4, single buffered']
    #allocation9 [shape = 's32[1]{0}', space=sflag, size = 0x4, scoped, tag = 'scoped memory for tpu_custom_call.1']
    #allocation10 [shape = 'u8[16384]{0}', space=vmem, size = 0x4000, scoped, tag = 'input window, operand 6, single buffered']
    #allocation11 [shape = 'u8[32768]{0}', space=vmem, size = 0x8000, scoped, tag = 'output window, operand 0']
    %17 = vsyncpa [#allocation3], 0
    %s18 = scalar_lea.sflag [#allocation3], 1
    %19 = vsyncpa %s18, 0
    %20 = vsyncpa [#allocation6], 0
    %21 = vsyncpa [#allocation9], 0
    %22 = vsyncpa [#allocation4], 0
    %s23 = scalar_lea.sflag [#allocation4], 1
    %24 = vsyncpa %s23, 0
    loop: start=0, step=1, limit=4
    $region2: #{tpu_custom_call.1} parent=1 // loop_pre_header
      _
    $region3: #{tpu_custom_call.1} parent=1 // loop_header
      %s26 = sphi 0, %s30
      %p27 = scmp.ge.s32.totalorder %s26, 4
      %s36 = sphi 0, %s38
      %s39 = sphi 0, %s36
      %s40 = sphi 0, %s39
      %s56 = sphi 0, %s40
      %s60 = sphi 0, %s60
      %s62 = sphi 0, %s60
      %s63 = sphi 0, %s62
      %s77 = sphi 0, %s63
      %s81 = sphi 0, %s81
      %s83 = sphi 0, %s81
      %s84 = sphi 0, %s83
      %s98 = sphi 0, %s84
      %s102 = sphi 0, %s102
      %s104 = sphi 0, %s102
      %s105 = sphi 0, %s104
      %s119 = sphi 0, %s105
      %s123 = sphi 0, %s123
      %s125 = sphi 0, %s123
      %s126 = sphi 0, %s125
      %s140 = sphi 0, %s126
      %s144 = sphi 0, %s144
      %s146 = sphi 0, %s144
      %s147 = sphi 0, %s146
      %s161 = sphi 0, %s147
      %s165 = sphi 0, %s165
      %s167 = sphi 0, %s165
      %s168 = sphi 0, %s167
      %s182 = sphi 0, %s168
      %s186 = sphi 0, %s186
      %s188 = sphi 0, %s186
      %s189 = sphi 0, %s188
      %s203 = sphi 0, %s189
      %s207 = sphi 0, %s207
      %s209 = sphi 0, %s207
      %s210 = sphi 0, %s209
      %s224 = sphi 0, %s210
      %s228 = sphi 0, %s228
      %s230 = sphi 0, %s228
      %s231 = sphi 0, %s230
      %s245 = sphi 0, %s231
      %s249 = sphi 0, %s249
      %s251 = sphi 0, %s249
      %s252 = sphi 0, %s251
      %s266 = sphi 0, %s252
      %s270 = sphi 0, %s270
      %s272 = sphi 0, %s270
      %s273 = sphi 0, %s272
      %s287 = sphi 0, %s273
      %s293 = sphi 0, %s295
      %s296 = sphi 0, %s293
      %s297 = sphi 0, %s296
      %s313 = sphi 0, %s297
    $region4: #{tpu_custom_call.1} parent=1 // loop_header_branch
      %29 = sbr.rel (%p27) target = $region8
    $region5: #{tpu_custom_call.1} parent=1 // loop_body
      %s31 = ssub.s32 %s26, 1
      %s32 = ssub.s32 %s26, 2
      %s33 = sadd.s32 %s26, 1
      %s34 = ssub.s32 %s26, %s33
      %p35 = scmp.eq.s32.totalorder %s34, 0
      %s37 = sadd.s32 %s36, 1
      %s38 = scalar_select %p35, %s36, %s37
      %p41 = pneg %p35
      %p42 = scmp.eq.s32.totalorder %s26, 1
      %p43 = por %p41, %p42
      %p44 = scmp.ne.s32.totalorder %s36, %s39
      %p45 = scmp.eq.s32.totalorder %s26, 0
      %p46 = por %p44, %p45
      %p47 = scmp.ne.s32.totalorder %s36, %s39
      %p48 = scmp.eq.s32.totalorder %s31, 1
      %p49 = por %p47, %p48
      %p50 = scmp.ne.s32.totalorder %s39, %s40
      %p51 = scmp.eq.s32.totalorder %s31, 0
      %p52 = por %p50, %p51
      %p53 = scmp.ne.s32.totalorder %s39, %s40
      %p54 = scmp.eq.s32.totalorder %s32, 1
      %p55 = por %p53, %p54
      %p57 = scmp.ne.s32.totalorder %s40, %s56
      %p58 = scmp.eq.s32.totalorder %s32, 0
      %p59 = por %p57, %p58
      %s61 = sadd.s32 %s60, 1
      %p64 = scmp.eq.s32.totalorder %s26, 1
      %p65 = scmp.ne.s32.totalorder %s60, %s62
      %p66 = scmp.eq.s32.totalorder %s26, 0
      %p67 = por %p65, %p66
      %p68 = scmp.ne.s32.totalorder %s60, %s62
      %p69 = scmp.eq.s32.totalorder %s31, 1
      %p70 = por %p68, %p69
      %p71 = scmp.ne.s32.totalorder %s62, %s63
      %p72 = scmp.eq.s32.totalorder %s31, 0
      %p73 = por %p71, %p72
      %p74 = scmp.ne.s32.totalorder %s62, %s63
      %p75 = scmp.eq.s32.totalorder %s32, 1
      %p76 = por %p74, %p75
      %p78 = scmp.ne.s32.totalorder %s63, %s77
      %p79 = scmp.eq.s32.totalorder %s32, 0
      %p80 = por %p78, %p79
      %s82 = sadd.s32 %s81, 1
      %p85 = scmp.eq.s32.totalorder %s26, 1
      %p86 = scmp.ne.s32.totalorder %s81, %s83
      %p87 = scmp.eq.s32.totalorder %s26, 0
      %p88 = por %p86, %p87
      %p89 = scmp.ne.s32.totalorder %s81, %s83
      %p90 = scmp.eq.s32.totalorder %s31, 1
      %p91 = por %p89, %p90
      %p92 = scmp.ne.s32.totalorder %s83, %s84
      %p93 = scmp.eq.s32.totalorder %s31, 0
      %p94 = por %p92, %p93
      %p95 = scmp.ne.s32.totalorder %s83, %s84
      %p96 = scmp.eq.s32.totalorder %s32, 1
      %p97 = por %p95, %p96
      %p99 = scmp.ne.s32.totalorder %s84, %s98
      %p100 = scmp.eq.s32.totalorder %s32, 0
      %p101 = por %p99, %p100
      %s103 = sadd.s32 %s102, 1
      %p106 = scmp.eq.s32.totalorder %s26, 1
      %p107 = scmp.ne.s32.totalorder %s102, %s104
      %p108 = scmp.eq.s32.totalorder %s26, 0
      %p109 = por %p107, %p108
      %p110 = scmp.ne.s32.totalorder %s102, %s104
      %p111 = scmp.eq.s32.totalorder %s31, 1
      %p112 = por %p110, %p111
      %p113 = scmp.ne.s32.totalorder %s104, %s105
      %p114 = scmp.eq.s32.totalorder %s31, 0
      %p115 = por %p113, %p114
      %p116 = scmp.ne.s32.totalorder %s104, %s105
      %p117 = scmp.eq.s32.totalorder %s32, 1
      %p118 = por %p116, %p117
      %p120 = scmp.ne.s32.totalorder %s105, %s119
      %p121 = scmp.eq.s32.totalorder %s32, 0
      %p122 = por %p120, %p121
      %s124 = sadd.s32 %s123, 1
      %p127 = scmp.eq.s32.totalorder %s26, 1
      %p128 = scmp.ne.s32.totalorder %s123, %s125
      %p129 = scmp.eq.s32.totalorder %s26, 0
      %p130 = por %p128, %p129
      %p131 = scmp.ne.s32.totalorder %s123, %s125
      %p132 = scmp.eq.s32.totalorder %s31, 1
      %p133 = por %p131, %p132
      %p134 = scmp.ne.s32.totalorder %s125, %s126
      %p135 = scmp.eq.s32.totalorder %s31, 0
      %p136 = por %p134, %p135
      %p137 = scmp.ne.s32.totalorder %s125, %s126
      %p138 = scmp.eq.s32.totalorder %s32, 1
      %p139 = por %p137, %p138
      %p141 = scmp.ne.s32.totalorder %s126, %s140
      %p142 = scmp.eq.s32.totalorder %s32, 0
      %p143 = por %p141, %p142
      %s145 = sadd.s32 %s144, 1
      %p148 = scmp.eq.s32.totalorder %s26, 1
      %p149 = scmp.ne.s32.totalorder %s144, %s146
      %p150 = scmp.eq.s32.totalorder %s26, 0
      %p151 = por %p149, %p150
      %p152 = scmp.ne.s32.totalorder %s144, %s146
      %p153 = scmp.eq.s32.totalorder %s31, 1
      %p154 = por %p152, %p153
      %p155 = scmp.ne.s32.totalorder %s146, %s147
      %p156 = scmp.eq.s32.totalorder %s31, 0
      %p157 = por %p155, %p156
      %p158 = scmp.ne.s32.totalorder %s146, %s147
      %p159 = scmp.eq.s32.totalorder %s32, 1
      %p160 = por %p158, %p159
      %p162 = scmp.ne.s32.totalorder %s147, %s161
      %p163 = scmp.eq.s32.totalorder %s32, 0
      %p164 = por %p162, %p163
      %s166 = sadd.s32 %s165, 1
      %p169 = scmp.eq.s32.totalorder %s26, 1
      %p170 = scmp.ne.s32.totalorder %s165, %s167
      %p171 = scmp.eq.s32.totalorder %s26, 0
      %p172 = por %p170, %p171
      %p173 = scmp.ne.s32.totalorder %s165, %s167
      %p174 = scmp.eq.s32.totalorder %s31, 1
      %p175 = por %p173, %p174
      %p176 = scmp.ne.s32.totalorder %s167, %s168
      %p177 = scmp.eq.s32.totalorder %s31, 0
      %p178 = por %p176, %p177
      %p179 = scmp.ne.s32.totalorder %s167, %s168
      %p180 = scmp.eq.s32.totalorder %s32, 1
      %p181 = por %p179, %p180
      %p183 = scmp.ne.s32.totalorder %s168, %s182
      %p184 = scmp.eq.s32.totalorder %s32, 0
      %p185 = por %p183, %p184
      %s187 = sadd.s32 %s186, 1
      %p190 = scmp.eq.s32.totalorder %s26, 1
      %p191 = scmp.ne.s32.totalorder %s186, %s188
      %p192 = scmp.eq.s32.totalorder %s26, 0
      %p193 = por %p191, %p192
      %p194 = scmp.ne.s32.totalorder %s186, %s188
      %p195 = scmp.eq.s32.totalorder %s31, 1
      %p196 = por %p194, %p195
      %p197 = scmp.ne.s32.totalorder %s188, %s189
      %p198 = scmp.eq.s32.totalorder %s31, 0
      %p199 = por %p197, %p198
      %p200 = scmp.ne.s32.totalorder %s188, %s189
      %p201 = scmp.eq.s32.totalorder %s32, 1
      %p202 = por %p200, %p201
      %p204 = scmp.ne.s32.totalorder %s189, %s203
      %p205 = scmp.eq.s32.totalorder %s32, 0
      %p206 = por %p204, %p205
      %s208 = sadd.s32 %s207, 1
      %p211 = scmp.eq.s32.totalorder %s26, 1
      %p212 = scmp.ne.s32.totalorder %s207, %s209
      %p213 = scmp.eq.s32.totalorder %s26, 0
      %p214 = por %p212, %p213
      %p215 = scmp.ne.s32.totalorder %s207, %s209
      %p216 = scmp.eq.s32.totalorder %s31, 1
      %p217 = por %p215, %p216
      %p218 = scmp.ne.s32.totalorder %s209, %s210
      %p219 = scmp.eq.s32.totalorder %s31, 0
      %p220 = por %p218, %p219
      %p221 = scmp.ne.s32.totalorder %s209, %s210
      %p222 = scmp.eq.s32.totalorder %s32, 1
      %p223 = por %p221, %p222
      %p225 = scmp.ne.s32.totalorder %s210, %s224
      %p226 = scmp.eq.s32.totalorder %s32, 0
      %p227 = por %p225, %p226
      %s229 = sadd.s32 %s228, 1
      %p232 = scmp.eq.s32.totalorder %s26, 1
      %p233 = scmp.ne.s32.totalorder %s228, %s230
      %p234 = scmp.eq.s32.totalorder %s26, 0
      %p235 = por %p233, %p234
      %p236 = scmp.ne.s32.totalorder %s228, %s230
      %p237 = scmp.eq.s32.totalorder %s31, 1
      %p238 = por %p236, %p237
      %p239 = scmp.ne.s32.totalorder %s230, %s231
      %p240 = scmp.eq.s32.totalorder %s31, 0
      %p241 = por %p239, %p240
      %p242 = scmp.ne.s32.totalorder %s230, %s231
      %p243 = scmp.eq.s32.totalorder %s32, 1
      %p244 = por %p242, %p243
      %p246 = scmp.ne.s32.totalorder %s231, %s245
      %p247 = scmp.eq.s32.totalorder %s32, 0
      %p248 = por %p246, %p247
      %s250 = sadd.s32 %s249, 1
      %p253 = scmp.eq.s32.totalorder %s26, 1
      %p254 = scmp.ne.s32.totalorder %s249, %s251
      %p255 = scmp.eq.s32.totalorder %s26, 0
      %p256 = por %p254, %p255
      %p257 = scmp.ne.s32.totalorder %s249, %s251
      %p258 = scmp.eq.s32.totalorder %s31, 1
      %p259 = por %p257, %p258
      %p260 = scmp.ne.s32.totalorder %s251, %s252
      %p261 = scmp.eq.s32.totalorder %s31, 0
      %p262 = por %p260, %p261
      %p263 = scmp.ne.s32.totalorder %s251, %s252
      %p264 = scmp.eq.s32.totalorder %s32, 1
      %p265 = por %p263, %p264
      %p267 = scmp.ne.s32.totalorder %s252, %s266
      %p268 = scmp.eq.s32.totalorder %s32, 0
      %p269 = por %p267, %p268
      %s271 = sadd.s32 %s270, 1
      %p274 = scmp.eq.s32.totalorder %s26, 1
      %p275 = scmp.ne.s32.totalorder %s270, %s272
      %p276 = scmp.eq.s32.totalorder %s26, 0
      %p277 = por %p275, %p276
      %p278 = scmp.ne.s32.totalorder %s270, %s272
      %p279 = scmp.eq.s32.totalorder %s31, 1
      %p280 = por %p278, %p279
      %p281 = scmp.ne.s32.totalorder %s272, %s273
      %p282 = scmp.eq.s32.totalorder %s31, 0
      %p283 = por %p281, %p282
      %p284 = scmp.ne.s32.totalorder %s272, %s273
      %p285 = scmp.eq.s32.totalorder %s32, 1
      %p286 = por %p284, %p285
      %p288 = scmp.ne.s32.totalorder %s273, %s287
      %p289 = scmp.eq.s32.totalorder %s32, 0
      %p290 = por %p288, %p289
      %s291 = ssub.s32 %s26, %s33
      %p292 = scmp.eq.s32.totalorder %s291, 0
      %s294 = sadd.s32 %s293, 1
      %s295 = scalar_select %p292, %s293, %s294
      %p298 = pneg %p292
      %p299 = scmp.eq.s32.totalorder %s26, 1
      %p300 = por %p298, %p299
      %p301 = scmp.ne.s32.totalorder %s293, %s296
      %p302 = scmp.eq.s32.totalorder %s26, 0
      %p303 = por %p301, %p302
      %p304 = scmp.ne.s32.totalorder %s293, %s296
      %p305 = scmp.eq.s32.totalorder %s31, 1
      %p306 = por %p304, %p305
      %p307 = scmp.ne.s32.totalorder %s296, %s297
      %p308 = scmp.eq.s32.totalorder %s31, 0
      %p309 = por %p307, %p308
      %p310 = scmp.ne.s32.totalorder %s296, %s297
      %p311 = scmp.eq.s32.totalorder %s32, 1
      %p312 = por %p310, %p311
      %p314 = scmp.ne.s32.totalorder %s297, %s313
      %p315 = scmp.eq.s32.totalorder %s32, 0
      %p316 = por %p314, %p315
      %p317 = scmp.le.s32.totalorder 1, %s26
      %p318 = scmp.lt.s32.totalorder %s26, 3
      %p319 = pnand %p317, %p318
      %p320 = pneg %p319
      // Predicated region
      $region9: #{tpu_custom_call.1} parent=5 // pred_check
        _
      $region10: #{tpu_custom_call.1} parent=5 // pred_check_branch
        %322 = sbr.rel (%p319) target = $region12
      $region11: #{tpu_custom_call.1} parent=5 // pred_region
        %s323 = ssub.s32 %s26, 1
        // Predicated region
        $region13: #{tpu_custom_call.1} parent=11 // pred_check
          %p324 = pneg %p73
        $region14: #{tpu_custom_call.1} parent=11 // pred_check_branch
          %326 = sbr.rel (%p324) target = $region16
        $region15: #{tpu_custom_call.1} parent=11 // pred_region
          %s328 = ssub.s32 64, 64
          %329 = vsyncadd [#allocation6], %s328
          %s331 = sshll.u32 [#allocation5], 4
          %s332 = int_to_ptr.vmem [resolvable:$true] %s331
          %334 = dma.hbm_to_vmem [thread:$0]  %s1, 64, %s332, [#allocation6]
        $region16: #{tpu_custom_call.1} parent=11 // pred_fallthru
          _
        // Predicated region
        $region17: #{tpu_custom_call.1} parent=11 // pred_check
          %p335 = pneg %p94
        $region18: #{tpu_custom_call.1} parent=11 // pred_check_branch
          %337 = sbr.rel (%p335) target = $region20
        $region19: #{tpu_custom_call.1} parent=11 // pred_region
          %s339 = ssub.s32 128, 128
          %340 = vsyncadd [#allocation6], %s339
          %s342 = sshll.u32 [#allocation7], 4
          %s343 = int_to_ptr.vmem [resolvable:$true] %s342
          %345 = dma.hbm_to_vmem [thread:$0]  %s2, 128, %s343, [#allocation6]
        $region20: #{tpu_custom_call.1} parent=11 // pred_fallthru
          _
        // Predicated region
        $region21: #{tpu_custom_call.1} parent=11 // pred_check
          %p346 = pneg %p115
        $region22: #{tpu_custom_call.1} parent=11 // pred_check_branch
          %348 = sbr.rel (%p346) target = $region24
        $region23: #{tpu_custom_call.1} parent=11 // pred_region
          _
        $region24: #{tpu_custom_call.1} parent=11 // pred_fallthru
          _
        // Predicated region
        $region25: #{tpu_custom_call.1} parent=11 // pred_check
          %p349 = pneg %p136
        $region26: #{tpu_custom_call.1} parent=11 // pred_check_branch
          %351 = sbr.rel (%p349) target = $region28
        $region27: #{tpu_custom_call.1} parent=11 // pred_region
          %s353 = ssub.s32 128, 128
          %354 = vsyncadd [#allocation9], %s353
          %s356 = sshll.u32 [#allocation8], 4
          %s357 = int_to_ptr.vmem [resolvable:$true] %s356
          %359 = dma.hbm_to_vmem [thread:$0]  %s4, 128, %s357, [#allocation9]
        $region28: #{tpu_custom_call.1} parent=11 // pred_fallthru
          _
        // Predicated region
        $region29: #{tpu_custom_call.1} parent=11 // pred_check
          %p360 = pneg %p157
        $region30: #{tpu_custom_call.1} parent=11 // pred_check_branch
          %362 = sbr.rel (%p360) target = $region32
        $region31: #{tpu_custom_call.1} parent=11 // pred_region
          _
        $region32: #{tpu_custom_call.1} parent=11 // pred_fallthru
          _
        // Predicated region
        $region33: #{tpu_custom_call.1} parent=11 // pred_check
          %p363 = pneg %p178
        $region34: #{tpu_custom_call.1} parent=11 // pred_check_branch
          %365 = sbr.rel (%p363) target = $region36
        $region35: #{tpu_custom_call.1} parent=11 // pred_region
          %s367 = ssub.s32 512, 512
          %368 = vsyncadd [#allocation9], %s367
          %s370 = sshll.u32 [#allocation10], 4
          %s371 = int_to_ptr.vmem [resolvable:$true] %s370
          %373 = dma.hbm_to_vmem [thread:$0]  %s6, 512, %s371, [#allocation9]
        $region36: #{tpu_custom_call.1} parent=11 // pred_fallthru
          _
        // Predicated region
        $region37: #{tpu_custom_call.1} parent=11 // pred_check
          %p374 = pneg %p199
        $region38: #{tpu_custom_call.1} parent=11 // pred_check_branch
          %376 = sbr.rel (%p374) target = $region40
        $region39: #{tpu_custom_call.1} parent=11 // pred_region
          _
        $region40: #{tpu_custom_call.1} parent=11 // pred_fallthru
          _
        // Predicated region
        $region41: #{tpu_custom_call.1} parent=11 // pred_check
          %p377 = pneg %p220
        $region42: #{tpu_custom_call.1} parent=11 // pred_check_branch
          %379 = sbr.rel (%p377) target = $region44
        $region43: #{tpu_custom_call.1} parent=11 // pred_region
          _
        $region44: #{tpu_custom_call.1} parent=11 // pred_fallthru
          _
        // Predicated region
        $region45: #{tpu_custom_call.1} parent=11 // pred_check
          %p380 = pneg %p241
        $region46: #{tpu_custom_call.1} parent=11 // pred_check_branch
          %382 = sbr.rel (%p380) target = $region48
        $region47: #{tpu_custom_call.1} parent=11 // pred_region
          _
        $region48: #{tpu_custom_call.1} parent=11 // pred_fallthru
          _
        // Predicated region
        $region49: #{tpu_custom_call.1} parent=11 // pred_check
          %p383 = pneg %p262
        $region50: #{tpu_custom_call.1} parent=11 // pred_check_branch
          %385 = sbr.rel (%p383) target = $region52
        $region51: #{tpu_custom_call.1} parent=11 // pred_region
          _
        $region52: #{tpu_custom_call.1} parent=11 // pred_fallthru
          _
        // Predicated region
        $region53: #{tpu_custom_call.1} parent=11 // pred_check
          %p386 = pneg %p283
        $region54: #{tpu_custom_call.1} parent=11 // pred_check_branch
          %388 = sbr.rel (%p386) target = $region56
        $region55: #{tpu_custom_call.1} parent=11 // pred_region
          _
        $region56: #{tpu_custom_call.1} parent=11 // pred_fallthru
          _
      $region12: #{tpu_custom_call.1} parent=5 // pred_fallthru
        _
      %p389 = scmp.lt.s32.totalorder %s26, 2
      // Predicated region
      $region57: #{tpu_custom_call.1} parent=5 // pred_check
        %p390 = pneg %p389
      $region58: #{tpu_custom_call.1} parent=5 // pred_check_branch
        %392 = sbr.rel (%p390) target = $region60
      $region59: #{tpu_custom_call.1} parent=5 // pred_region
        // Predicated region
        $region61: #{tpu_custom_call.1} parent=59 // pred_check
          %p393 = pneg %p46
        $region62: #{tpu_custom_call.1} parent=59 // pred_check_branch
          %395 = sbr.rel (%p393) target = $region64
        $region63: #{tpu_custom_call.1} parent=59 // pred_region
          %s396 = sand.u32 %s36, 1
          %s397 = scalar_lea.sflag [#allocation3], %s396
          %s398 = sand.u32 %s36, 1
          %s399 = smul.addr %s398, 32
          %s400 = scalar_lea.vmem [#allocation2], %s399
          %s402 = ssub.s32 512, 512
          %403 = vsyncadd %s397, %s402
          %s404 = smul.addr %s26, 4
          %s405 = smul.addr %s404, 128
          %s406 = scalar_lea.hbm %s0, %s405
          %s408 = sshll.u32 %s400, 4
          %s409 = int_to_ptr.vmem [resolvable:$true] %s408
          %411 = dma.hbm_to_vmem [thread:$0]  %s406, 512, %s409, %s397
        $region64: #{tpu_custom_call.1} parent=59 // pred_fallthru
          _
      $region60: #{tpu_custom_call.1} parent=5 // pred_fallthru
        _
      %p412 = scmp.le.s32.totalorder 1, %s26
      %p413 = scmp.lt.s32.totalorder %s26, 3
      %p414 = pnand %p412, %p413
      %p415 = pneg %p414
      // Predicated region
      $region65: #{tpu_custom_call.1} parent=5 // pred_check
        _
      $region66: #{tpu_custom_call.1} parent=5 // pred_check_branch
        %417 = sbr.rel (%p414) target = $region68
      $region67: #{tpu_custom_call.1} parent=5 // pred_region
        %s418 = ssub.s32 %s26, 1
        %s419 = sand.u32 %s39, 1
        %s420 = scalar_lea.sflag [#allocation3], %s419
        %s421 = sand.u32 %s39, 1
        %s422 = smul.addr %s421, 32
        %s423 = scalar_lea.vmem [#allocation2], %s422
        // Predicated region
        $region69: #{tpu_custom_call.1} parent=67 // pred_check
          %p424 = pneg %p52
        $region70: #{tpu_custom_call.1} parent=67 // pred_check_branch
          %426 = sbr.rel (%p424) target = $region72
        $region71: #{tpu_custom_call.1} parent=67 // pred_region
          %427 = dma.done %s420, 512
        $region72: #{tpu_custom_call.1} parent=67 // pred_fallthru
          _
        // Predicated region
        $region73: #{tpu_custom_call.1} parent=67 // pred_check
          %p428 = pneg %p73
        $region74: #{tpu_custom_call.1} parent=67 // pred_check_branch
          %430 = sbr.rel (%p428) target = $region76
        $region75: #{tpu_custom_call.1} parent=67 // pred_region
          %431 = dma.done [#allocation6], 64
        $region76: #{tpu_custom_call.1} parent=67 // pred_fallthru
          _
        // Predicated region
        $region77: #{tpu_custom_call.1} parent=67 // pred_check
          %p432 = pneg %p94
        $region78: #{tpu_custom_call.1} parent=67 // pred_check_branch
          %434 = sbr.rel (%p432) target = $region80
        $region79: #{tpu_custom_call.1} parent=67 // pred_region
          %435 = dma.done [#allocation6], 128
        $region80: #{tpu_custom_call.1} parent=67 // pred_fallthru
          _
        // Predicated region
        $region81: #{tpu_custom_call.1} parent=67 // pred_check
          %p436 = pneg %p136
        $region82: #{tpu_custom_call.1} parent=67 // pred_check_branch
          %438 = sbr.rel (%p436) target = $region84
        $region83: #{tpu_custom_call.1} parent=67 // pred_region
          %439 = dma.done [#allocation9], 128
        $region84: #{tpu_custom_call.1} parent=67 // pred_fallthru
          _
        // Predicated region
        $region85: #{tpu_custom_call.1} parent=67 // pred_check
          %p440 = pneg %p178
        $region86: #{tpu_custom_call.1} parent=67 // pred_check_branch
          %442 = sbr.rel (%p440) target = $region88
        $region87: #{tpu_custom_call.1} parent=67 // pred_region
          %443 = dma.done [#allocation9], 512
        $region88: #{tpu_custom_call.1} parent=67 // pred_fallthru
          _
        %s444 = sand.u32 %s39, 1
        %s445 = scalar_lea.sflag [#allocation3], %s444
        %s446 = sand.u32 %s39, 1
        %s447 = smul.addr %s446, 32
        %s448 = scalar_lea.vmem [#allocation2], %s447
        %p449 = pneg %p52
        %p450 = pneg %p49
        %p451 = pneg %p73
        %p452 = pneg %p70
        %p453 = pneg %p94
        %p454 = pneg %p91
        %p455 = pneg %p115
        %p456 = pneg %p112
        %p457 = pneg %p136
        %p458 = pneg %p133
        %p459 = pneg %p157
        %p460 = pneg %p154
        %p461 = pneg %p178
        %p462 = pneg %p175
        %p463 = pneg %p199
        %p464 = pneg %p196
        %p465 = pneg %p220
        %p466 = pneg %p217
        %p467 = pneg %p241
        %p468 = pneg %p238
        %p469 = pneg %p262
        %p470 = pneg %p259
        %p471 = pneg %p283
        %p472 = pneg %p280
        %p473 = pneg %p309
        %p474 = pneg %p306
        %s475 = sand.u32 %s296, 1
        %s476 = scalar_lea.sflag [#allocation4], %s475
        %s477 = sand.u32 %s296, 1
        %s478 = smul.addr %s477, 32
        %s479 = scalar_lea.vmem [#allocation11], %s478
        %v480 = vld [vmem:[%s423] sm:$0xff]
        %v481 = vld [vmem:[%s423 + $0x8] sm:$0xff]
        %v482 = vld [vmem:[%s423 + $0x10] sm:$0xff]
        %v483 = vld [vmem:[%s423 + $0x18] sm:$0xff]
        %v484 = vld [vmem:[#allocation5] sm:$0xf]
        %489 = vrot.lane.b32.xlu0 %v480, 69
        %v490 = vpop.permute.xlu0 %489
        %491 = vrot.lane.b32.xlu0 %v481, 69
        %v492 = vpop.permute.xlu0 %491
        %493 = vrot.lane.b32.xlu0 %v482, 69
        %v494 = vpop.permute.xlu0 %493
        %495 = vrot.lane.b32.xlu0 %v483, 69
        %v496 = vpop.permute.xlu0 %495
        %vm497 = vcmask 564224
        %v498 = vsel %vm497, %v490, %v492
        %v499 = vsel %vm497, %v492, %v494
        %v500 = vsel %vm497, %v494, %v496
        %v503 = vsel %vm497, 0.0, %v490
        %v504 = vsel %vm497, %v496, 0.0
        %v505 = vld [vmem:[#allocation7] sm:$0xff]
        %v506 = vld [vmem:[%s3] sm:$0xff]
        %508 = vset.pattern.permute.xlu0 0
        %509 = vperm.xlu0 %508, %v506
        %v510 = vpop.permute.xlu0 %509
        %514 = vrot.lane.b32.xlu0 %v503, 59
        %v515 = vpop.permute.xlu0 %514
        %516 = vrot.lane.b32.xlu0 %v498, 59
        %v517 = vpop.permute.xlu0 %516
        %518 = vrot.lane.b32.xlu0 %v499, 59
        %v519 = vpop.permute.xlu0 %518
        %520 = vrot.lane.b32.xlu0 %v500, 59
        %v521 = vpop.permute.xlu0 %520
        %522 = vrot.lane.b32.xlu0 %v504, 59
        %v523 = vpop.permute.xlu0 %522
        %vm524 = vcmask 482304
        %v525 = vsel %vm524, %v515, %v517
        %v526 = vsel %vm524, %v517, %v519
        %v527 = vsel %vm524, %v519, %v521
        %v528 = vsel %vm524, %v521, %v523
        %vm533 = vcmask 64512
        %v535 = vsel %vm533, %v505, 0
        %537 = vmatprep.subr.mxu0 %v526
        %538 = vmatpush1.msra.mxu0 %v525
        %539 = vmatprep.subr.mxu0 0.0
        %540 = vmatpush1.msra.mxu0 0.0
        %541 = vmatprep.subr.mxu0 0.0
        %542 = vmatpush1.msra.mxu0 0.0
        %543 = vmatprep.subr.mxu0 0.0
        %544 = vmatpush1.msra.mxu0 0.0
        %545 = vmatprep.subr.mxu0 0.0
        %546 = vmatpush1.msra.mxu0 0.0
        %547 = vmatprep.subr.mxu0 0.0
        %548 = vmatpush1.msra.mxu0 0.0
        %549 = vmatprep.subr.mxu0 0.0
        %550 = vmatpush1.msra.mxu0 0.0
        %551 = vmatprep.subr.mxu0 0.0
        %552 = vmatpush1.msra.mxu0 0.0
        %553 = vmatprep.subr.mxu0 0.0
        %554 = vmatpush1.msra.mxu0 0.0
        %555 = vmatprep.subr.mxu0 0.0
        %556 = vmatpush1.msra.mxu0 0.0
        %557 = vmatprep.subr.mxu0 0.0
        %558 = vmatpush1.msra.mxu0 0.0
        %559 = vmatprep.subr.mxu0 0.0
        %560 = vmatpush1.msra.mxu0 0.0
        %561 = vmatprep.subr.mxu0 0.0
        %562 = vmatpush1.msra.mxu0 0.0
        %563 = vmatprep.subr.mxu0 0.0
        %564 = vmatpush1.msra.mxu0 0.0
        %565 = vmatprep.subr.mxu0 0.0
        %566 = vmatpush1.msra.mxu0 0.0
        %567 = vmatprep.subr.mxu0 0.0
        %568 = vmatpush1.msra.mxu0 0.0
        %569 = vmatprep.subr.mxu0 0.0
        %570 = vmatpush1.msra.mxu0 0.0
        %571 = vmatprep.subr.mxu0 0.0
        %572 = vmatpush1.msra.mxu0 0.0
        %573 = vmatprep.subr.mxu0 0.0
        %574 = vmatpush1.msra.mxu0 0.0
        %575 = vmatprep.subr.mxu0 0.0
        %576 = vmatpush1.msra.mxu0 0.0
        %577 = vmatprep.subr.mxu0 0.0
        %578 = vmatpush1.msra.mxu0 0.0
        %579 = vmatprep.subr.mxu0 0.0
        %580 = vmatpush1.msra.mxu0 0.0
        %581 = vmatprep.subr.mxu0 0.0
        %582 = vmatpush1.msra.mxu0 0.0
        %583 = vmatprep.subr.mxu0 0.0
        %584 = vmatpush1.msra.mxu0 0.0
        %585 = vmatprep.subr.mxu0 0.0
        %586 = vmatpush1.msra.mxu0 0.0
        %587 = vmatprep.subr.mxu0 0.0
        %588 = vmatpush1.msra.mxu0 0.0
        %589 = vmatprep.subr.mxu0 0.0
        %590 = vmatpush1.msra.mxu0 0.0
        %591 = vmatprep.subr.mxu0 0.0
        %592 = vmatpush1.msra.mxu0 0.0
        %593 = vmatprep.subr.mxu0 0.0
        %594 = vmatpush1.msra.mxu0 0.0
        %595 = vmatprep.subr.mxu0 0.0
        %596 = vmatpush1.msra.mxu0 0.0
        %597 = vmatprep.subr.mxu0 0.0
        %598 = vmatpush1.msra.mxu0 0.0
        %599 = vmatprep.subr.mxu0 0.0
        %600 = vmatpush1.msra.mxu0 0.0
        %601 = vmatprep.mubr.f32.mxu0 0.0
        %602 = vmatmul.mubr.f32.gmra.mrb[0].mxu0 %v535
        %v603 = vpop.f32.mrb[0].mxu0
        %v604 = vadd.f32 %v510, %v603
        %v605 = vpop.f32.mrb[0].mxu0
        %v606 = vadd.f32 %v510, %v605
        %607 = vdwg.mxu0
        %608 = vmatprep.subr.mxu0 %v528
        %609 = vmatpush1.msra.mxu0 %v527
        %610 = vmatprep.subr.mxu0 0.0
        %611 = vmatpush1.msra.mxu0 0.0
        %612 = vmatprep.subr.mxu0 0.0
        %613 = vmatpush1.msra.mxu0 0.0
        %614 = vmatprep.subr.mxu0 0.0
        %615 = vmatpush1.msra.mxu0 0.0
        %616 = vmatprep.subr.mxu0 0.0
        %617 = vmatpush1.msra.mxu0 0.0
        %618 = vmatprep.subr.mxu0 0.0
        %619 = vmatpush1.msra.mxu0 0.0
        %620 = vmatprep.subr.mxu0 0.0
        %621 = vmatpush1.msra.mxu0 0.0
        %622 = vmatprep.subr.mxu0 0.0
        %623 = vmatpush1.msra.mxu0 0.0
        %624 = vmatprep.subr.mxu0 0.0
        %625 = vmatpush1.msra.mxu0 0.0
        %626 = vmatprep.subr.mxu0 0.0
        %627 = vmatpush1.msra.mxu0 0.0
        %628 = vmatprep.subr.mxu0 0.0
        %629 = vmatpush1.msra.mxu0 0.0
        %630 = vmatprep.subr.mxu0 0.0
        %631 = vmatpush1.msra.mxu0 0.0
        %632 = vmatprep.subr.mxu0 0.0
        %633 = vmatpush1.msra.mxu0 0.0
        %634 = vmatprep.subr.mxu0 0.0
        %635 = vmatpush1.msra.mxu0 0.0
        %636 = vmatprep.subr.mxu0 0.0
        %637 = vmatpush1.msra.mxu0 0.0
        %638 = vmatprep.subr.mxu0 0.0
        %639 = vmatpush1.msra.mxu0 0.0
        %640 = vmatprep.subr.mxu0 0.0
        %641 = vmatpush1.msra.mxu0 0.0
        %642 = vmatprep.subr.mxu0 0.0
        %643 = vmatpush1.msra.mxu0 0.0
        %644 = vmatprep.subr.mxu0 0.0
        %645 = vmatpush1.msra.mxu0 0.0
        %646 = vmatprep.subr.mxu0 0.0
        %647 = vmatpush1.msra.mxu0 0.0
        %648 = vmatprep.subr.mxu0 0.0
        %649 = vmatpush1.msra.mxu0 0.0
        %650 = vmatprep.subr.mxu0 0.0
        %651 = vmatpush1.msra.mxu0 0.0
        %652 = vmatprep.subr.mxu0 0.0
        %653 = vmatpush1.msra.mxu0 0.0
        %654 = vmatprep.subr.mxu0 0.0
        %655 = vmatpush1.msra.mxu0 0.0
        %656 = vmatprep.subr.mxu0 0.0
        %657 = vmatpush1.msra.mxu0 0.0
        %658 = vmatprep.subr.mxu0 0.0
        %659 = vmatpush1.msra.mxu0 0.0
        %660 = vmatprep.subr.mxu0 0.0
        %661 = vmatpush1.msra.mxu0 0.0
        %662 = vmatprep.subr.mxu0 0.0
        %663 = vmatpush1.msra.mxu0 0.0
        %664 = vmatprep.subr.mxu0 0.0
        %665 = vmatpush1.msra.mxu0 0.0
        %666 = vmatprep.subr.mxu0 0.0
        %667 = vmatpush1.msra.mxu0 0.0
        %668 = vmatprep.subr.mxu0 0.0
        %669 = vmatpush1.msra.mxu0 0.0
        %670 = vmatprep.subr.mxu0 0.0
        %671 = vmatpush1.msra.mxu0 0.0
        %672 = vmatprep.mubr.f32.mxu0 0.0
        %673 = vmatmul.mubr.f32.gmra.mrb[0].mxu0 %v535
        %v674 = vpop.f32.mrb[0].mxu0
        %v675 = vadd.f32 %v510, %v674
        %v676 = vpop.f32.mrb[0].mxu0
        %v677 = vadd.f32 %v510, %v676
        %678 = vdwg.mxu0
        %v679 = vmax.f32 %v604, 0.0
        %v680 = vmax.f32 %v606, 0.0
        %v681 = vmax.f32 %v675, 0.0
        %v682 = vmax.f32 %v677, 0.0
        %v684 = vlaneseq
        %v685 = vshrl.u32 %v684, 7
        %v686 = vsub.s32 0, %v685
        %v687 = vrot.slane %v484, %v686
        %v688 = vlaneseq
        %v689 = vshrl.u32 %v688, 7
        %v690 = vsub.s32 1, %v689
        %v691 = vrot.slane %v484, %v690
        %v692 = vlaneseq
        %v693 = vshrl.u32 %v692, 7
        %v694 = vsub.s32 2, %v693
        %v695 = vrot.slane %v484, %v694
        %v696 = vlaneseq
        %v697 = vshrl.u32 %v696, 7
        %v698 = vsub.s32 3, %v697
        %v699 = vrot.slane %v484, %v698
        %v704 = vmul.f32 %v679, %v687
        %v705 = vmul.f32 %v680, %v691
        %v706 = vmul.f32 %v681, %v695
        %v707 = vmul.f32 %v682, %v699
        %712 = vrot.lane.b32.xlu0 %v704, 69
        %v713 = vpop.permute.xlu0 %712
        %714 = vrot.lane.b32.xlu0 %v705, 69
        %v715 = vpop.permute.xlu0 %714
        %716 = vrot.lane.b32.xlu0 %v706, 69
        %v717 = vpop.permute.xlu0 %716
        %718 = vrot.lane.b32.xlu0 %v707, 69
        %v719 = vpop.permute.xlu0 %718
        %v720 = vsel %vm497, %v713, %v715
        %v721 = vsel %vm497, %v715, %v717
        %v722 = vsel %vm497, %v717, %v719
        %v725 = vsel %vm497, 0.0, %v713
        %v726 = vsel %vm497, %v719, 0.0
        %v727 = vld [vmem:[#allocation8] sm:$0xff]
        %v728 = vld [vmem:[%s5] sm:$0xff]
        %731 = vrot.lane.b32.xlu0 %v725, 127
        %v732 = vpop.permute.xlu0 %731
        %733 = vrot.lane.b32.xlu0 %v720, 127
        %v734 = vpop.permute.xlu0 %733
        %735 = vrot.lane.b32.xlu0 %v721, 127
        %v736 = vpop.permute.xlu0 %735
        %737 = vrot.lane.b32.xlu0 %v722, 127
        %v738 = vpop.permute.xlu0 %737
        %739 = vrot.lane.b32.xlu0 %v726, 127
        %v740 = vpop.permute.xlu0 %739
        %vm741 = vcmask 1039360
        %v742 = vsel %vm741, %v732, %v734
        %v743 = vsel %vm741, %v734, %v736
        %v744 = vsel %vm741, %v736, %v738
        %v745 = vsel %vm741, %v738, %v740
        %746 = vrot.lane.b32.xlu0 %v725, 126
        %v747 = vpop.permute.xlu0 %746
        %748 = vrot.lane.b32.xlu0 %v720, 126
        %v749 = vpop.permute.xlu0 %748
        %750 = vrot.lane.b32.xlu0 %v721, 126
        %v751 = vpop.permute.xlu0 %750
        %752 = vrot.lane.b32.xlu0 %v722, 126
        %v753 = vpop.permute.xlu0 %752
        %754 = vrot.lane.b32.xlu0 %v726, 126
        %v755 = vpop.permute.xlu0 %754
        %vm756 = vcmask 1031168
        %v757 = vsel %vm756, %v747, %v749
        %v758 = vsel %vm756, %v749, %v751
        %v759 = vsel %vm756, %v751, %v753
        %v760 = vsel %vm756, %v753, %v755
        %761 = vrot.lane.b32.xlu0 %v725, 106
        %v762 = vpop.permute.xlu0 %761
        %763 = vrot.lane.b32.xlu0 %v720, 106
        %v764 = vpop.permute.xlu0 %763
        %765 = vrot.lane.b32.xlu0 %v721, 106
        %v766 = vpop.permute.xlu0 %765
        %767 = vrot.lane.b32.xlu0 %v722, 106
        %v768 = vpop.permute.xlu0 %767
        %769 = vrot.lane.b32.xlu0 %v726, 106
        %v770 = vpop.permute.xlu0 %769
        %vm771 = vcmask 867328
        %v772 = vsel %vm771, %v762, %v764
        %v773 = vsel %vm771, %v764, %v766
        %v774 = vsel %vm771, %v766, %v768
        %v775 = vsel %vm771, %v768, %v770
        %776 = vrot.lane.b32.xlu0 %v725, 105
        %v777 = vpop.permute.xlu0 %776
        %778 = vrot.lane.b32.xlu0 %v720, 105
        %v779 = vpop.permute.xlu0 %778
        %780 = vrot.lane.b32.xlu0 %v721, 105
        %v781 = vpop.permute.xlu0 %780
        %782 = vrot.lane.b32.xlu0 %v722, 105
        %v783 = vpop.permute.xlu0 %782
        %784 = vrot.lane.b32.xlu0 %v726, 105
        %v785 = vpop.permute.xlu0 %784
        %vm786 = vcmask 859136
        %v787 = vsel %vm786, %v777, %v779
        %v788 = vsel %vm786, %v779, %v781
        %v789 = vsel %vm786, %v781, %v783
        %v790 = vsel %vm786, %v783, %v785
        %791 = vrot.lane.b32.xlu0 %v725, 104
        %v792 = vpop.permute.xlu0 %791
        %793 = vrot.lane.b32.xlu0 %v720, 104
        %v794 = vpop.permute.xlu0 %793
        %795 = vrot.lane.b32.xlu0 %v721, 104
        %v796 = vpop.permute.xlu0 %795
        %797 = vrot.lane.b32.xlu0 %v722, 104
        %v798 = vpop.permute.xlu0 %797
        %799 = vrot.lane.b32.xlu0 %v726, 104
        %v800 = vpop.permute.xlu0 %799
        %vm801 = vcmask 850944
        %v802 = vsel %vm801, %v792, %v794
        %v803 = vsel %vm801, %v794, %v796
        %v804 = vsel %vm801, %v796, %v798
        %v805 = vsel %vm801, %v798, %v800
        %806 = vrot.lane.b32.xlu0 %v725, 84
        %v807 = vpop.permute.xlu0 %806
        %808 = vrot.lane.b32.xlu0 %v720, 84
        %v809 = vpop.permute.xlu0 %808
        %810 = vrot.lane.b32.xlu0 %v721, 84
        %v811 = vpop.permute.xlu0 %810
        %812 = vrot.lane.b32.xlu0 %v722, 84
        %v813 = vpop.permute.xlu0 %812
        %814 = vrot.lane.b32.xlu0 %v726, 84
        %v815 = vpop.permute.xlu0 %814
        %vm816 = vcmask 687104
        %v817 = vsel %vm816, %v807, %v809
        %v818 = vsel %vm816, %v809, %v811
        %v819 = vsel %vm816, %v811, %v813
        %v820 = vsel %vm816, %v813, %v815
        %821 = vrot.lane.b32.xlu0 %v725, 83
        %v822 = vpop.permute.xlu0 %821
        %823 = vrot.lane.b32.xlu0 %v720, 83
        %v824 = vpop.permute.xlu0 %823
        %825 = vrot.lane.b32.xlu0 %v721, 83
        %v826 = vpop.permute.xlu0 %825
        %827 = vrot.lane.b32.xlu0 %v722, 83
        %v828 = vpop.permute.xlu0 %827
        %829 = vrot.lane.b32.xlu0 %v726, 83
        %v830 = vpop.permute.xlu0 %829
        %vm831 = vcmask 678912
        %v832 = vsel %vm831, %v822, %v824
        %v833 = vsel %vm831, %v824, %v826
        %v834 = vsel %vm831, %v826, %v828
        %v835 = vsel %vm831, %v828, %v830
        %836 = vrot.lane.b32.xlu0 %v725, 82
        %v837 = vpop.permute.xlu0 %836
        %838 = vrot.lane.b32.xlu0 %v720, 82
        %v839 = vpop.permute.xlu0 %838
        %840 = vrot.lane.b32.xlu0 %v721, 82
        %v841 = vpop.permute.xlu0 %840
        %842 = vrot.lane.b32.xlu0 %v722, 82
        %v843 = vpop.permute.xlu0 %842
        %844 = vrot.lane.b32.xlu0 %v726, 82
        %v845 = vpop.permute.xlu0 %844
        %vm846 = vcmask 670720
        %v847 = vsel %vm846, %v837, %v839
        %v848 = vsel %vm846, %v839, %v841
        %v849 = vsel %vm846, %v841, %v843
        %v850 = vsel %vm846, %v843, %v845
        %852 = vset.pattern.permute.xlu0 0
        %853 = vperm.xlu0 %852, %v728
        %v854 = vpop.permute.xlu0 %853
        %856 = vrot.lane.b32.xlu0 %v742, 82
        %v857 = vpop.permute.xlu0 %856
        %858 = vrot.lane.b32.xlu0 %v743, 82
        %v859 = vpop.permute.xlu0 %858
        %860 = vrot.lane.b32.xlu0 %v744, 82
        %v861 = vpop.permute.xlu0 %860
        %862 = vrot.lane.b32.xlu0 %v745, 82
        %v863 = vpop.permute.xlu0 %862
        %864 = vrot.lane.b32.xlu0 %v740, 82
        %v865 = vpop.permute.xlu0 %864
        %866 = vrot.lane.b32.xlu0 %v757, 82
        %v867 = vpop.permute.xlu0 %866
        %868 = vrot.lane.b32.xlu0 %v758, 82
        %v869 = vpop.permute.xlu0 %868
        %870 = vrot.lane.b32.xlu0 %v759, 82
        %v871 = vpop.permute.xlu0 %870
        %872 = vrot.lane.b32.xlu0 %v760, 82
        %v873 = vpop.permute.xlu0 %872
        %874 = vrot.lane.b32.xlu0 %v755, 82
        %v875 = vpop.permute.xlu0 %874
        %876 = vrot.lane.b32.xlu0 %v772, 82
        %v877 = vpop.permute.xlu0 %876
        %878 = vrot.lane.b32.xlu0 %v773, 82
        %v879 = vpop.permute.xlu0 %878
        %880 = vrot.lane.b32.xlu0 %v774, 82
        %v881 = vpop.permute.xlu0 %880
        %882 = vrot.lane.b32.xlu0 %v775, 82
        %v883 = vpop.permute.xlu0 %882
        %884 = vrot.lane.b32.xlu0 %v770, 82
        %v885 = vpop.permute.xlu0 %884
        %886 = vrot.lane.b32.xlu0 %v787, 82
        %v887 = vpop.permute.xlu0 %886
        %888 = vrot.lane.b32.xlu0 %v788, 82
        %v889 = vpop.permute.xlu0 %888
        %890 = vrot.lane.b32.xlu0 %v789, 82
        %v891 = vpop.permute.xlu0 %890
        %892 = vrot.lane.b32.xlu0 %v790, 82
        %v893 = vpop.permute.xlu0 %892
        %894 = vrot.lane.b32.xlu0 %v785, 82
        %v895 = vpop.permute.xlu0 %894
        %896 = vrot.lane.b32.xlu0 %v802, 82
        %v897 = vpop.permute.xlu0 %896
        %898 = vrot.lane.b32.xlu0 %v803, 82
        %v899 = vpop.permute.xlu0 %898
        %900 = vrot.lane.b32.xlu0 %v804, 82
        %v901 = vpop.permute.xlu0 %900
        %902 = vrot.lane.b32.xlu0 %v805, 82
        %v903 = vpop.permute.xlu0 %902
        %904 = vrot.lane.b32.xlu0 %v800, 82
        %v905 = vpop.permute.xlu0 %904
        %906 = vrot.lane.b32.xlu0 %v817, 82
        %v907 = vpop.permute.xlu0 %906
        %908 = vrot.lane.b32.xlu0 %v818, 82
        %v909 = vpop.permute.xlu0 %908
        %910 = vrot.lane.b32.xlu0 %v819, 82
        %v911 = vpop.permute.xlu0 %910
        %912 = vrot.lane.b32.xlu0 %v820, 82
        %v913 = vpop.permute.xlu0 %912
        %914 = vrot.lane.b32.xlu0 %v815, 82
        %v915 = vpop.permute.xlu0 %914
        %916 = vrot.lane.b32.xlu0 %v832, 82
        %v917 = vpop.permute.xlu0 %916
        %918 = vrot.lane.b32.xlu0 %v833, 82
        %v919 = vpop.permute.xlu0 %918
        %920 = vrot.lane.b32.xlu0 %v834, 82
        %v921 = vpop.permute.xlu0 %920
        %922 = vrot.lane.b32.xlu0 %v835, 82
        %v923 = vpop.permute.xlu0 %922
        %924 = vrot.lane.b32.xlu0 %v830, 82
        %v925 = vpop.permute.xlu0 %924
        %926 = vrot.lane.b32.xlu0 %v847, 82
        %v927 = vpop.permute.xlu0 %926
        %928 = vrot.lane.b32.xlu0 %v848, 82
        %v929 = vpop.permute.xlu0 %928
        %930 = vrot.lane.b32.xlu0 %v849, 82
        %v931 = vpop.permute.xlu0 %930
        %932 = vrot.lane.b32.xlu0 %v850, 82
        %v933 = vpop.permute.xlu0 %932
        %934 = vrot.lane.b32.xlu0 %v845, 82
        %v935 = vpop.permute.xlu0 %934
        %v936 = vsel %vm846, %v857, %v859
        %v937 = vsel %vm846, %v859, %v861
        %v938 = vsel %vm846, %v861, %v863
        %v939 = vsel %vm846, %v863, %v865
        %v940 = vsel %vm846, %v867, %v869
        %v941 = vsel %vm846, %v869, %v871
        %v942 = vsel %vm846, %v871, %v873
        %v943 = vsel %vm846, %v873, %v875
        %v944 = vsel %vm846, %v877, %v879
        %v945 = vsel %vm846, %v879, %v881
        %v946 = vsel %vm846, %v881, %v883
        %v947 = vsel %vm846, %v883, %v885
        %v948 = vsel %vm846, %v887, %v889
        %v949 = vsel %vm846, %v889, %v891
        %v950 = vsel %vm846, %v891, %v893
        %v951 = vsel %vm846, %v893, %v895
        %v952 = vsel %vm846, %v897, %v899
        %v953 = vsel %vm846, %v899, %v901
        %v954 = vsel %vm846, %v901, %v903
        %v955 = vsel %vm846, %v903, %v905
        %v956 = vsel %vm846, %v907, %v909
        %v957 = vsel %vm846, %v909, %v911
        %v958 = vsel %vm846, %v911, %v913
        %v959 = vsel %vm846, %v913, %v915
        %v960 = vsel %vm846, %v917, %v919
        %v961 = vsel %vm846, %v919, %v921
        %v962 = vsel %vm846, %v921, %v923
        %v963 = vsel %vm846, %v923, %v925
        %v964 = vsel %vm846, %v927, %v929
        %v965 = vsel %vm846, %v929, %v931
        %v966 = vsel %vm846, %v931, %v933
        %v967 = vsel %vm846, %v933, %v935
        %vm1004 = vcmask 588800
        %v1006 = vsel %vm1004, %v727, 0
        %1008 = vmatprep.subr.mxu0 %v848
        %1009 = vmatpush1.msra.mxu0 %v847
        %1010 = vmatprep.subr.mxu0 %v937
        %1011 = vmatpush1.msra.mxu0 %v936
        %1012 = vmatprep.subr.mxu0 %v941
        %1013 = vmatpush1.msra.mxu0 %v940
        %1014 = vmatprep.subr.mxu0 %v945
        %1015 = vmatpush1.msra.mxu0 %v944
        %1016 = vmatprep.subr.mxu0 %v949
        %1017 = vmatpush1.msra.mxu0 %v948
        %1018 = vmatprep.subr.mxu0 %v953
        %1019 = vmatpush1.msra.mxu0 %v952
        %1020 = vmatprep.subr.mxu0 %v957
        %1021 = vmatpush1.msra.mxu0 %v956
        %1022 = vmatprep.subr.mxu0 %v961
        %1023 = vmatpush1.msra.mxu0 %v960
        %1024 = vmatprep.subr.mxu0 %v965
        %1025 = vmatpush1.msra.mxu0 %v964
        %1026 = vmatprep.subr.mxu0 0.0
        %1027 = vmatpush1.msra.mxu0 0.0
        %1028 = vmatprep.subr.mxu0 0.0
        %1029 = vmatpush1.msra.mxu0 0.0
        %1030 = vmatprep.subr.mxu0 0.0
        %1031 = vmatpush1.msra.mxu0 0.0
        %1032 = vmatprep.subr.mxu0 0.0
        %1033 = vmatpush1.msra.mxu0 0.0
        %1034 = vmatprep.subr.mxu0 0.0
        %1035 = vmatpush1.msra.mxu0 0.0
        %1036 = vmatprep.subr.mxu0 0.0
        %1037 = vmatpush1.msra.mxu0 0.0
        %1038 = vmatprep.subr.mxu0 0.0
        %1039 = vmatpush1.msra.mxu0 0.0
        %1040 = vmatprep.subr.mxu0 0.0
        %1041 = vmatpush1.msra.mxu0 0.0
        %1042 = vmatprep.subr.mxu0 0.0
        %1043 = vmatpush1.msra.mxu0 0.0
        %1044 = vmatprep.subr.mxu0 0.0
        %1045 = vmatpush1.msra.mxu0 0.0
        %1046 = vmatprep.subr.mxu0 0.0
        %1047 = vmatpush1.msra.mxu0 0.0
        %1048 = vmatprep.subr.mxu0 0.0
        %1049 = vmatpush1.msra.mxu0 0.0
        %1050 = vmatprep.subr.mxu0 0.0
        %1051 = vmatpush1.msra.mxu0 0.0
        %1052 = vmatprep.subr.mxu0 0.0
        %1053 = vmatpush1.msra.mxu0 0.0
        %1054 = vmatprep.subr.mxu0 0.0
        %1055 = vmatpush1.msra.mxu0 0.0
        %1056 = vmatprep.subr.mxu0 0.0
        %1057 = vmatpush1.msra.mxu0 0.0
        %1058 = vmatprep.subr.mxu0 0.0
        %1059 = vmatpush1.msra.mxu0 0.0
        %1060 = vmatprep.subr.mxu0 0.0
        %1061 = vmatpush1.msra.mxu0 0.0
        %1062 = vmatprep.subr.mxu0 0.0
        %1063 = vmatpush1.msra.mxu0 0.0
        %1064 = vmatprep.subr.mxu0 0.0
        %1065 = vmatpush1.msra.mxu0 0.0
        %1066 = vmatprep.subr.mxu0 0.0
        %1067 = vmatpush1.msra.mxu0 0.0
        %1068 = vmatprep.subr.mxu0 0.0
        %1069 = vmatpush1.msra.mxu0 0.0
        %1070 = vmatprep.subr.mxu0 0.0
        %1071 = vmatpush1.msra.mxu0 0.0
        %1072 = vmatprep.mubr.f32.mxu0 0.0
        %1073 = vmatmul.mubr.f32.gmra.mrb[0].mxu0 %v1006
        %v1074 = vpop.f32.mrb[0].mxu0
        %v1075 = vadd.f32 %v854, %v1074
        %v1076 = vpop.f32.mrb[0].mxu0
        %v1077 = vadd.f32 %v854, %v1076
        %1078 = vdwg.mxu0
        %1079 = vmatprep.subr.mxu0 %v850
        %1080 = vmatpush1.msra.mxu0 %v849
        %1081 = vmatprep.subr.mxu0 %v939
        %1082 = vmatpush1.msra.mxu0 %v938
        %1083 = vmatprep.subr.mxu0 %v943
        %1084 = vmatpush1.msra.mxu0 %v942
        %1085 = vmatprep.subr.mxu0 %v947
        %1086 = vmatpush1.msra.mxu0 %v946
        %1087 = vmatprep.subr.mxu0 %v951
        %1088 = vmatpush1.msra.mxu0 %v950
        %1089 = vmatprep.subr.mxu0 %v955
        %1090 = vmatpush1.msra.mxu0 %v954
        %1091 = vmatprep.subr.mxu0 %v959
        %1092 = vmatpush1.msra.mxu0 %v958
        %1093 = vmatprep.subr.mxu0 %v963
        %1094 = vmatpush1.msra.mxu0 %v962
        %1095 = vmatprep.subr.mxu0 %v967
        %1096 = vmatpush1.msra.mxu0 %v966
        %1097 = vmatprep.subr.mxu0 0.0
        %1098 = vmatpush1.msra.mxu0 0.0
        %1099 = vmatprep.subr.mxu0 0.0
        %1100 = vmatpush1.msra.mxu0 0.0
        %1101 = vmatprep.subr.mxu0 0.0
        %1102 = vmatpush1.msra.mxu0 0.0
        %1103 = vmatprep.subr.mxu0 0.0
        %1104 = vmatpush1.msra.mxu0 0.0
        %1105 = vmatprep.subr.mxu0 0.0
        %1106 = vmatpush1.msra.mxu0 0.0
        %1107 = vmatprep.subr.mxu0 0.0
        %1108 = vmatpush1.msra.mxu0 0.0
        %1109 = vmatprep.subr.mxu0 0.0
        %1110 = vmatpush1.msra.mxu0 0.0
        %1111 = vmatprep.subr.mxu0 0.0
        %1112 = vmatpush1.msra.mxu0 0.0
        %1113 = vmatprep.subr.mxu0 0.0
        %1114 = vmatpush1.msra.mxu0 0.0
        %1115 = vmatprep.subr.mxu0 0.0
        %1116 = vmatpush1.msra.mxu0 0.0
        %1117 = vmatprep.subr.mxu0 0.0
        %1118 = vmatpush1.msra.mxu0 0.0
        %1119 = vmatprep.subr.mxu0 0.0
        %1120 = vmatpush1.msra.mxu0 0.0
        %1121 = vmatprep.subr.mxu0 0.0
        %1122 = vmatpush1.msra.mxu0 0.0
        %1123 = vmatprep.subr.mxu0 0.0
        %1124 = vmatpush1.msra.mxu0 0.0
        %1125 = vmatprep.subr.mxu0 0.0
        %1126 = vmatpush1.msra.mxu0 0.0
        %1127 = vmatprep.subr.mxu0 0.0
        %1128 = vmatpush1.msra.mxu0 0.0
        %1129 = vmatprep.subr.mxu0 0.0
        %1130 = vmatpush1.msra.mxu0 0.0
        %1131 = vmatprep.subr.mxu0 0.0
        %1132 = vmatpush1.msra.mxu0 0.0
        %1133 = vmatprep.subr.mxu0 0.0
        %1134 = vmatpush1.msra.mxu0 0.0
        %1135 = vmatprep.subr.mxu0 0.0
        %1136 = vmatpush1.msra.mxu0 0.0
        %1137 = vmatprep.subr.mxu0 0.0
        %1138 = vmatpush1.msra.mxu0 0.0
        %1139 = vmatprep.subr.mxu0 0.0
        %1140 = vmatpush1.msra.mxu0 0.0
        %1141 = vmatprep.subr.mxu0 0.0
        %1142 = vmatpush1.msra.mxu0 0.0
        %1143 = vmatprep.mubr.f32.mxu0 0.0
        %1144 = vmatmul.mubr.f32.gmra.mrb[0].mxu0 %v1006
        %v1145 = vpop.f32.mrb[0].mxu0
        %v1146 = vadd.f32 %v854, %v1145
        %v1147 = vpop.f32.mrb[0].mxu0
        %v1148 = vadd.f32 %v854, %v1147
        %1149 = vdwg.mxu0
        %v1150 = vmax.f32 %v1075, 0.0
        %v1151 = vmax.f32 %v1077, 0.0
        %v1152 = vmax.f32 %v1146, 0.0
        %v1153 = vmax.f32 %v1148, 0.0
        %v1154 = vmul.f32 %v1150, %v687
        %v1155 = vmul.f32 %v1151, %v691
        %v1156 = vmul.f32 %v1152, %v695
        %v1157 = vmul.f32 %v1153, %v699
        %1162 = vrot.lane.b32.xlu0 %v1154, 69
        %v1163 = vpop.permute.xlu0 %1162
        %1164 = vrot.lane.b32.xlu0 %v1155, 69
        %v1165 = vpop.permute.xlu0 %1164
        %1166 = vrot.lane.b32.xlu0 %v1156, 69
        %v1167 = vpop.permute.xlu0 %1166
        %1168 = vrot.lane.b32.xlu0 %v1157, 69
        %v1169 = vpop.permute.xlu0 %1168
        %v1170 = vsel %vm497, %v1163, %v1165
        %v1171 = vsel %vm497, %v1165, %v1167
        %v1172 = vsel %vm497, %v1167, %v1169
        %v1175 = vsel %vm497, 0.0, %v1163
        %v1176 = vsel %vm497, %v1169, 0.0
        %v1177 = vld [vmem:[#allocation10] sm:$0xff]
        %v1178 = vld [vmem:[#allocation10 + $0x8] sm:$0xff]
        %v1179 = vld [vmem:[#allocation10 + $0x10] sm:$0xff]
        %v1180 = vld [vmem:[#allocation10 + $0x18] sm:$0xff]
        %v1181 = vld [vmem:[%s7] sm:$0xff]
        %1184 = vrot.lane.b32.xlu0 %v1175, 127
        %v1185 = vpop.permute.xlu0 %1184
        %1186 = vrot.lane.b32.xlu0 %v1170, 127
        %v1187 = vpop.permute.xlu0 %1186
        %1188 = vrot.lane.b32.xlu0 %v1171, 127
        %v1189 = vpop.permute.xlu0 %1188
        %1190 = vrot.lane.b32.xlu0 %v1172, 127
        %v1191 = vpop.permute.xlu0 %1190
        %1192 = vrot.lane.b32.xlu0 %v1176, 127
        %v1193 = vpop.permute.xlu0 %1192
        %v1194 = vsel %vm741, %v1185, %v1187
        %v1195 = vsel %vm741, %v1187, %v1189
        %v1196 = vsel %vm741, %v1189, %v1191
        %v1197 = vsel %vm741, %v1191, %v1193
        %1198 = vrot.lane.b32.xlu0 %v1175, 126
        %v1199 = vpop.permute.xlu0 %1198
        %1200 = vrot.lane.b32.xlu0 %v1170, 126
        %v1201 = vpop.permute.xlu0 %1200
        %1202 = vrot.lane.b32.xlu0 %v1171, 126
        %v1203 = vpop.permute.xlu0 %1202
        %1204 = vrot.lane.b32.xlu0 %v1172, 126
        %v1205 = vpop.permute.xlu0 %1204
        %1206 = vrot.lane.b32.xlu0 %v1176, 126
        %v1207 = vpop.permute.xlu0 %1206
        %v1208 = vsel %vm756, %v1199, %v1201
        %v1209 = vsel %vm756, %v1201, %v1203
        %v1210 = vsel %vm756, %v1203, %v1205
        %v1211 = vsel %vm756, %v1205, %v1207
        %1212 = vrot.lane.b32.xlu0 %v725, 125
        %v1213 = vpop.permute.xlu0 %1212
        %1214 = vrot.lane.b32.xlu0 %v720, 125
        %v1215 = vpop.permute.xlu0 %1214
        %1216 = vrot.lane.b32.xlu0 %v721, 125
        %v1217 = vpop.permute.xlu0 %1216
        %1218 = vrot.lane.b32.xlu0 %v722, 125
        %v1219 = vpop.permute.xlu0 %1218
        %1220 = vrot.lane.b32.xlu0 %v726, 125
        %v1221 = vpop.permute.xlu0 %1220
        %1222 = vrot.lane.b32.xlu0 %v1175, 125
        %v1223 = vpop.permute.xlu0 %1222
        %1224 = vrot.lane.b32.xlu0 %v1170, 125
        %v1225 = vpop.permute.xlu0 %1224
        %1226 = vrot.lane.b32.xlu0 %v1171, 125
        %v1227 = vpop.permute.xlu0 %1226
        %1228 = vrot.lane.b32.xlu0 %v1172, 125
        %v1229 = vpop.permute.xlu0 %1228
        %1230 = vrot.lane.b32.xlu0 %v1176, 125
        %v1231 = vpop.permute.xlu0 %1230
        %vm1232 = vcmask 1022976
        %v1233 = vsel %vm1232, %v1213, %v1215
        %v1234 = vsel %vm1232, %v1215, %v1217
        %v1235 = vsel %vm1232, %v1217, %v1219
        %v1236 = vsel %vm1232, %v1219, %v1221
        %v1237 = vsel %vm1232, %v1223, %v1225
        %v1238 = vsel %vm1232, %v1225, %v1227
        %v1239 = vsel %vm1232, %v1227, %v1229
        %v1240 = vsel %vm1232, %v1229, %v1231
        %1241 = vrot.lane.b32.xlu0 %v725, 124
        %v1242 = vpop.permute.xlu0 %1241
        %1243 = vrot.lane.b32.xlu0 %v720, 124
        %v1244 = vpop.permute.xlu0 %1243
        %1245 = vrot.lane.b32.xlu0 %v721, 124
        %v1246 = vpop.permute.xlu0 %1245
        %1247 = vrot.lane.b32.xlu0 %v722, 124
        %v1248 = vpop.permute.xlu0 %1247
        %1249 = vrot.lane.b32.xlu0 %v726, 124
        %v1250 = vpop.permute.xlu0 %1249
        %1251 = vrot.lane.b32.xlu0 %v1175, 124
        %v1252 = vpop.permute.xlu0 %1251
        %1253 = vrot.lane.b32.xlu0 %v1170, 124
        %v1254 = vpop.permute.xlu0 %1253
        %1255 = vrot.lane.b32.xlu0 %v1171, 124
        %v1256 = vpop.permute.xlu0 %1255
        %1257 = vrot.lane.b32.xlu0 %v1172, 124
        %v1258 = vpop.permute.xlu0 %1257
        %1259 = vrot.lane.b32.xlu0 %v1176, 124
        %v1260 = vpop.permute.xlu0 %1259
        %vm1261 = vcmask 1014784
        %v1262 = vsel %vm1261, %v1242, %v1244
        %v1263 = vsel %vm1261, %v1244, %v1246
        %v1264 = vsel %vm1261, %v1246, %v1248
        %v1265 = vsel %vm1261, %v1248, %v1250
        %v1266 = vsel %vm1261, %v1252, %v1254
        %v1267 = vsel %vm1261, %v1254, %v1256
        %v1268 = vsel %vm1261, %v1256, %v1258
        %v1269 = vsel %vm1261, %v1258, %v1260
        %1270 = vrot.lane.b32.xlu0 %v1175, 106
        %v1271 = vpop.permute.xlu0 %1270
        %1272 = vrot.lane.b32.xlu0 %v1170, 106
        %v1273 = vpop.permute.xlu0 %1272
        %1274 = vrot.lane.b32.xlu0 %v1171, 106
        %v1275 = vpop.permute.xlu0 %1274
        %1276 = vrot.lane.b32.xlu0 %v1172, 106
        %v1277 = vpop.permute.xlu0 %1276
        %1278 = vrot.lane.b32.xlu0 %v1176, 106
        %v1279 = vpop.permute.xlu0 %1278
        %v1280 = vsel %vm771, %v1271, %v1273
        %v1281 = vsel %vm771, %v1273, %v1275
        %v1282 = vsel %vm771, %v1275, %v1277
        %v1283 = vsel %vm771, %v1277, %v1279
        %1284 = vrot.lane.b32.xlu0 %v1175, 105
        %v1285 = vpop.permute.xlu0 %1284
        %1286 = vrot.lane.b32.xlu0 %v1170, 105
        %v1287 = vpop.permute.xlu0 %1286
        %1288 = vrot.lane.b32.xlu0 %v1171, 105
        %v1289 = vpop.permute.xlu0 %1288
        %1290 = vrot.lane.b32.xlu0 %v1172, 105
        %v1291 = vpop.permute.xlu0 %1290
        %1292 = vrot.lane.b32.xlu0 %v1176, 105
        %v1293 = vpop.permute.xlu0 %1292
        %v1294 = vsel %vm786, %v1285, %v1287
        %v1295 = vsel %vm786, %v1287, %v1289
        %v1296 = vsel %vm786, %v1289, %v1291
        %v1297 = vsel %vm786, %v1291, %v1293
        %1298 = vrot.lane.b32.xlu0 %v1175, 104
        %v1299 = vpop.permute.xlu0 %1298
        %1300 = vrot.lane.b32.xlu0 %v1170, 104
        %v1301 = vpop.permute.xlu0 %1300
        %1302 = vrot.lane.b32.xlu0 %v1171, 104
        %v1303 = vpop.permute.xlu0 %1302
        %1304 = vrot.lane.b32.xlu0 %v1172, 104
        %v1305 = vpop.permute.xlu0 %1304
        %1306 = vrot.lane.b32.xlu0 %v1176, 104
        %v1307 = vpop.permute.xlu0 %1306
        %v1308 = vsel %vm801, %v1299, %v1301
        %v1309 = vsel %vm801, %v1301, %v1303
        %v1310 = vsel %vm801, %v1303, %v1305
        %v1311 = vsel %vm801, %v1305, %v1307
        %1312 = vrot.lane.b32.xlu0 %v725, 103
        %v1313 = vpop.permute.xlu0 %1312
        %1314 = vrot.lane.b32.xlu0 %v720, 103
        %v1315 = vpop.permute.xlu0 %1314
        %1316 = vrot.lane.b32.xlu0 %v721, 103
        %v1317 = vpop.permute.xlu0 %1316
        %1318 = vrot.lane.b32.xlu0 %v722, 103
        %v1319 = vpop.permute.xlu0 %1318
        %1320 = vrot.lane.b32.xlu0 %v726, 103
        %v1321 = vpop.permute.xlu0 %1320
        %1322 = vrot.lane.b32.xlu0 %v1175, 103
        %v1323 = vpop.permute.xlu0 %1322
        %1324 = vrot.lane.b32.xlu0 %v1170, 103
        %v1325 = vpop.permute.xlu0 %1324
        %1326 = vrot.lane.b32.xlu0 %v1171, 103
        %v1327 = vpop.permute.xlu0 %1326
        %1328 = vrot.lane.b32.xlu0 %v1172, 103
        %v1329 = vpop.permute.xlu0 %1328
        %1330 = vrot.lane.b32.xlu0 %v1176, 103
        %v1331 = vpop.permute.xlu0 %1330
        %vm1332 = vcmask 842752
        %v1333 = vsel %vm1332, %v1313, %v1315
        %v1334 = vsel %vm1332, %v1315, %v1317
        %v1335 = vsel %vm1332, %v1317, %v1319
        %v1336 = vsel %vm1332, %v1319, %v1321
        %v1337 = vsel %vm1332, %v1323, %v1325
        %v1338 = vsel %vm1332, %v1325, %v1327
        %v1339 = vsel %vm1332, %v1327, %v1329
        %v1340 = vsel %vm1332, %v1329, %v1331
        %1341 = vrot.lane.b32.xlu0 %v725, 102
        %v1342 = vpop.permute.xlu0 %1341
        %1343 = vrot.lane.b32.xlu0 %v720, 102
        %v1344 = vpop.permute.xlu0 %1343
        %1345 = vrot.lane.b32.xlu0 %v721, 102
        %v1346 = vpop.permute.xlu0 %1345
        %1347 = vrot.lane.b32.xlu0 %v722, 102
        %v1348 = vpop.permute.xlu0 %1347
        %1349 = vrot.lane.b32.xlu0 %v726, 102
        %v1350 = vpop.permute.xlu0 %1349
        %1351 = vrot.lane.b32.xlu0 %v1175, 102
        %v1352 = vpop.permute.xlu0 %1351
        %1353 = vrot.lane.b32.xlu0 %v1170, 102
        %v1354 = vpop.permute.xlu0 %1353
        %1355 = vrot.lane.b32.xlu0 %v1171, 102
        %v1356 = vpop.permute.xlu0 %1355
        %1357 = vrot.lane.b32.xlu0 %v1172, 102
        %v1358 = vpop.permute.xlu0 %1357
        %1359 = vrot.lane.b32.xlu0 %v1176, 102
        %v1360 = vpop.permute.xlu0 %1359
        %vm1361 = vcmask 834560
        %v1362 = vsel %vm1361, %v1342, %v1344
        %v1363 = vsel %vm1361, %v1344, %v1346
        %v1364 = vsel %vm1361, %v1346, %v1348
        %v1365 = vsel %vm1361, %v1348, %v1350
        %v1366 = vsel %vm1361, %v1352, %v1354
        %v1367 = vsel %vm1361, %v1354, %v1356
        %v1368 = vsel %vm1361, %v1356, %v1358
        %v1369 = vsel %vm1361, %v1358, %v1360
        %1370 = vrot.lane.b32.xlu0 %v1175, 84
        %v1371 = vpop.permute.xlu0 %1370
        %1372 = vrot.lane.b32.xlu0 %v1170, 84
        %v1373 = vpop.permute.xlu0 %1372
        %1374 = vrot.lane.b32.xlu0 %v1171, 84
        %v1375 = vpop.permute.xlu0 %1374
        %1376 = vrot.lane.b32.xlu0 %v1172, 84
        %v1377 = vpop.permute.xlu0 %1376
        %1378 = vrot.lane.b32.xlu0 %v1176, 84
        %v1379 = vpop.permute.xlu0 %1378
        %v1380 = vsel %vm816, %v1371, %v1373
        %v1381 = vsel %vm816, %v1373, %v1375
        %v1382 = vsel %vm816, %v1375, %v1377
        %v1383 = vsel %vm816, %v1377, %v1379
        %1384 = vrot.lane.b32.xlu0 %v1175, 83
        %v1385 = vpop.permute.xlu0 %1384
        %1386 = vrot.lane.b32.xlu0 %v1170, 83
        %v1387 = vpop.permute.xlu0 %1386
        %1388 = vrot.lane.b32.xlu0 %v1171, 83
        %v1389 = vpop.permute.xlu0 %1388
        %1390 = vrot.lane.b32.xlu0 %v1172, 83
        %v1391 = vpop.permute.xlu0 %1390
        %1392 = vrot.lane.b32.xlu0 %v1176, 83
        %v1393 = vpop.permute.xlu0 %1392
        %v1394 = vsel %vm831, %v1385, %v1387
        %v1395 = vsel %vm831, %v1387, %v1389
        %v1396 = vsel %vm831, %v1389, %v1391
        %v1397 = vsel %vm831, %v1391, %v1393
        %1398 = vrot.lane.b32.xlu0 %v1175, 82
        %v1399 = vpop.permute.xlu0 %1398
        %1400 = vrot.lane.b32.xlu0 %v1170, 82
        %v1401 = vpop.permute.xlu0 %1400
        %1402 = vrot.lane.b32.xlu0 %v1171, 82
        %v1403 = vpop.permute.xlu0 %1402
        %1404 = vrot.lane.b32.xlu0 %v1172, 82
        %v1405 = vpop.permute.xlu0 %1404
        %1406 = vrot.lane.b32.xlu0 %v1176, 82
        %v1407 = vpop.permute.xlu0 %1406
        %v1408 = vsel %vm846, %v1399, %v1401
        %v1409 = vsel %vm846, %v1401, %v1403
        %v1410 = vsel %vm846, %v1403, %v1405
        %v1411 = vsel %vm846, %v1405, %v1407
        %1412 = vrot.lane.b32.xlu0 %v725, 81
        %v1413 = vpop.permute.xlu0 %1412
        %1414 = vrot.lane.b32.xlu0 %v720, 81
        %v1415 = vpop.permute.xlu0 %1414
        %1416 = vrot.lane.b32.xlu0 %v721, 81
        %v1417 = vpop.permute.xlu0 %1416
        %1418 = vrot.lane.b32.xlu0 %v722, 81
        %v1419 = vpop.permute.xlu0 %1418
        %1420 = vrot.lane.b32.xlu0 %v726, 81
        %v1421 = vpop.permute.xlu0 %1420
        %1422 = vrot.lane.b32.xlu0 %v1175, 81
        %v1423 = vpop.permute.xlu0 %1422
        %1424 = vrot.lane.b32.xlu0 %v1170, 81
        %v1425 = vpop.permute.xlu0 %1424
        %1426 = vrot.lane.b32.xlu0 %v1171, 81
        %v1427 = vpop.permute.xlu0 %1426
        %1428 = vrot.lane.b32.xlu0 %v1172, 81
        %v1429 = vpop.permute.xlu0 %1428
        %1430 = vrot.lane.b32.xlu0 %v1176, 81
        %v1431 = vpop.permute.xlu0 %1430
        %vm1432 = vcmask 662528
        %v1433 = vsel %vm1432, %v1413, %v1415
        %v1434 = vsel %vm1432, %v1415, %v1417
        %v1435 = vsel %vm1432, %v1417, %v1419
        %v1436 = vsel %vm1432, %v1419, %v1421
        %v1437 = vsel %vm1432, %v1423, %v1425
        %v1438 = vsel %vm1432, %v1425, %v1427
        %v1439 = vsel %vm1432, %v1427, %v1429
        %v1440 = vsel %vm1432, %v1429, %v1431
        %1441 = vrot.lane.b32.xlu0 %v725, 80
        %v1442 = vpop.permute.xlu0 %1441
        %1443 = vrot.lane.b32.xlu0 %v720, 80
        %v1444 = vpop.permute.xlu0 %1443
        %1445 = vrot.lane.b32.xlu0 %v721, 80
        %v1446 = vpop.permute.xlu0 %1445
        %1447 = vrot.lane.b32.xlu0 %v722, 80
        %v1448 = vpop.permute.xlu0 %1447
        %1449 = vrot.lane.b32.xlu0 %v726, 80
        %v1450 = vpop.permute.xlu0 %1449
        %1451 = vrot.lane.b32.xlu0 %v1175, 80
        %v1452 = vpop.permute.xlu0 %1451
        %1453 = vrot.lane.b32.xlu0 %v1170, 80
        %v1454 = vpop.permute.xlu0 %1453
        %1455 = vrot.lane.b32.xlu0 %v1171, 80
        %v1456 = vpop.permute.xlu0 %1455
        %1457 = vrot.lane.b32.xlu0 %v1172, 80
        %v1458 = vpop.permute.xlu0 %1457
        %1459 = vrot.lane.b32.xlu0 %v1176, 80
        %v1460 = vpop.permute.xlu0 %1459
        %vm1461 = vcmask 654336
        %v1462 = vsel %vm1461, %v1442, %v1444
        %v1463 = vsel %vm1461, %v1444, %v1446
        %v1464 = vsel %vm1461, %v1446, %v1448
        %v1465 = vsel %vm1461, %v1448, %v1450
        %v1466 = vsel %vm1461, %v1452, %v1454
        %v1467 = vsel %vm1461, %v1454, %v1456
        %v1468 = vsel %vm1461, %v1456, %v1458
        %v1469 = vsel %vm1461, %v1458, %v1460
        %1470 = vrot.lane.b32.xlu0 %v725, 62
        %v1471 = vpop.permute.xlu0 %1470
        %1472 = vrot.lane.b32.xlu0 %v720, 62
        %v1473 = vpop.permute.xlu0 %1472
        %1474 = vrot.lane.b32.xlu0 %v721, 62
        %v1475 = vpop.permute.xlu0 %1474
        %1476 = vrot.lane.b32.xlu0 %v722, 62
        %v1477 = vpop.permute.xlu0 %1476
        %1478 = vrot.lane.b32.xlu0 %v726, 62
        %v1479 = vpop.permute.xlu0 %1478
        %1480 = vrot.lane.b32.xlu0 %v1175, 62
        %v1481 = vpop.permute.xlu0 %1480
        %1482 = vrot.lane.b32.xlu0 %v1170, 62
        %v1483 = vpop.permute.xlu0 %1482
        %1484 = vrot.lane.b32.xlu0 %v1171, 62
        %v1485 = vpop.permute.xlu0 %1484
        %1486 = vrot.lane.b32.xlu0 %v1172, 62
        %v1487 = vpop.permute.xlu0 %1486
        %1488 = vrot.lane.b32.xlu0 %v1176, 62
        %v1489 = vpop.permute.xlu0 %1488
        %vm1490 = vcmask 506880
        %v1491 = vsel %vm1490, %v1471, %v1473
        %v1492 = vsel %vm1490, %v1473, %v1475
        %v1493 = vsel %vm1490, %v1475, %v1477
        %v1494 = vsel %vm1490, %v1477, %v1479
        %v1495 = vsel %vm1490, %v1481, %v1483
        %v1496 = vsel %vm1490, %v1483, %v1485
        %v1497 = vsel %vm1490, %v1485, %v1487
        %v1498 = vsel %vm1490, %v1487, %v1489
        %1499 = vrot.lane.b32.xlu0 %v725, 107
        %v1500 = vpop.permute.xlu0 %1499
        %1501 = vrot.lane.b32.xlu0 %v720, 107
        %v1502 = vpop.permute.xlu0 %1501
        %1503 = vrot.lane.b32.xlu0 %v721, 107
        %v1504 = vpop.permute.xlu0 %1503
        %1505 = vrot.lane.b32.xlu0 %v722, 107
        %v1506 = vpop.permute.xlu0 %1505
        %1507 = vrot.lane.b32.xlu0 %v726, 107
        %v1508 = vpop.permute.xlu0 %1507
        %1509 = vrot.lane.b32.xlu0 %v1175, 107
        %v1510 = vpop.permute.xlu0 %1509
        %1511 = vrot.lane.b32.xlu0 %v1170, 107
        %v1512 = vpop.permute.xlu0 %1511
        %1513 = vrot.lane.b32.xlu0 %v1171, 107
        %v1514 = vpop.permute.xlu0 %1513
        %1515 = vrot.lane.b32.xlu0 %v1172, 107
        %v1516 = vpop.permute.xlu0 %1515
        %1517 = vrot.lane.b32.xlu0 %v1176, 107
        %v1518 = vpop.permute.xlu0 %1517
        %vm1519 = vcmask 875520
        %v1520 = vsel %vm1519, %v1500, %v1502
        %v1521 = vsel %vm1519, %v1502, %v1504
        %v1522 = vsel %vm1519, %v1504, %v1506
        %v1523 = vsel %vm1519, %v1506, %v1508
        %v1524 = vsel %vm1519, %v1510, %v1512
        %v1525 = vsel %vm1519, %v1512, %v1514
        %v1526 = vsel %vm1519, %v1514, %v1516
        %v1527 = vsel %vm1519, %v1516, %v1518
        %1528 = vrot.lane.b32.xlu0 %v725, 61
        %v1529 = vpop.permute.xlu0 %1528
        %1530 = vrot.lane.b32.xlu0 %v720, 61
        %v1531 = vpop.permute.xlu0 %1530
        %1532 = vrot.lane.b32.xlu0 %v721, 61
        %v1533 = vpop.permute.xlu0 %1532
        %1534 = vrot.lane.b32.xlu0 %v722, 61
        %v1535 = vpop.permute.xlu0 %1534
        %1536 = vrot.lane.b32.xlu0 %v726, 61
        %v1537 = vpop.permute.xlu0 %1536
        %1538 = vrot.lane.b32.xlu0 %v1175, 61
        %v1539 = vpop.permute.xlu0 %1538
        %1540 = vrot.lane.b32.xlu0 %v1170, 61
        %v1541 = vpop.permute.xlu0 %1540
        %1542 = vrot.lane.b32.xlu0 %v1171, 61
        %v1543 = vpop.permute.xlu0 %1542
        %1544 = vrot.lane.b32.xlu0 %v1172, 61
        %v1545 = vpop.permute.xlu0 %1544
        %1546 = vrot.lane.b32.xlu0 %v1176, 61
        %v1547 = vpop.permute.xlu0 %1546
        %1548 = vrot.lane.b32.xlu0 %v742, 61
        %v1549 = vpop.permute.xlu0 %1548
        %1550 = vrot.lane.b32.xlu0 %v743, 61
        %v1551 = vpop.permute.xlu0 %1550
        %1552 = vrot.lane.b32.xlu0 %v744, 61
        %v1553 = vpop.permute.xlu0 %1552
        %1554 = vrot.lane.b32.xlu0 %v745, 61
        %v1555 = vpop.permute.xlu0 %1554
        %1556 = vrot.lane.b32.xlu0 %v740, 61
        %v1557 = vpop.permute.xlu0 %1556
        %1558 = vrot.lane.b32.xlu0 %v1194, 61
        %v1559 = vpop.permute.xlu0 %1558
        %1560 = vrot.lane.b32.xlu0 %v1195, 61
        %v1561 = vpop.permute.xlu0 %1560
        %1562 = vrot.lane.b32.xlu0 %v1196, 61
        %v1563 = vpop.permute.xlu0 %1562
        %1564 = vrot.lane.b32.xlu0 %v1197, 61
        %v1565 = vpop.permute.xlu0 %1564
        %1566 = vrot.lane.b32.xlu0 %v1193, 61
        %v1567 = vpop.permute.xlu0 %1566
        %1568 = vrot.lane.b32.xlu0 %v757, 61
        %v1569 = vpop.permute.xlu0 %1568
        %1570 = vrot.lane.b32.xlu0 %v758, 61
        %v1571 = vpop.permute.xlu0 %1570
        %1572 = vrot.lane.b32.xlu0 %v759, 61
        %v1573 = vpop.permute.xlu0 %1572
        %1574 = vrot.lane.b32.xlu0 %v760, 61
        %v1575 = vpop.permute.xlu0 %1574
        %1576 = vrot.lane.b32.xlu0 %v755, 61
        %v1577 = vpop.permute.xlu0 %1576
        %1578 = vrot.lane.b32.xlu0 %v1208, 61
        %v1579 = vpop.permute.xlu0 %1578
        %1580 = vrot.lane.b32.xlu0 %v1209, 61
        %v1581 = vpop.permute.xlu0 %1580
        %1582 = vrot.lane.b32.xlu0 %v1210, 61
        %v1583 = vpop.permute.xlu0 %1582
        %1584 = vrot.lane.b32.xlu0 %v1211, 61
        %v1585 = vpop.permute.xlu0 %1584
        %1586 = vrot.lane.b32.xlu0 %v1207, 61
        %v1587 = vpop.permute.xlu0 %1586
        %1588 = vrot.lane.b32.xlu0 %v1233, 61
        %v1589 = vpop.permute.xlu0 %1588
        %1590 = vrot.lane.b32.xlu0 %v1234, 61
        %v1591 = vpop.permute.xlu0 %1590
        %1592 = vrot.lane.b32.xlu0 %v1235, 61
        %v1593 = vpop.permute.xlu0 %1592
        %1594 = vrot.lane.b32.xlu0 %v1236, 61
        %v1595 = vpop.permute.xlu0 %1594
        %1596 = vrot.lane.b32.xlu0 %v1221, 61
        %v1597 = vpop.permute.xlu0 %1596
        %1598 = vrot.lane.b32.xlu0 %v1237, 61
        %v1599 = vpop.permute.xlu0 %1598
        %1600 = vrot.lane.b32.xlu0 %v1238, 61
        %v1601 = vpop.permute.xlu0 %1600
        %1602 = vrot.lane.b32.xlu0 %v1239, 61
        %v1603 = vpop.permute.xlu0 %1602
        %1604 = vrot.lane.b32.xlu0 %v1240, 61
        %v1605 = vpop.permute.xlu0 %1604
        %1606 = vrot.lane.b32.xlu0 %v1231, 61
        %v1607 = vpop.permute.xlu0 %1606
        %1608 = vrot.lane.b32.xlu0 %v1520, 61
        %v1609 = vpop.permute.xlu0 %1608
        %1610 = vrot.lane.b32.xlu0 %v1521, 61
        %v1611 = vpop.permute.xlu0 %1610
        %1612 = vrot.lane.b32.xlu0 %v1522, 61
        %v1613 = vpop.permute.xlu0 %1612
        %1614 = vrot.lane.b32.xlu0 %v1523, 61
        %v1615 = vpop.permute.xlu0 %1614
        %1616 = vrot.lane.b32.xlu0 %v1508, 61
        %v1617 = vpop.permute.xlu0 %1616
        %1618 = vrot.lane.b32.xlu0 %v1524, 61
        %v1619 = vpop.permute.xlu0 %1618
        %1620 = vrot.lane.b32.xlu0 %v1525, 61
        %v1621 = vpop.permute.xlu0 %1620
        %1622 = vrot.lane.b32.xlu0 %v1526, 61
        %v1623 = vpop.permute.xlu0 %1622
        %1624 = vrot.lane.b32.xlu0 %v1527, 61
        %v1625 = vpop.permute.xlu0 %1624
        %1626 = vrot.lane.b32.xlu0 %v1518, 61
        %v1627 = vpop.permute.xlu0 %1626
        %1628 = vrot.lane.b32.xlu0 %v772, 61
        %v1629 = vpop.permute.xlu0 %1628
        %1630 = vrot.lane.b32.xlu0 %v773, 61
        %v1631 = vpop.permute.xlu0 %1630
        %1632 = vrot.lane.b32.xlu0 %v774, 61
        %v1633 = vpop.permute.xlu0 %1632
        %1634 = vrot.lane.b32.xlu0 %v775, 61
        %v1635 = vpop.permute.xlu0 %1634
        %1636 = vrot.lane.b32.xlu0 %v770, 61
        %v1637 = vpop.permute.xlu0 %1636
        %1638 = vrot.lane.b32.xlu0 %v1280, 61
        %v1639 = vpop.permute.xlu0 %1638
        %1640 = vrot.lane.b32.xlu0 %v1281, 61
        %v1641 = vpop.permute.xlu0 %1640
        %1642 = vrot.lane.b32.xlu0 %v1282, 61
        %v1643 = vpop.permute.xlu0 %1642
        %1644 = vrot.lane.b32.xlu0 %v1283, 61
        %v1645 = vpop.permute.xlu0 %1644
        %1646 = vrot.lane.b32.xlu0 %v1279, 61
        %v1647 = vpop.permute.xlu0 %1646
        %1648 = vrot.lane.b32.xlu0 %v787, 61
        %v1649 = vpop.permute.xlu0 %1648
        %1650 = vrot.lane.b32.xlu0 %v788, 61
        %v1651 = vpop.permute.xlu0 %1650
        %1652 = vrot.lane.b32.xlu0 %v789, 61
        %v1653 = vpop.permute.xlu0 %1652
        %1654 = vrot.lane.b32.xlu0 %v790, 61
        %v1655 = vpop.permute.xlu0 %1654
        %1656 = vrot.lane.b32.xlu0 %v785, 61
        %v1657 = vpop.permute.xlu0 %1656
        %1658 = vrot.lane.b32.xlu0 %v1294, 61
        %v1659 = vpop.permute.xlu0 %1658
        %1660 = vrot.lane.b32.xlu0 %v1295, 61
        %v1661 = vpop.permute.xlu0 %1660
        %1662 = vrot.lane.b32.xlu0 %v1296, 61
        %v1663 = vpop.permute.xlu0 %1662
        %1664 = vrot.lane.b32.xlu0 %v1297, 61
        %v1665 = vpop.permute.xlu0 %1664
        %1666 = vrot.lane.b32.xlu0 %v1293, 61
        %v1667 = vpop.permute.xlu0 %1666
        %1668 = vrot.lane.b32.xlu0 %v802, 61
        %v1669 = vpop.permute.xlu0 %1668
        %1670 = vrot.lane.b32.xlu0 %v803, 61
        %v1671 = vpop.permute.xlu0 %1670
        %1672 = vrot.lane.b32.xlu0 %v804, 61
        %v1673 = vpop.permute.xlu0 %1672
        %1674 = vrot.lane.b32.xlu0 %v805, 61
        %v1675 = vpop.permute.xlu0 %1674
        %1676 = vrot.lane.b32.xlu0 %v800, 61
        %v1677 = vpop.permute.xlu0 %1676
        %1678 = vrot.lane.b32.xlu0 %v1308, 61
        %v1679 = vpop.permute.xlu0 %1678
        %1680 = vrot.lane.b32.xlu0 %v1309, 61
        %v1681 = vpop.permute.xlu0 %1680
        %1682 = vrot.lane.b32.xlu0 %v1310, 61
        %v1683 = vpop.permute.xlu0 %1682
        %1684 = vrot.lane.b32.xlu0 %v1311, 61
        %v1685 = vpop.permute.xlu0 %1684
        %1686 = vrot.lane.b32.xlu0 %v1307, 61
        %v1687 = vpop.permute.xlu0 %1686
        %1688 = vrot.lane.b32.xlu0 %v1333, 61
        %v1689 = vpop.permute.xlu0 %1688
        %1690 = vrot.lane.b32.xlu0 %v1334, 61
        %v1691 = vpop.permute.xlu0 %1690
        %1692 = vrot.lane.b32.xlu0 %v1335, 61
        %v1693 = vpop.permute.xlu0 %1692
        %1694 = vrot.lane.b32.xlu0 %v1336, 61
        %v1695 = vpop.permute.xlu0 %1694
        %1696 = vrot.lane.b32.xlu0 %v1321, 61
        %v1697 = vpop.permute.xlu0 %1696
        %1698 = vrot.lane.b32.xlu0 %v1337, 61
        %v1699 = vpop.permute.xlu0 %1698
        %1700 = vrot.lane.b32.xlu0 %v1338, 61
        %v1701 = vpop.permute.xlu0 %1700
        %1702 = vrot.lane.b32.xlu0 %v1339, 61
        %v1703 = vpop.permute.xlu0 %1702
        %1704 = vrot.lane.b32.xlu0 %v1340, 61
        %v1705 = vpop.permute.xlu0 %1704
        %1706 = vrot.lane.b32.xlu0 %v1331, 61
        %v1707 = vpop.permute.xlu0 %1706
        %vm1708 = vcmask 498688
        %v1709 = vsel %vm1708, %v1529, %v1531
        %v1710 = vsel %vm1708, %v1531, %v1533
        %v1711 = vsel %vm1708, %v1533, %v1535
        %v1712 = vsel %vm1708, %v1535, %v1537
        %v1713 = vsel %vm1708, %v1539, %v1541
        %v1714 = vsel %vm1708, %v1541, %v1543
        %v1715 = vsel %vm1708, %v1543, %v1545
        %v1716 = vsel %vm1708, %v1545, %v1547
        %v1717 = vsel %vm1708, %v1549, %v1551
        %v1718 = vsel %vm1708, %v1551, %v1553
        %v1719 = vsel %vm1708, %v1553, %v1555
        %v1720 = vsel %vm1708, %v1555, %v1557
        %v1721 = vsel %vm1708, %v1559, %v1561
        %v1722 = vsel %vm1708, %v1561, %v1563
        %v1723 = vsel %vm1708, %v1563, %v1565
        %v1724 = vsel %vm1708, %v1565, %v1567
        %v1725 = vsel %vm1708, %v1569, %v1571
        %v1726 = vsel %vm1708, %v1571, %v1573
        %v1727 = vsel %vm1708, %v1573, %v1575
        %v1728 = vsel %vm1708, %v1575, %v1577
        %v1729 = vsel %vm1708, %v1579, %v1581
        %v1730 = vsel %vm1708, %v1581, %v1583
        %v1731 = vsel %vm1708, %v1583, %v1585
        %v1732 = vsel %vm1708, %v1585, %v1587
        %v1733 = vsel %vm1708, %v1589, %v1591
        %v1734 = vsel %vm1708, %v1591, %v1593
        %v1735 = vsel %vm1708, %v1593, %v1595
        %v1736 = vsel %vm1708, %v1595, %v1597
        %v1737 = vsel %vm1708, %v1599, %v1601
        %v1738 = vsel %vm1708, %v1601, %v1603
        %v1739 = vsel %vm1708, %v1603, %v1605
        %v1740 = vsel %vm1708, %v1605, %v1607
        %v1741 = vsel %vm1708, %v1609, %v1611
        %v1742 = vsel %vm1708, %v1611, %v1613
        %v1743 = vsel %vm1708, %v1613, %v1615
        %v1744 = vsel %vm1708, %v1615, %v1617
        %v1745 = vsel %vm1708, %v1619, %v1621
        %v1746 = vsel %vm1708, %v1621, %v1623
        %v1747 = vsel %vm1708, %v1623, %v1625
        %v1748 = vsel %vm1708, %v1625, %v1627
        %v1749 = vsel %vm1708, %v1629, %v1631
        %v1750 = vsel %vm1708, %v1631, %v1633
        %v1751 = vsel %vm1708, %v1633, %v1635
        %v1752 = vsel %vm1708, %v1635, %v1637
        %v1753 = vsel %vm1708, %v1639, %v1641
        %v1754 = vsel %vm1708, %v1641, %v1643
        %v1755 = vsel %vm1708, %v1643, %v1645
        %v1756 = vsel %vm1708, %v1645, %v1647
        %v1757 = vsel %vm1708, %v1649, %v1651
        %v1758 = vsel %vm1708, %v1651, %v1653
        %v1759 = vsel %vm1708, %v1653, %v1655
        %v1760 = vsel %vm1708, %v1655, %v1657
        %v1761 = vsel %vm1708, %v1659, %v1661
        %v1762 = vsel %vm1708, %v1661, %v1663
        %v1763 = vsel %vm1708, %v1663, %v1665
        %v1764 = vsel %vm1708, %v1665, %v1667
        %v1765 = vsel %vm1708, %v1669, %v1671
        %v1766 = vsel %vm1708, %v1671, %v1673
        %v1767 = vsel %vm1708, %v1673, %v1675
        %v1768 = vsel %vm1708, %v1675, %v1677
        %v1769 = vsel %vm1708, %v1679, %v1681
        %v1770 = vsel %vm1708, %v1681, %v1683
        %v1771 = vsel %vm1708, %v1683, %v1685
        %v1772 = vsel %vm1708, %v1685, %v1687
        %v1773 = vsel %vm1708, %v1689, %v1691
        %v1774 = vsel %vm1708, %v1691, %v1693
        %v1775 = vsel %vm1708, %v1693, %v1695
        %v1776 = vsel %vm1708, %v1695, %v1697
        %v1777 = vsel %vm1708, %v1699, %v1701
        %v1778 = vsel %vm1708, %v1701, %v1703
        %v1779 = vsel %vm1708, %v1703, %v1705
        %v1780 = vsel %vm1708, %v1705, %v1707
        %1782 = vset.pattern.permute.xlu0 0
        %1783 = vperm.xlu0 %1782, %v1181
        %v1784 = vpop.permute.xlu0 %1783
        %1786 = vrot.lane.b32.xlu0 %v742, 105
        %v1787 = vpop.permute.xlu0 %1786
        %1788 = vrot.lane.b32.xlu0 %v743, 105
        %v1789 = vpop.permute.xlu0 %1788
        %1790 = vrot.lane.b32.xlu0 %v744, 105
        %v1791 = vpop.permute.xlu0 %1790
        %1792 = vrot.lane.b32.xlu0 %v745, 105
        %v1793 = vpop.permute.xlu0 %1792
        %1794 = vrot.lane.b32.xlu0 %v740, 105
        %v1795 = vpop.permute.xlu0 %1794
        %1796 = vrot.lane.b32.xlu0 %v1194, 105
        %v1797 = vpop.permute.xlu0 %1796
        %1798 = vrot.lane.b32.xlu0 %v1195, 105
        %v1799 = vpop.permute.xlu0 %1798
        %1800 = vrot.lane.b32.xlu0 %v1196, 105
        %v1801 = vpop.permute.xlu0 %1800
        %1802 = vrot.lane.b32.xlu0 %v1197, 105
        %v1803 = vpop.permute.xlu0 %1802
        %1804 = vrot.lane.b32.xlu0 %v1193, 105
        %v1805 = vpop.permute.xlu0 %1804
        %1806 = vrot.lane.b32.xlu0 %v757, 105
        %v1807 = vpop.permute.xlu0 %1806
        %1808 = vrot.lane.b32.xlu0 %v758, 105
        %v1809 = vpop.permute.xlu0 %1808
        %1810 = vrot.lane.b32.xlu0 %v759, 105
        %v1811 = vpop.permute.xlu0 %1810
        %1812 = vrot.lane.b32.xlu0 %v760, 105
        %v1813 = vpop.permute.xlu0 %1812
        %1814 = vrot.lane.b32.xlu0 %v755, 105
        %v1815 = vpop.permute.xlu0 %1814
        %1816 = vrot.lane.b32.xlu0 %v1208, 105
        %v1817 = vpop.permute.xlu0 %1816
        %1818 = vrot.lane.b32.xlu0 %v1209, 105
        %v1819 = vpop.permute.xlu0 %1818
        %1820 = vrot.lane.b32.xlu0 %v1210, 105
        %v1821 = vpop.permute.xlu0 %1820
        %1822 = vrot.lane.b32.xlu0 %v1211, 105
        %v1823 = vpop.permute.xlu0 %1822
        %1824 = vrot.lane.b32.xlu0 %v1207, 105
        %v1825 = vpop.permute.xlu0 %1824
        %1826 = vrot.lane.b32.xlu0 %v1233, 105
        %v1827 = vpop.permute.xlu0 %1826
        %1828 = vrot.lane.b32.xlu0 %v1234, 105
        %v1829 = vpop.permute.xlu0 %1828
        %1830 = vrot.lane.b32.xlu0 %v1235, 105
        %v1831 = vpop.permute.xlu0 %1830
        %1832 = vrot.lane.b32.xlu0 %v1236, 105
        %v1833 = vpop.permute.xlu0 %1832
        %1834 = vrot.lane.b32.xlu0 %v1221, 105
        %v1835 = vpop.permute.xlu0 %1834
        %1836 = vrot.lane.b32.xlu0 %v1237, 105
        %v1837 = vpop.permute.xlu0 %1836
        %1838 = vrot.lane.b32.xlu0 %v1238, 105
        %v1839 = vpop.permute.xlu0 %1838
        %1840 = vrot.lane.b32.xlu0 %v1239, 105
        %v1841 = vpop.permute.xlu0 %1840
        %1842 = vrot.lane.b32.xlu0 %v1240, 105
        %v1843 = vpop.permute.xlu0 %1842
        %1844 = vrot.lane.b32.xlu0 %v1231, 105
        %v1845 = vpop.permute.xlu0 %1844
        %1846 = vrot.lane.b32.xlu0 %v1262, 105
        %v1847 = vpop.permute.xlu0 %1846
        %1848 = vrot.lane.b32.xlu0 %v1263, 105
        %v1849 = vpop.permute.xlu0 %1848
        %1850 = vrot.lane.b32.xlu0 %v1264, 105
        %v1851 = vpop.permute.xlu0 %1850
        %1852 = vrot.lane.b32.xlu0 %v1265, 105
        %v1853 = vpop.permute.xlu0 %1852
        %1854 = vrot.lane.b32.xlu0 %v1250, 105
        %v1855 = vpop.permute.xlu0 %1854
        %1856 = vrot.lane.b32.xlu0 %v1266, 105
        %v1857 = vpop.permute.xlu0 %1856
        %1858 = vrot.lane.b32.xlu0 %v1267, 105
        %v1859 = vpop.permute.xlu0 %1858
        %1860 = vrot.lane.b32.xlu0 %v1268, 105
        %v1861 = vpop.permute.xlu0 %1860
        %1862 = vrot.lane.b32.xlu0 %v1269, 105
        %v1863 = vpop.permute.xlu0 %1862
        %1864 = vrot.lane.b32.xlu0 %v1260, 105
        %v1865 = vpop.permute.xlu0 %1864
        %1866 = vrot.lane.b32.xlu0 %v772, 105
        %v1867 = vpop.permute.xlu0 %1866
        %1868 = vrot.lane.b32.xlu0 %v773, 105
        %v1869 = vpop.permute.xlu0 %1868
        %1870 = vrot.lane.b32.xlu0 %v774, 105
        %v1871 = vpop.permute.xlu0 %1870
        %1872 = vrot.lane.b32.xlu0 %v775, 105
        %v1873 = vpop.permute.xlu0 %1872
        %1874 = vrot.lane.b32.xlu0 %v770, 105
        %v1875 = vpop.permute.xlu0 %1874
        %1876 = vrot.lane.b32.xlu0 %v1280, 105
        %v1877 = vpop.permute.xlu0 %1876
        %1878 = vrot.lane.b32.xlu0 %v1281, 105
        %v1879 = vpop.permute.xlu0 %1878
        %1880 = vrot.lane.b32.xlu0 %v1282, 105
        %v1881 = vpop.permute.xlu0 %1880
        %1882 = vrot.lane.b32.xlu0 %v1283, 105
        %v1883 = vpop.permute.xlu0 %1882
        %1884 = vrot.lane.b32.xlu0 %v1279, 105
        %v1885 = vpop.permute.xlu0 %1884
        %1886 = vrot.lane.b32.xlu0 %v787, 105
        %v1887 = vpop.permute.xlu0 %1886
        %1888 = vrot.lane.b32.xlu0 %v788, 105
        %v1889 = vpop.permute.xlu0 %1888
        %1890 = vrot.lane.b32.xlu0 %v789, 105
        %v1891 = vpop.permute.xlu0 %1890
        %1892 = vrot.lane.b32.xlu0 %v790, 105
        %v1893 = vpop.permute.xlu0 %1892
        %1894 = vrot.lane.b32.xlu0 %v785, 105
        %v1895 = vpop.permute.xlu0 %1894
        %1896 = vrot.lane.b32.xlu0 %v1294, 105
        %v1897 = vpop.permute.xlu0 %1896
        %1898 = vrot.lane.b32.xlu0 %v1295, 105
        %v1899 = vpop.permute.xlu0 %1898
        %1900 = vrot.lane.b32.xlu0 %v1296, 105
        %v1901 = vpop.permute.xlu0 %1900
        %1902 = vrot.lane.b32.xlu0 %v1297, 105
        %v1903 = vpop.permute.xlu0 %1902
        %1904 = vrot.lane.b32.xlu0 %v1293, 105
        %v1905 = vpop.permute.xlu0 %1904
        %1906 = vrot.lane.b32.xlu0 %v802, 105
        %v1907 = vpop.permute.xlu0 %1906
        %1908 = vrot.lane.b32.xlu0 %v803, 105
        %v1909 = vpop.permute.xlu0 %1908
        %1910 = vrot.lane.b32.xlu0 %v804, 105
        %v1911 = vpop.permute.xlu0 %1910
        %1912 = vrot.lane.b32.xlu0 %v805, 105
        %v1913 = vpop.permute.xlu0 %1912
        %1914 = vrot.lane.b32.xlu0 %v800, 105
        %v1915 = vpop.permute.xlu0 %1914
        %1916 = vrot.lane.b32.xlu0 %v1308, 105
        %v1917 = vpop.permute.xlu0 %1916
        %1918 = vrot.lane.b32.xlu0 %v1309, 105
        %v1919 = vpop.permute.xlu0 %1918
        %1920 = vrot.lane.b32.xlu0 %v1310, 105
        %v1921 = vpop.permute.xlu0 %1920
        %1922 = vrot.lane.b32.xlu0 %v1311, 105
        %v1923 = vpop.permute.xlu0 %1922
        %1924 = vrot.lane.b32.xlu0 %v1307, 105
        %v1925 = vpop.permute.xlu0 %1924
        %1926 = vrot.lane.b32.xlu0 %v1333, 105
        %v1927 = vpop.permute.xlu0 %1926
        %1928 = vrot.lane.b32.xlu0 %v1334, 105
        %v1929 = vpop.permute.xlu0 %1928
        %1930 = vrot.lane.b32.xlu0 %v1335, 105
        %v1931 = vpop.permute.xlu0 %1930
        %1932 = vrot.lane.b32.xlu0 %v1336, 105
        %v1933 = vpop.permute.xlu0 %1932
        %1934 = vrot.lane.b32.xlu0 %v1321, 105
        %v1935 = vpop.permute.xlu0 %1934
        %1936 = vrot.lane.b32.xlu0 %v1337, 105
        %v1937 = vpop.permute.xlu0 %1936
        %1938 = vrot.lane.b32.xlu0 %v1338, 105
        %v1939 = vpop.permute.xlu0 %1938
        %1940 = vrot.lane.b32.xlu0 %v1339, 105
        %v1941 = vpop.permute.xlu0 %1940
        %1942 = vrot.lane.b32.xlu0 %v1340, 105
        %v1943 = vpop.permute.xlu0 %1942
        %1944 = vrot.lane.b32.xlu0 %v1331, 105
        %v1945 = vpop.permute.xlu0 %1944
        %1946 = vrot.lane.b32.xlu0 %v1362, 105
        %v1947 = vpop.permute.xlu0 %1946
        %1948 = vrot.lane.b32.xlu0 %v1363, 105
        %v1949 = vpop.permute.xlu0 %1948
        %1950 = vrot.lane.b32.xlu0 %v1364, 105
        %v1951 = vpop.permute.xlu0 %1950
        %1952 = vrot.lane.b32.xlu0 %v1365, 105
        %v1953 = vpop.permute.xlu0 %1952
        %1954 = vrot.lane.b32.xlu0 %v1350, 105
        %v1955 = vpop.permute.xlu0 %1954
        %1956 = vrot.lane.b32.xlu0 %v1366, 105
        %v1957 = vpop.permute.xlu0 %1956
        %1958 = vrot.lane.b32.xlu0 %v1367, 105
        %v1959 = vpop.permute.xlu0 %1958
        %1960 = vrot.lane.b32.xlu0 %v1368, 105
        %v1961 = vpop.permute.xlu0 %1960
        %1962 = vrot.lane.b32.xlu0 %v1369, 105
        %v1963 = vpop.permute.xlu0 %1962
        %1964 = vrot.lane.b32.xlu0 %v1360, 105
        %v1965 = vpop.permute.xlu0 %1964
        %1966 = vrot.lane.b32.xlu0 %v817, 105
        %v1967 = vpop.permute.xlu0 %1966
        %1968 = vrot.lane.b32.xlu0 %v818, 105
        %v1969 = vpop.permute.xlu0 %1968
        %1970 = vrot.lane.b32.xlu0 %v819, 105
        %v1971 = vpop.permute.xlu0 %1970
        %1972 = vrot.lane.b32.xlu0 %v820, 105
        %v1973 = vpop.permute.xlu0 %1972
        %1974 = vrot.lane.b32.xlu0 %v815, 105
        %v1975 = vpop.permute.xlu0 %1974
        %1976 = vrot.lane.b32.xlu0 %v1380, 105
        %v1977 = vpop.permute.xlu0 %1976
        %1978 = vrot.lane.b32.xlu0 %v1381, 105
        %v1979 = vpop.permute.xlu0 %1978
        %1980 = vrot.lane.b32.xlu0 %v1382, 105
        %v1981 = vpop.permute.xlu0 %1980
        %1982 = vrot.lane.b32.xlu0 %v1383, 105
        %v1983 = vpop.permute.xlu0 %1982
        %1984 = vrot.lane.b32.xlu0 %v1379, 105
        %v1985 = vpop.permute.xlu0 %1984
        %1986 = vrot.lane.b32.xlu0 %v832, 105
        %v1987 = vpop.permute.xlu0 %1986
        %1988 = vrot.lane.b32.xlu0 %v833, 105
        %v1989 = vpop.permute.xlu0 %1988
        %1990 = vrot.lane.b32.xlu0 %v834, 105
        %v1991 = vpop.permute.xlu0 %1990
        %1992 = vrot.lane.b32.xlu0 %v835, 105
        %v1993 = vpop.permute.xlu0 %1992
        %1994 = vrot.lane.b32.xlu0 %v830, 105
        %v1995 = vpop.permute.xlu0 %1994
        %1996 = vrot.lane.b32.xlu0 %v1394, 105
        %v1997 = vpop.permute.xlu0 %1996
        %1998 = vrot.lane.b32.xlu0 %v1395, 105
        %v1999 = vpop.permute.xlu0 %1998
        %2000 = vrot.lane.b32.xlu0 %v1396, 105
        %v2001 = vpop.permute.xlu0 %2000
        %2002 = vrot.lane.b32.xlu0 %v1397, 105
        %v2003 = vpop.permute.xlu0 %2002
        %2004 = vrot.lane.b32.xlu0 %v1393, 105
        %v2005 = vpop.permute.xlu0 %2004
        %2006 = vrot.lane.b32.xlu0 %v847, 105
        %v2007 = vpop.permute.xlu0 %2006
        %2008 = vrot.lane.b32.xlu0 %v848, 105
        %v2009 = vpop.permute.xlu0 %2008
        %2010 = vrot.lane.b32.xlu0 %v849, 105
        %v2011 = vpop.permute.xlu0 %2010
        %2012 = vrot.lane.b32.xlu0 %v850, 105
        %v2013 = vpop.permute.xlu0 %2012
        %2014 = vrot.lane.b32.xlu0 %v845, 105
        %v2015 = vpop.permute.xlu0 %2014
        %2016 = vrot.lane.b32.xlu0 %v1408, 105
        %v2017 = vpop.permute.xlu0 %2016
        %2018 = vrot.lane.b32.xlu0 %v1409, 105
        %v2019 = vpop.permute.xlu0 %2018
        %2020 = vrot.lane.b32.xlu0 %v1410, 105
        %v2021 = vpop.permute.xlu0 %2020
        %2022 = vrot.lane.b32.xlu0 %v1411, 105
        %v2023 = vpop.permute.xlu0 %2022
        %2024 = vrot.lane.b32.xlu0 %v1407, 105
        %v2025 = vpop.permute.xlu0 %2024
        %2026 = vrot.lane.b32.xlu0 %v1433, 105
        %v2027 = vpop.permute.xlu0 %2026
        %2028 = vrot.lane.b32.xlu0 %v1434, 105
        %v2029 = vpop.permute.xlu0 %2028
        %2030 = vrot.lane.b32.xlu0 %v1435, 105
        %v2031 = vpop.permute.xlu0 %2030
        %2032 = vrot.lane.b32.xlu0 %v1436, 105
        %v2033 = vpop.permute.xlu0 %2032
        %2034 = vrot.lane.b32.xlu0 %v1421, 105
        %v2035 = vpop.permute.xlu0 %2034
        %2036 = vrot.lane.b32.xlu0 %v1437, 105
        %v2037 = vpop.permute.xlu0 %2036
        %2038 = vrot.lane.b32.xlu0 %v1438, 105
        %v2039 = vpop.permute.xlu0 %2038
        %2040 = vrot.lane.b32.xlu0 %v1439, 105
        %v2041 = vpop.permute.xlu0 %2040
        %2042 = vrot.lane.b32.xlu0 %v1440, 105
        %v2043 = vpop.permute.xlu0 %2042
        %2044 = vrot.lane.b32.xlu0 %v1431, 105
        %v2045 = vpop.permute.xlu0 %2044
        %2046 = vrot.lane.b32.xlu0 %v1462, 105
        %v2047 = vpop.permute.xlu0 %2046
        %2048 = vrot.lane.b32.xlu0 %v1463, 105
        %v2049 = vpop.permute.xlu0 %2048
        %2050 = vrot.lane.b32.xlu0 %v1464, 105
        %v2051 = vpop.permute.xlu0 %2050
        %2052 = vrot.lane.b32.xlu0 %v1465, 105
        %v2053 = vpop.permute.xlu0 %2052
        %2054 = vrot.lane.b32.xlu0 %v1450, 105
        %v2055 = vpop.permute.xlu0 %2054
        %2056 = vrot.lane.b32.xlu0 %v1466, 105
        %v2057 = vpop.permute.xlu0 %2056
        %2058 = vrot.lane.b32.xlu0 %v1467, 105
        %v2059 = vpop.permute.xlu0 %2058
        %2060 = vrot.lane.b32.xlu0 %v1468, 105
        %v2061 = vpop.permute.xlu0 %2060
        %2062 = vrot.lane.b32.xlu0 %v1469, 105
        %v2063 = vpop.permute.xlu0 %2062
        %2064 = vrot.lane.b32.xlu0 %v1460, 105
        %v2065 = vpop.permute.xlu0 %2064
        %2066 = vrot.lane.b32.xlu0 %v1491, 105
        %v2067 = vpop.permute.xlu0 %2066
        %2068 = vrot.lane.b32.xlu0 %v1492, 105
        %v2069 = vpop.permute.xlu0 %2068
        %2070 = vrot.lane.b32.xlu0 %v1493, 105
        %v2071 = vpop.permute.xlu0 %2070
        %2072 = vrot.lane.b32.xlu0 %v1494, 105
        %v2073 = vpop.permute.xlu0 %2072
        %2074 = vrot.lane.b32.xlu0 %v1479, 105
        %v2075 = vpop.permute.xlu0 %2074
        %2076 = vrot.lane.b32.xlu0 %v1495, 105
        %v2077 = vpop.permute.xlu0 %2076
        %2078 = vrot.lane.b32.xlu0 %v1496, 105
        %v2079 = vpop.permute.xlu0 %2078
        %2080 = vrot.lane.b32.xlu0 %v1497, 105
        %v2081 = vpop.permute.xlu0 %2080
        %2082 = vrot.lane.b32.xlu0 %v1498, 105
        %v2083 = vpop.permute.xlu0 %2082
        %2084 = vrot.lane.b32.xlu0 %v1489, 105
        %v2085 = vpop.permute.xlu0 %2084
        %2086 = vrot.lane.b32.xlu0 %v1709, 105
        %v2087 = vpop.permute.xlu0 %2086
        %2088 = vrot.lane.b32.xlu0 %v1710, 105
        %v2089 = vpop.permute.xlu0 %2088
        %2090 = vrot.lane.b32.xlu0 %v1711, 105
        %v2091 = vpop.permute.xlu0 %2090
        %2092 = vrot.lane.b32.xlu0 %v1712, 105
        %v2093 = vpop.permute.xlu0 %2092
        %2094 = vrot.lane.b32.xlu0 %v1537, 105
        %v2095 = vpop.permute.xlu0 %2094
        %2096 = vrot.lane.b32.xlu0 %v1713, 105
        %v2097 = vpop.permute.xlu0 %2096
        %2098 = vrot.lane.b32.xlu0 %v1714, 105
        %v2099 = vpop.permute.xlu0 %2098
        %2100 = vrot.lane.b32.xlu0 %v1715, 105
        %v2101 = vpop.permute.xlu0 %2100
        %2102 = vrot.lane.b32.xlu0 %v1716, 105
        %v2103 = vpop.permute.xlu0 %2102
        %2104 = vrot.lane.b32.xlu0 %v1547, 105
        %v2105 = vpop.permute.xlu0 %2104
        %2106 = vrot.lane.b32.xlu0 %v1717, 105
        %v2107 = vpop.permute.xlu0 %2106
        %2108 = vrot.lane.b32.xlu0 %v1718, 105
        %v2109 = vpop.permute.xlu0 %2108
        %2110 = vrot.lane.b32.xlu0 %v1719, 105
        %v2111 = vpop.permute.xlu0 %2110
        %2112 = vrot.lane.b32.xlu0 %v1720, 105
        %v2113 = vpop.permute.xlu0 %2112
        %2114 = vrot.lane.b32.xlu0 %v1557, 105
        %v2115 = vpop.permute.xlu0 %2114
        %2116 = vrot.lane.b32.xlu0 %v1721, 105
        %v2117 = vpop.permute.xlu0 %2116
        %2118 = vrot.lane.b32.xlu0 %v1722, 105
        %v2119 = vpop.permute.xlu0 %2118
        %2120 = vrot.lane.b32.xlu0 %v1723, 105
        %v2121 = vpop.permute.xlu0 %2120
        %2122 = vrot.lane.b32.xlu0 %v1724, 105
        %v2123 = vpop.permute.xlu0 %2122
        %2124 = vrot.lane.b32.xlu0 %v1567, 105
        %v2125 = vpop.permute.xlu0 %2124
        %2126 = vrot.lane.b32.xlu0 %v1725, 105
        %v2127 = vpop.permute.xlu0 %2126
        %2128 = vrot.lane.b32.xlu0 %v1726, 105
        %v2129 = vpop.permute.xlu0 %2128
        %2130 = vrot.lane.b32.xlu0 %v1727, 105
        %v2131 = vpop.permute.xlu0 %2130
        %2132 = vrot.lane.b32.xlu0 %v1728, 105
        %v2133 = vpop.permute.xlu0 %2132
        %2134 = vrot.lane.b32.xlu0 %v1577, 105
        %v2135 = vpop.permute.xlu0 %2134
        %2136 = vrot.lane.b32.xlu0 %v1729, 105
        %v2137 = vpop.permute.xlu0 %2136
        %2138 = vrot.lane.b32.xlu0 %v1730, 105
        %v2139 = vpop.permute.xlu0 %2138
        %2140 = vrot.lane.b32.xlu0 %v1731, 105
        %v2141 = vpop.permute.xlu0 %2140
        %2142 = vrot.lane.b32.xlu0 %v1732, 105
        %v2143 = vpop.permute.xlu0 %2142
        %2144 = vrot.lane.b32.xlu0 %v1587, 105
        %v2145 = vpop.permute.xlu0 %2144
        %2146 = vrot.lane.b32.xlu0 %v1733, 105
        %v2147 = vpop.permute.xlu0 %2146
        %2148 = vrot.lane.b32.xlu0 %v1734, 105
        %v2149 = vpop.permute.xlu0 %2148
        %2150 = vrot.lane.b32.xlu0 %v1735, 105
        %v2151 = vpop.permute.xlu0 %2150
        %2152 = vrot.lane.b32.xlu0 %v1736, 105
        %v2153 = vpop.permute.xlu0 %2152
        %2154 = vrot.lane.b32.xlu0 %v1597, 105
        %v2155 = vpop.permute.xlu0 %2154
        %2156 = vrot.lane.b32.xlu0 %v1737, 105
        %v2157 = vpop.permute.xlu0 %2156
        %2158 = vrot.lane.b32.xlu0 %v1738, 105
        %v2159 = vpop.permute.xlu0 %2158
        %2160 = vrot.lane.b32.xlu0 %v1739, 105
        %v2161 = vpop.permute.xlu0 %2160
        %2162 = vrot.lane.b32.xlu0 %v1740, 105
        %v2163 = vpop.permute.xlu0 %2162
        %2164 = vrot.lane.b32.xlu0 %v1607, 105
        %v2165 = vpop.permute.xlu0 %2164
        %2166 = vrot.lane.b32.xlu0 %v1741, 105
        %v2167 = vpop.permute.xlu0 %2166
        %2168 = vrot.lane.b32.xlu0 %v1742, 105
        %v2169 = vpop.permute.xlu0 %2168
        %2170 = vrot.lane.b32.xlu0 %v1743, 105
        %v2171 = vpop.permute.xlu0 %2170
        %2172 = vrot.lane.b32.xlu0 %v1744, 105
        %v2173 = vpop.permute.xlu0 %2172
        %2174 = vrot.lane.b32.xlu0 %v1617, 105
        %v2175 = vpop.permute.xlu0 %2174
        %2176 = vrot.lane.b32.xlu0 %v1745, 105
        %v2177 = vpop.permute.xlu0 %2176
        %2178 = vrot.lane.b32.xlu0 %v1746, 105
        %v2179 = vpop.permute.xlu0 %2178
        %2180 = vrot.lane.b32.xlu0 %v1747, 105
        %v2181 = vpop.permute.xlu0 %2180
        %2182 = vrot.lane.b32.xlu0 %v1748, 105
        %v2183 = vpop.permute.xlu0 %2182
        %2184 = vrot.lane.b32.xlu0 %v1627, 105
        %v2185 = vpop.permute.xlu0 %2184
        %2186 = vrot.lane.b32.xlu0 %v1749, 105
        %v2187 = vpop.permute.xlu0 %2186
        %2188 = vrot.lane.b32.xlu0 %v1750, 105
        %v2189 = vpop.permute.xlu0 %2188
        %2190 = vrot.lane.b32.xlu0 %v1751, 105
        %v2191 = vpop.permute.xlu0 %2190
        %2192 = vrot.lane.b32.xlu0 %v1752, 105
        %v2193 = vpop.permute.xlu0 %2192
        %2194 = vrot.lane.b32.xlu0 %v1637, 105
        %v2195 = vpop.permute.xlu0 %2194
        %2196 = vrot.lane.b32.xlu0 %v1753, 105
        %v2197 = vpop.permute.xlu0 %2196
        %2198 = vrot.lane.b32.xlu0 %v1754, 105
        %v2199 = vpop.permute.xlu0 %2198
        %2200 = vrot.lane.b32.xlu0 %v1755, 105
        %v2201 = vpop.permute.xlu0 %2200
        %2202 = vrot.lane.b32.xlu0 %v1756, 105
        %v2203 = vpop.permute.xlu0 %2202
        %2204 = vrot.lane.b32.xlu0 %v1647, 105
        %v2205 = vpop.permute.xlu0 %2204
        %2206 = vrot.lane.b32.xlu0 %v1757, 105
        %v2207 = vpop.permute.xlu0 %2206
        %2208 = vrot.lane.b32.xlu0 %v1758, 105
        %v2209 = vpop.permute.xlu0 %2208
        %2210 = vrot.lane.b32.xlu0 %v1759, 105
        %v2211 = vpop.permute.xlu0 %2210
        %2212 = vrot.lane.b32.xlu0 %v1760, 105
        %v2213 = vpop.permute.xlu0 %2212
        %2214 = vrot.lane.b32.xlu0 %v1657, 105
        %v2215 = vpop.permute.xlu0 %2214
        %2216 = vrot.lane.b32.xlu0 %v1761, 105
        %v2217 = vpop.permute.xlu0 %2216
        %2218 = vrot.lane.b32.xlu0 %v1762, 105
        %v2219 = vpop.permute.xlu0 %2218
        %2220 = vrot.lane.b32.xlu0 %v1763, 105
        %v2221 = vpop.permute.xlu0 %2220
        %2222 = vrot.lane.b32.xlu0 %v1764, 105
        %v2223 = vpop.permute.xlu0 %2222
        %2224 = vrot.lane.b32.xlu0 %v1667, 105
        %v2225 = vpop.permute.xlu0 %2224
        %2226 = vrot.lane.b32.xlu0 %v1765, 105
        %v2227 = vpop.permute.xlu0 %2226
        %2228 = vrot.lane.b32.xlu0 %v1766, 105
        %v2229 = vpop.permute.xlu0 %2228
        %2230 = vrot.lane.b32.xlu0 %v1767, 105
        %v2231 = vpop.permute.xlu0 %2230
        %2232 = vrot.lane.b32.xlu0 %v1768, 105
        %v2233 = vpop.permute.xlu0 %2232
        %2234 = vrot.lane.b32.xlu0 %v1677, 105
        %v2235 = vpop.permute.xlu0 %2234
        %2236 = vrot.lane.b32.xlu0 %v1769, 105
        %v2237 = vpop.permute.xlu0 %2236
        %2238 = vrot.lane.b32.xlu0 %v1770, 105
        %v2239 = vpop.permute.xlu0 %2238
        %2240 = vrot.lane.b32.xlu0 %v1771, 105
        %v2241 = vpop.permute.xlu0 %2240
        %2242 = vrot.lane.b32.xlu0 %v1772, 105
        %v2243 = vpop.permute.xlu0 %2242
        %2244 = vrot.lane.b32.xlu0 %v1687, 105
        %v2245 = vpop.permute.xlu0 %2244
        %2246 = vrot.lane.b32.xlu0 %v1773, 105
        %v2247 = vpop.permute.xlu0 %2246
        %2248 = vrot.lane.b32.xlu0 %v1774, 105
        %v2249 = vpop.permute.xlu0 %2248
        %2250 = vrot.lane.b32.xlu0 %v1775, 105
        %v2251 = vpop.permute.xlu0 %2250
        %2252 = vrot.lane.b32.xlu0 %v1776, 105
        %v2253 = vpop.permute.xlu0 %2252
        %2254 = vrot.lane.b32.xlu0 %v1697, 105
        %v2255 = vpop.permute.xlu0 %2254
        %2256 = vrot.lane.b32.xlu0 %v1777, 105
        %v2257 = vpop.permute.xlu0 %2256
        %2258 = vrot.lane.b32.xlu0 %v1778, 105
        %v2259 = vpop.permute.xlu0 %2258
        %2260 = vrot.lane.b32.xlu0 %v1779, 105
        %v2261 = vpop.permute.xlu0 %2260
        %2262 = vrot.lane.b32.xlu0 %v1780, 105
        %v2263 = vpop.permute.xlu0 %2262
        %2264 = vrot.lane.b32.xlu0 %v1707, 105
        %v2265 = vpop.permute.xlu0 %2264
        %v2266 = vsel %vm786, %v1787, %v1789
        %v2267 = vsel %vm786, %v1789, %v1791
        %v2268 = vsel %vm786, %v1791, %v1793
        %v2269 = vsel %vm786, %v1793, %v1795
        %v2270 = vsel %vm786, %v1797, %v1799
        %v2271 = vsel %vm786, %v1799, %v1801
        %v2272 = vsel %vm786, %v1801, %v1803
        %v2273 = vsel %vm786, %v1803, %v1805
        %v2274 = vsel %vm786, %v1807, %v1809
        %v2275 = vsel %vm786, %v1809, %v1811
        %v2276 = vsel %vm786, %v1811, %v1813
        %v2277 = vsel %vm786, %v1813, %v1815
        %v2278 = vsel %vm786, %v1817, %v1819
        %v2279 = vsel %vm786, %v1819, %v1821
        %v2280 = vsel %vm786, %v1821, %v1823
        %v2281 = vsel %vm786, %v1823, %v1825
        %v2282 = vsel %vm786, %v1827, %v1829
        %v2283 = vsel %vm786, %v1829, %v1831
        %v2284 = vsel %vm786, %v1831, %v1833
        %v2285 = vsel %vm786, %v1833, %v1835
        %v2286 = vsel %vm786, %v1837, %v1839
        %v2287 = vsel %vm786, %v1839, %v1841
        %v2288 = vsel %vm786, %v1841, %v1843
        %v2289 = vsel %vm786, %v1843, %v1845
        %v2290 = vsel %vm786, %v1847, %v1849
        %v2291 = vsel %vm786, %v1849, %v1851
        %v2292 = vsel %vm786, %v1851, %v1853
        %v2293 = vsel %vm786, %v1853, %v1855
        %v2294 = vsel %vm786, %v1857, %v1859
        %v2295 = vsel %vm786, %v1859, %v1861
        %v2296 = vsel %vm786, %v1861, %v1863
        %v2297 = vsel %vm786, %v1863, %v1865
        %v2298 = vsel %vm786, %v1867, %v1869
        %v2299 = vsel %vm786, %v1869, %v1871
        %v2300 = vsel %vm786, %v1871, %v1873
        %v2301 = vsel %vm786, %v1873, %v1875
        %v2302 = vsel %vm786, %v1877, %v1879
        %v2303 = vsel %vm786, %v1879, %v1881
        %v2304 = vsel %vm786, %v1881, %v1883
        %v2305 = vsel %vm786, %v1883, %v1885
        %v2306 = vsel %vm786, %v1887, %v1889
        %v2307 = vsel %vm786, %v1889, %v1891
        %v2308 = vsel %vm786, %v1891, %v1893
        %v2309 = vsel %vm786, %v1893, %v1895
        %v2310 = vsel %vm786, %v1897, %v1899
        %v2311 = vsel %vm786, %v1899, %v1901
        %v2312 = vsel %vm786, %v1901, %v1903
        %v2313 = vsel %vm786, %v1903, %v1905
        %v2314 = vsel %vm786, %v1907, %v1909
        %v2315 = vsel %vm786, %v1909, %v1911
        %v2316 = vsel %vm786, %v1911, %v1913
        %v2317 = vsel %vm786, %v1913, %v1915
        %v2318 = vsel %vm786, %v1917, %v1919
        %v2319 = vsel %vm786, %v1919, %v1921
        %v2320 = vsel %vm786, %v1921, %v1923
        %v2321 = vsel %vm786, %v1923, %v1925
        %v2322 = vsel %vm786, %v1927, %v1929
        %v2323 = vsel %vm786, %v1929, %v1931
        %v2324 = vsel %vm786, %v1931, %v1933
        %v2325 = vsel %vm786, %v1933, %v1935
        %v2326 = vsel %vm786, %v1937, %v1939
        %v2327 = vsel %vm786, %v1939, %v1941
        %v2328 = vsel %vm786, %v1941, %v1943
        %v2329 = vsel %vm786, %v1943, %v1945
        %v2330 = vsel %vm786, %v1947, %v1949
        %v2331 = vsel %vm786, %v1949, %v1951
        %v2332 = vsel %vm786, %v1951, %v1953
        %v2333 = vsel %vm786, %v1953, %v1955
        %v2334 = vsel %vm786, %v1957, %v1959
        %v2335 = vsel %vm786, %v1959, %v1961
        %v2336 = vsel %vm786, %v1961, %v1963
        %v2337 = vsel %vm786, %v1963, %v1965
        %v2338 = vsel %vm786, %v1967, %v1969
        %v2339 = vsel %vm786, %v1969, %v1971
        %v2340 = vsel %vm786, %v1971, %v1973
        %v2341 = vsel %vm786, %v1973, %v1975
        %v2342 = vsel %vm786, %v1977, %v1979
        %v2343 = vsel %vm786, %v1979, %v1981
        %v2344 = vsel %vm786, %v1981, %v1983
        %v2345 = vsel %vm786, %v1983, %v1985
        %v2346 = vsel %vm786, %v1987, %v1989
        %v2347 = vsel %vm786, %v1989, %v1991
        %v2348 = vsel %vm786, %v1991, %v1993
        %v2349 = vsel %vm786, %v1993, %v1995
        %v2350 = vsel %vm786, %v1997, %v1999
        %v2351 = vsel %vm786, %v1999, %v2001
        %v2352 = vsel %vm786, %v2001, %v2003
        %v2353 = vsel %vm786, %v2003, %v2005
        %v2354 = vsel %vm786, %v2007, %v2009
        %v2355 = vsel %vm786, %v2009, %v2011
        %v2356 = vsel %vm786, %v2011, %v2013
        %v2357 = vsel %vm786, %v2013, %v2015
        %v2358 = vsel %vm786, %v2017, %v2019
        %v2359 = vsel %vm786, %v2019, %v2021
        %v2360 = vsel %vm786, %v2021, %v2023
        %v2361 = vsel %vm786, %v2023, %v2025
        %v2362 = vsel %vm786, %v2027, %v2029
        %v2363 = vsel %vm786, %v2029, %v2031
        %v2364 = vsel %vm786, %v2031, %v2033
        %v2365 = vsel %vm786, %v2033, %v2035
        %v2366 = vsel %vm786, %v2037, %v2039
        %v2367 = vsel %vm786, %v2039, %v2041
        %v2368 = vsel %vm786, %v2041, %v2043
        %v2369 = vsel %vm786, %v2043, %v2045
        %v2370 = vsel %vm786, %v2047, %v2049
        %v2371 = vsel %vm786, %v2049, %v2051
        %v2372 = vsel %vm786, %v2051, %v2053
        %v2373 = vsel %vm786, %v2053, %v2055
        %v2374 = vsel %vm786, %v2057, %v2059
        %v2375 = vsel %vm786, %v2059, %v2061
        %v2376 = vsel %vm786, %v2061, %v2063
        %v2377 = vsel %vm786, %v2063, %v2065
        %v2378 = vsel %vm786, %v2067, %v2069
        %v2379 = vsel %vm786, %v2069, %v2071
        %v2380 = vsel %vm786, %v2071, %v2073
        %v2381 = vsel %vm786, %v2073, %v2075
        %v2382 = vsel %vm786, %v2077, %v2079
        %v2383 = vsel %vm786, %v2079, %v2081
        %v2384 = vsel %vm786, %v2081, %v2083
        %v2385 = vsel %vm786, %v2083, %v2085
        %v2386 = vsel %vm786, %v2087, %v2089
        %v2387 = vsel %vm786, %v2089, %v2091
        %v2388 = vsel %vm786, %v2091, %v2093
        %v2389 = vsel %vm786, %v2093, %v2095
        %v2390 = vsel %vm786, %v2097, %v2099
        %v2391 = vsel %vm786, %v2099, %v2101
        %v2392 = vsel %vm786, %v2101, %v2103
        %v2393 = vsel %vm786, %v2103, %v2105
        %v2394 = vsel %vm786, %v2107, %v2109
        %v2395 = vsel %vm786, %v2109, %v2111
        %v2396 = vsel %vm786, %v2111, %v2113
        %v2397 = vsel %vm786, %v2113, %v2115
        %v2398 = vsel %vm786, %v2117, %v2119
        %v2399 = vsel %vm786, %v2119, %v2121
        %v2400 = vsel %vm786, %v2121, %v2123
        %v2401 = vsel %vm786, %v2123, %v2125
        %v2402 = vsel %vm786, %v2127, %v2129
        %v2403 = vsel %vm786, %v2129, %v2131
        %v2404 = vsel %vm786, %v2131, %v2133
        %v2405 = vsel %vm786, %v2133, %v2135
        %v2406 = vsel %vm786, %v2137, %v2139
        %v2407 = vsel %vm786, %v2139, %v2141
        %v2408 = vsel %vm786, %v2141, %v2143
        %v2409 = vsel %vm786, %v2143, %v2145
        %v2410 = vsel %vm786, %v2147, %v2149
        %v2411 = vsel %vm786, %v2149, %v2151
        %v2412 = vsel %vm786, %v2151, %v2153
        %v2413 = vsel %vm786, %v2153, %v2155
        %v2414 = vsel %vm786, %v2157, %v2159
        %v2415 = vsel %vm786, %v2159, %v2161
        %v2416 = vsel %vm786, %v2161, %v2163
        %v2417 = vsel %vm786, %v2163, %v2165
        %v2418 = vsel %vm786, %v2167, %v2169
        %v2419 = vsel %vm786, %v2169, %v2171
        %v2420 = vsel %vm786, %v2171, %v2173
        %v2421 = vsel %vm786, %v2173, %v2175
        %v2422 = vsel %vm786, %v2177, %v2179
        %v2423 = vsel %vm786, %v2179, %v2181
        %v2424 = vsel %vm786, %v2181, %v2183
        %v2425 = vsel %vm786, %v2183, %v2185
        %v2426 = vsel %vm786, %v2187, %v2189
        %v2427 = vsel %vm786, %v2189, %v2191
        %v2428 = vsel %vm786, %v2191, %v2193
        %v2429 = vsel %vm786, %v2193, %v2195
        %v2430 = vsel %vm786, %v2197, %v2199
        %v2431 = vsel %vm786, %v2199, %v2201
        %v2432 = vsel %vm786, %v2201, %v2203
        %v2433 = vsel %vm786, %v2203, %v2205
        %v2434 = vsel %vm786, %v2207, %v2209
        %v2435 = vsel %vm786, %v2209, %v2211
        %v2436 = vsel %vm786, %v2211, %v2213
        %v2437 = vsel %vm786, %v2213, %v2215
        %v2438 = vsel %vm786, %v2217, %v2219
        %v2439 = vsel %vm786, %v2219, %v2221
        %v2440 = vsel %vm786, %v2221, %v2223
        %v2441 = vsel %vm786, %v2223, %v2225
        %v2442 = vsel %vm786, %v2227, %v2229
        %v2443 = vsel %vm786, %v2229, %v2231
        %v2444 = vsel %vm786, %v2231, %v2233
        %v2445 = vsel %vm786, %v2233, %v2235
        %v2446 = vsel %vm786, %v2237, %v2239
        %v2447 = vsel %vm786, %v2239, %v2241
        %v2448 = vsel %vm786, %v2241, %v2243
        %v2449 = vsel %vm786, %v2243, %v2245
        %v2450 = vsel %vm786, %v2247, %v2249
        %v2451 = vsel %vm786, %v2249, %v2251
        %v2452 = vsel %vm786, %v2251, %v2253
        %v2453 = vsel %vm786, %v2253, %v2255
        %v2454 = vsel %vm786, %v2257, %v2259
        %v2455 = vsel %vm786, %v2259, %v2261
        %v2456 = vsel %vm786, %v2261, %v2263
        %v2457 = vsel %vm786, %v2263, %v2265
        %vm2658 = vcmask 130048
        %v2660 = vsel %vm2658, %v1180, 0
        %2662 = vmatprep.subr.mxu0 %v788
        %2663 = vmatpush1.msra.mxu0 %v787
        %2664 = vmatprep.subr.mxu0 %v1295
        %2665 = vmatpush1.msra.mxu0 %v1294
        %2666 = vmatprep.subr.mxu0 %v2267
        %2667 = vmatpush1.msra.mxu0 %v2266
        %2668 = vmatprep.subr.mxu0 %v2271
        %2669 = vmatpush1.msra.mxu0 %v2270
        %2670 = vmatprep.subr.mxu0 %v2275
        %2671 = vmatpush1.msra.mxu0 %v2274
        %2672 = vmatprep.subr.mxu0 %v2279
        %2673 = vmatpush1.msra.mxu0 %v2278
        %2674 = vmatprep.subr.mxu0 %v2283
        %2675 = vmatpush1.msra.mxu0 %v2282
        %2676 = vmatprep.subr.mxu0 %v2287
        %2677 = vmatpush1.msra.mxu0 %v2286
        %2678 = vmatprep.subr.mxu0 %v2291
        %2679 = vmatpush1.msra.mxu0 %v2290
        %2680 = vmatprep.subr.mxu0 %v2295
        %2681 = vmatpush1.msra.mxu0 %v2294
        %2682 = vmatprep.subr.mxu0 %v2299
        %2683 = vmatpush1.msra.mxu0 %v2298
        %2684 = vmatprep.subr.mxu0 %v2303
        %2685 = vmatpush1.msra.mxu0 %v2302
        %2686 = vmatprep.subr.mxu0 %v2307
        %2687 = vmatpush1.msra.mxu0 %v2306
        %2688 = vmatprep.subr.mxu0 %v2311
        %2689 = vmatpush1.msra.mxu0 %v2310
        %2690 = vmatprep.subr.mxu0 %v2315
        %2691 = vmatpush1.msra.mxu0 %v2314
        %2692 = vmatprep.subr.mxu0 %v2319
        %2693 = vmatpush1.msra.mxu0 %v2318
        %2694 = vmatprep.subr.mxu0 %v2323
        %2695 = vmatpush1.msra.mxu0 %v2322
        %2696 = vmatprep.subr.mxu0 %v2327
        %2697 = vmatpush1.msra.mxu0 %v2326
        %2698 = vmatprep.subr.mxu0 %v2331
        %2699 = vmatpush1.msra.mxu0 %v2330
        %2700 = vmatprep.subr.mxu0 %v2335
        %2701 = vmatpush1.msra.mxu0 %v2334
        %2702 = vmatprep.subr.mxu0 %v2339
        %2703 = vmatpush1.msra.mxu0 %v2338
        %2704 = vmatprep.subr.mxu0 %v2343
        %2705 = vmatpush1.msra.mxu0 %v2342
        %2706 = vmatprep.subr.mxu0 %v2347
        %2707 = vmatpush1.msra.mxu0 %v2346
        %2708 = vmatprep.subr.mxu0 %v2351
        %2709 = vmatpush1.msra.mxu0 %v2350
        %2710 = vmatprep.subr.mxu0 %v2355
        %2711 = vmatpush1.msra.mxu0 %v2354
        %2712 = vmatprep.subr.mxu0 %v2359
        %2713 = vmatpush1.msra.mxu0 %v2358
        %2714 = vmatprep.subr.mxu0 %v2363
        %2715 = vmatpush1.msra.mxu0 %v2362
        %2716 = vmatprep.subr.mxu0 %v2367
        %2717 = vmatpush1.msra.mxu0 %v2366
        %2718 = vmatprep.subr.mxu0 %v2371
        %2719 = vmatpush1.msra.mxu0 %v2370
        %2720 = vmatprep.subr.mxu0 %v2375
        %2721 = vmatpush1.msra.mxu0 %v2374
        %2722 = vmatprep.subr.mxu0 %v2379
        %2723 = vmatpush1.msra.mxu0 %v2378
        %2724 = vmatprep.subr.mxu0 %v2383
        %2725 = vmatpush1.msra.mxu0 %v2382
        %2726 = vmatprep.mubr.f32.mxu0 %v1178
        %2727 = vmatmul.mubr.f32.gmra.mrb[0].mxu0 %v1177
        %v2728 = vpop.f32.mrb[0].mxu0
        %v2729 = vadd.f32 %v1784, %v2728
        %v2730 = vpop.f32.mrb[0].mxu0
        %v2731 = vadd.f32 %v1784, %v2730
        %2732 = vdwg.mxu0
        %2733 = vmatprep.subr.mxu0 %v2387
        %2734 = vmatpush1.msra.mxu0 %v2386
        %2735 = vmatprep.subr.mxu0 %v2391
        %2736 = vmatpush1.msra.mxu0 %v2390
        %2737 = vmatprep.subr.mxu0 %v2395
        %2738 = vmatpush1.msra.mxu0 %v2394
        %2739 = vmatprep.subr.mxu0 %v2399
        %2740 = vmatpush1.msra.mxu0 %v2398
        %2741 = vmatprep.subr.mxu0 %v2403
        %2742 = vmatpush1.msra.mxu0 %v2402
        %2743 = vmatprep.subr.mxu0 %v2407
        %2744 = vmatpush1.msra.mxu0 %v2406
        %2745 = vmatprep.subr.mxu0 %v2411
        %2746 = vmatpush1.msra.mxu0 %v2410
        %2747 = vmatprep.subr.mxu0 %v2415
        %2748 = vmatpush1.msra.mxu0 %v2414
        %2749 = vmatprep.subr.mxu0 %v2419
        %2750 = vmatpush1.msra.mxu0 %v2418
        %2751 = vmatprep.subr.mxu0 %v2423
        %2752 = vmatpush1.msra.mxu0 %v2422
        %2753 = vmatprep.subr.mxu0 %v2427
        %2754 = vmatpush1.msra.mxu0 %v2426
        %2755 = vmatprep.subr.mxu0 %v2431
        %2756 = vmatpush1.msra.mxu0 %v2430
        %2757 = vmatprep.subr.mxu0 %v2435
        %2758 = vmatpush1.msra.mxu0 %v2434
        %2759 = vmatprep.subr.mxu0 %v2439
        %2760 = vmatpush1.msra.mxu0 %v2438
        %2761 = vmatprep.subr.mxu0 %v2443
        %2762 = vmatpush1.msra.mxu0 %v2442
        %2763 = vmatprep.subr.mxu0 %v2447
        %2764 = vmatpush1.msra.mxu0 %v2446
        %2765 = vmatprep.subr.mxu0 %v2451
        %2766 = vmatpush1.msra.mxu0 %v2450
        %2767 = vmatprep.subr.mxu0 %v2455
        %2768 = vmatpush1.msra.mxu0 %v2454
        %2769 = vmatprep.subr.mxu0 0.0
        %2770 = vmatpush1.msra.mxu0 0.0
        %2771 = vmatprep.subr.mxu0 0.0
        %2772 = vmatpush1.msra.mxu0 0.0
        %2773 = vmatprep.subr.mxu0 0.0
        %2774 = vmatpush1.msra.mxu0 0.0
        %2775 = vmatprep.subr.mxu0 0.0
        %2776 = vmatpush1.msra.mxu0 0.0
        %2777 = vmatprep.subr.mxu0 0.0
        %2778 = vmatpush1.msra.mxu0 0.0
        %2779 = vmatprep.subr.mxu0 0.0
        %2780 = vmatpush1.msra.mxu0 0.0
        %2781 = vmatprep.subr.mxu0 0.0
        %2782 = vmatpush1.msra.mxu0 0.0
        %2783 = vmatprep.subr.mxu0 0.0
        %2784 = vmatpush1.msra.mxu0 0.0
        %2785 = vmatprep.subr.mxu0 0.0
        %2786 = vmatpush1.msra.mxu0 0.0
        %2787 = vmatprep.subr.mxu0 0.0
        %2788 = vmatpush1.msra.mxu0 0.0
        %2789 = vmatprep.subr.mxu0 0.0
        %2790 = vmatpush1.msra.mxu0 0.0
        %2791 = vmatprep.subr.mxu0 0.0
        %2792 = vmatpush1.msra.mxu0 0.0
        %2793 = vmatprep.subr.mxu0 0.0
        %2794 = vmatpush1.msra.mxu0 0.0
        %2795 = vmatprep.subr.mxu0 0.0
        %2796 = vmatpush1.msra.mxu0 0.0
        %2797 = vmatprep.mubr.f32.mxu0 %v2660
        %2798 = vmatmul.mubr.f32.gmra.mrb[0].mxu0 %v1179
        %v2799 = vpop.f32.mrb[0].mxu0
        %v2800 = vadd.f32 %v2729, %v2799
        %v2801 = vpop.f32.mrb[0].mxu0
        %v2802 = vadd.f32 %v2731, %v2801
        %2803 = vdwg.mxu0
        %2804 = vmatprep.subr.mxu0 %v790
        %2805 = vmatpush1.msra.mxu0 %v789
        %2806 = vmatprep.subr.mxu0 %v1297
        %2807 = vmatpush1.msra.mxu0 %v1296
        %2808 = vmatprep.subr.mxu0 %v2269
        %2809 = vmatpush1.msra.mxu0 %v2268
        %2810 = vmatprep.subr.mxu0 %v2273
        %2811 = vmatpush1.msra.mxu0 %v2272
        %2812 = vmatprep.subr.mxu0 %v2277
        %2813 = vmatpush1.msra.mxu0 %v2276
        %2814 = vmatprep.subr.mxu0 %v2281
        %2815 = vmatpush1.msra.mxu0 %v2280
        %2816 = vmatprep.subr.mxu0 %v2285
        %2817 = vmatpush1.msra.mxu0 %v2284
        %2818 = vmatprep.subr.mxu0 %v2289
        %2819 = vmatpush1.msra.mxu0 %v2288
        %2820 = vmatprep.subr.mxu0 %v2293
        %2821 = vmatpush1.msra.mxu0 %v2292
        %2822 = vmatprep.subr.mxu0 %v2297
        %2823 = vmatpush1.msra.mxu0 %v2296
        %2824 = vmatprep.subr.mxu0 %v2301
        %2825 = vmatpush1.msra.mxu0 %v2300
        %2826 = vmatprep.subr.mxu0 %v2305
        %2827 = vmatpush1.msra.mxu0 %v2304
        %2828 = vmatprep.subr.mxu0 %v2309
        %2829 = vmatpush1.msra.mxu0 %v2308
        %2830 = vmatprep.subr.mxu0 %v2313
        %2831 = vmatpush1.msra.mxu0 %v2312
        %2832 = vmatprep.subr.mxu0 %v2317
        %2833 = vmatpush1.msra.mxu0 %v2316
        %2834 = vmatprep.subr.mxu0 %v2321
        %2835 = vmatpush1.msra.mxu0 %v2320
        %2836 = vmatprep.subr.mxu0 %v2325
        %2837 = vmatpush1.msra.mxu0 %v2324
        %2838 = vmatprep.subr.mxu0 %v2329
        %2839 = vmatpush1.msra.mxu0 %v2328
        %2840 = vmatprep.subr.mxu0 %v2333
        %2841 = vmatpush1.msra.mxu0 %v2332
        %2842 = vmatprep.subr.mxu0 %v2337
        %2843 = vmatpush1.msra.mxu0 %v2336
        %2844 = vmatprep.subr.mxu0 %v2341
        %2845 = vmatpush1.msra.mxu0 %v2340
        %2846 = vmatprep.subr.mxu0 %v2345
        %2847 = vmatpush1.msra.mxu0 %v2344
        %2848 = vmatprep.subr.mxu0 %v2349
        %2849 = vmatpush1.msra.mxu0 %v2348
        %2850 = vmatprep.subr.mxu0 %v2353
        %2851 = vmatpush1.msra.mxu0 %v2352
        %2852 = vmatprep.subr.mxu0 %v2357
        %2853 = vmatpush1.msra.mxu0 %v2356
        %2854 = vmatprep.subr.mxu0 %v2361
        %2855 = vmatpush1.msra.mxu0 %v2360
        %2856 = vmatprep.subr.mxu0 %v2365
        %2857 = vmatpush1.msra.mxu0 %v2364
        %2858 = vmatprep.subr.mxu0 %v2369
        %2859 = vmatpush1.msra.mxu0 %v2368
        %2860 = vmatprep.subr.mxu0 %v2373
        %2861 = vmatpush1.msra.mxu0 %v2372
        %2862 = vmatprep.subr.mxu0 %v2377
        %2863 = vmatpush1.msra.mxu0 %v2376
        %2864 = vmatprep.subr.mxu0 %v2381
        %2865 = vmatpush1.msra.mxu0 %v2380
        %2866 = vmatprep.subr.mxu0 %v2385
        %2867 = vmatpush1.msra.mxu0 %v2384
        %2868 = vmatprep.mubr.f32.mxu0 %v1178
        %2869 = vmatmul.mubr.f32.gmra.mrb[0].mxu0 %v1177
        %v2870 = vpop.f32.mrb[0].mxu0
        %v2871 = vadd.f32 %v1784, %v2870
        %v2872 = vpop.f32.mrb[0].mxu0
        %v2873 = vadd.f32 %v1784, %v2872
        %2874 = vdwg.mxu0
        %2875 = vmatprep.subr.mxu0 %v2389
        %2876 = vmatpush1.msra.mxu0 %v2388
        %2877 = vmatprep.subr.mxu0 %v2393
        %2878 = vmatpush1.msra.mxu0 %v2392
        %2879 = vmatprep.subr.mxu0 %v2397
        %2880 = vmatpush1.msra.mxu0 %v2396
        %2881 = vmatprep.subr.mxu0 %v2401
        %2882 = vmatpush1.msra.mxu0 %v2400
        %2883 = vmatprep.subr.mxu0 %v2405
        %2884 = vmatpush1.msra.mxu0 %v2404
        %2885 = vmatprep.subr.mxu0 %v2409
        %2886 = vmatpush1.msra.mxu0 %v2408
        %2887 = vmatprep.subr.mxu0 %v2413
        %2888 = vmatpush1.msra.mxu0 %v2412
        %2889 = vmatprep.subr.mxu0 %v2417
        %2890 = vmatpush1.msra.mxu0 %v2416
        %2891 = vmatprep.subr.mxu0 %v2421
        %2892 = vmatpush1.msra.mxu0 %v2420
        %2893 = vmatprep.subr.mxu0 %v2425
        %2894 = vmatpush1.msra.mxu0 %v2424
        %2895 = vmatprep.subr.mxu0 %v2429
        %2896 = vmatpush1.msra.mxu0 %v2428
        %2897 = vmatprep.subr.mxu0 %v2433
        %2898 = vmatpush1.msra.mxu0 %v2432
        %2899 = vmatprep.subr.mxu0 %v2437
        %2900 = vmatpush1.msra.mxu0 %v2436
        %2901 = vmatprep.subr.mxu0 %v2441
        %2902 = vmatpush1.msra.mxu0 %v2440
        %2903 = vmatprep.subr.mxu0 %v2445
        %2904 = vmatpush1.msra.mxu0 %v2444
        %2905 = vmatprep.subr.mxu0 %v2449
        %2906 = vmatpush1.msra.mxu0 %v2448
        %2907 = vmatprep.subr.mxu0 %v2453
        %2908 = vmatpush1.msra.mxu0 %v2452
        %2909 = vmatprep.subr.mxu0 %v2457
        %2910 = vmatpush1.msra.mxu0 %v2456
        %2911 = vmatprep.subr.mxu0 0.0
        %2912 = vmatpush1.msra.mxu0 0.0
        %2913 = vmatprep.subr.mxu0 0.0
        %2914 = vmatpush1.msra.mxu0 0.0
        %2915 = vmatprep.subr.mxu0 0.0
        %2916 = vmatpush1.msra.mxu0 0.0
        %2917 = vmatprep.subr.mxu0 0.0
        %2918 = vmatpush1.msra.mxu0 0.0
        %2919 = vmatprep.subr.mxu0 0.0
        %2920 = vmatpush1.msra.mxu0 0.0
        %2921 = vmatprep.subr.mxu0 0.0
        %2922 = vmatpush1.msra.mxu0 0.0
        %2923 = vmatprep.subr.mxu0 0.0
        %2924 = vmatpush1.msra.mxu0 0.0
        %2925 = vmatprep.subr.mxu0 0.0
        %2926 = vmatpush1.msra.mxu0 0.0
        %2927 = vmatprep.subr.mxu0 0.0
        %2928 = vmatpush1.msra.mxu0 0.0
        %2929 = vmatprep.subr.mxu0 0.0
        %2930 = vmatpush1.msra.mxu0 0.0
        %2931 = vmatprep.subr.mxu0 0.0
        %2932 = vmatpush1.msra.mxu0 0.0
        %2933 = vmatprep.subr.mxu0 0.0
        %2934 = vmatpush1.msra.mxu0 0.0
        %2935 = vmatprep.subr.mxu0 0.0
        %2936 = vmatpush1.msra.mxu0 0.0
        %2937 = vmatprep.subr.mxu0 0.0
        %2938 = vmatpush1.msra.mxu0 0.0
        %2939 = vmatprep.mubr.f32.mxu0 %v2660
        %2940 = vmatmul.mubr.f32.gmra.mrb[0].mxu0 %v1179
        %v2941 = vpop.f32.mrb[0].mxu0
        %v2942 = vadd.f32 %v2871, %v2941
        %v2943 = vpop.f32.mrb[0].mxu0
        %v2944 = vadd.f32 %v2873, %v2943
        %2945 = vdwg.mxu0
        %v2946 = vmax.f32 %v2800, 0.0
        %v2947 = vmax.f32 %v2802, 0.0
        %v2948 = vmax.f32 %v2942, 0.0
        %v2949 = vmax.f32 %v2944, 0.0
        %v2950 = vmul.f32 %v2946, %v687
        %v2951 = vmul.f32 %v2947, %v691
        %v2952 = vmul.f32 %v2948, %v695
        %v2953 = vmul.f32 %v2949, %v699
        %2958 = vrot.lane.b32.xlu0 %v2950, 69
        %v2959 = vpop.permute.xlu0 %2958
        %2960 = vrot.lane.b32.xlu0 %v2951, 69
        %v2961 = vpop.permute.xlu0 %2960
        %2962 = vrot.lane.b32.xlu0 %v2952, 69
        %v2963 = vpop.permute.xlu0 %2962
        %2964 = vrot.lane.b32.xlu0 %v2953, 69
        %v2965 = vpop.permute.xlu0 %2964
        %v2966 = vsel %vm497, %v2959, %v2961
        %v2967 = vsel %vm497, %v2961, %v2963
        %v2968 = vsel %vm497, %v2963, %v2965
        %v2977 = vsel %vm497, 0.0, %v2959
        %v2978 = vsel %vm497, %v2965, 0.0
        %v2979 = vld [vmem:[%s8] sm:$0xff]
        %v2980 = vld [vmem:[%s8 + $0x8] sm:$0xff]
        %v2981 = vld [vmem:[%s8 + $0x10] sm:$0xff]
        %v2982 = vld [vmem:[%s8 + $0x18] sm:$0xff]
        %v2983 = vld [vmem:[%s8 + $0x20] sm:$0xff]
        %v2984 = vld [vmem:[%s8 + $0x28] sm:$0xff]
        %v2985 = vld [vmem:[%s8 + $0x30] sm:$0xff]
        %v2986 = vld [vmem:[%s9] sm:$0xff]
        %2989 = vrot.lane.b32.xlu0 %v2977, 127
        %v2990 = vpop.permute.xlu0 %2989
        %2991 = vrot.lane.b32.xlu0 %v2966, 127
        %v2992 = vpop.permute.xlu0 %2991
        %2993 = vrot.lane.b32.xlu0 %v2967, 127
        %v2994 = vpop.permute.xlu0 %2993
        %2995 = vrot.lane.b32.xlu0 %v2968, 127
        %v2996 = vpop.permute.xlu0 %2995
        %2997 = vrot.lane.b32.xlu0 %v2978, 127
        %v2998 = vpop.permute.xlu0 %2997
        %v2999 = vsel %vm741, %v2990, %v2992
        %v3000 = vsel %vm741, %v2992, %v2994
        %v3001 = vsel %vm741, %v2994, %v2996
        %v3002 = vsel %vm741, %v2996, %v2998
        %3011 = vrot.lane.b32.xlu0 %v2977, 126
        %v3012 = vpop.permute.xlu0 %3011
        %3013 = vrot.lane.b32.xlu0 %v2966, 126
        %v3014 = vpop.permute.xlu0 %3013
        %3015 = vrot.lane.b32.xlu0 %v2967, 126
        %v3016 = vpop.permute.xlu0 %3015
        %3017 = vrot.lane.b32.xlu0 %v2968, 126
        %v3018 = vpop.permute.xlu0 %3017
        %3019 = vrot.lane.b32.xlu0 %v2978, 126
        %v3020 = vpop.permute.xlu0 %3019
        %v3021 = vsel %vm756, %v3012, %v3014
        %v3022 = vsel %vm756, %v3014, %v3016
        %v3023 = vsel %vm756, %v3016, %v3018
        %v3024 = vsel %vm756, %v3018, %v3020
        %3033 = vrot.lane.b32.xlu0 %v2977, 125
        %v3034 = vpop.permute.xlu0 %3033
        %3035 = vrot.lane.b32.xlu0 %v2966, 125
        %v3036 = vpop.permute.xlu0 %3035
        %3037 = vrot.lane.b32.xlu0 %v2967, 125
        %v3038 = vpop.permute.xlu0 %3037
        %3039 = vrot.lane.b32.xlu0 %v2968, 125
        %v3040 = vpop.permute.xlu0 %3039
        %3041 = vrot.lane.b32.xlu0 %v2978, 125
        %v3042 = vpop.permute.xlu0 %3041
        %v3043 = vsel %vm1232, %v3034, %v3036
        %v3044 = vsel %vm1232, %v3036, %v3038
        %v3045 = vsel %vm1232, %v3038, %v3040
        %v3046 = vsel %vm1232, %v3040, %v3042
        %3055 = vrot.lane.b32.xlu0 %v2977, 124
        %v3056 = vpop.permute.xlu0 %3055
        %3057 = vrot.lane.b32.xlu0 %v2966, 124
        %v3058 = vpop.permute.xlu0 %3057
        %3059 = vrot.lane.b32.xlu0 %v2967, 124
        %v3060 = vpop.permute.xlu0 %3059
        %3061 = vrot.lane.b32.xlu0 %v2968, 124
        %v3062 = vpop.permute.xlu0 %3061
        %3063 = vrot.lane.b32.xlu0 %v2978, 124
        %v3064 = vpop.permute.xlu0 %3063
        %v3065 = vsel %vm1261, %v3056, %v3058
        %v3066 = vsel %vm1261, %v3058, %v3060
        %v3067 = vsel %vm1261, %v3060, %v3062
        %v3068 = vsel %vm1261, %v3062, %v3064
        %3077 = vrot.lane.b32.xlu0 %v1175, 123
        %v3078 = vpop.permute.xlu0 %3077
        %3079 = vrot.lane.b32.xlu0 %v1170, 123
        %v3080 = vpop.permute.xlu0 %3079
        %3081 = vrot.lane.b32.xlu0 %v1171, 123
        %v3082 = vpop.permute.xlu0 %3081
        %3083 = vrot.lane.b32.xlu0 %v1172, 123
        %v3084 = vpop.permute.xlu0 %3083
        %3085 = vrot.lane.b32.xlu0 %v1176, 123
        %v3086 = vpop.permute.xlu0 %3085
        %3087 = vrot.lane.b32.xlu0 %v2977, 123
        %v3088 = vpop.permute.xlu0 %3087
        %3089 = vrot.lane.b32.xlu0 %v2966, 123
        %v3090 = vpop.permute.xlu0 %3089
        %3091 = vrot.lane.b32.xlu0 %v2967, 123
        %v3092 = vpop.permute.xlu0 %3091
        %3093 = vrot.lane.b32.xlu0 %v2968, 123
        %v3094 = vpop.permute.xlu0 %3093
        %3095 = vrot.lane.b32.xlu0 %v2978, 123
        %v3096 = vpop.permute.xlu0 %3095
        %vm3097 = vcmask 1006592
        %v3098 = vsel %vm3097, %v3078, %v3080
        %v3099 = vsel %vm3097, %v3080, %v3082
        %v3100 = vsel %vm3097, %v3082, %v3084
        %v3101 = vsel %vm3097, %v3084, %v3086
        %v3102 = vsel %vm3097, %v3088, %v3090
        %v3103 = vsel %vm3097, %v3090, %v3092
        %v3104 = vsel %vm3097, %v3092, %v3094
        %v3105 = vsel %vm3097, %v3094, %v3096
        %3114 = vrot.lane.b32.xlu0 %v1175, 122
        %v3115 = vpop.permute.xlu0 %3114
        %3116 = vrot.lane.b32.xlu0 %v1170, 122
        %v3117 = vpop.permute.xlu0 %3116
        %3118 = vrot.lane.b32.xlu0 %v1171, 122
        %v3119 = vpop.permute.xlu0 %3118
        %3120 = vrot.lane.b32.xlu0 %v1172, 122
        %v3121 = vpop.permute.xlu0 %3120
        %3122 = vrot.lane.b32.xlu0 %v1176, 122
        %v3123 = vpop.permute.xlu0 %3122
        %3124 = vrot.lane.b32.xlu0 %v2977, 122
        %v3125 = vpop.permute.xlu0 %3124
        %3126 = vrot.lane.b32.xlu0 %v2966, 122
        %v3127 = vpop.permute.xlu0 %3126
        %3128 = vrot.lane.b32.xlu0 %v2967, 122
        %v3129 = vpop.permute.xlu0 %3128
        %3130 = vrot.lane.b32.xlu0 %v2968, 122
        %v3131 = vpop.permute.xlu0 %3130
        %3132 = vrot.lane.b32.xlu0 %v2978, 122
        %v3133 = vpop.permute.xlu0 %3132
        %vm3134 = vcmask 998400
        %v3135 = vsel %vm3134, %v3115, %v3117
        %v3136 = vsel %vm3134, %v3117, %v3119
        %v3137 = vsel %vm3134, %v3119, %v3121
        %v3138 = vsel %vm3134, %v3121, %v3123
        %v3139 = vsel %vm3134, %v3125, %v3127
        %v3140 = vsel %vm3134, %v3127, %v3129
        %v3141 = vsel %vm3134, %v3129, %v3131
        %v3142 = vsel %vm3134, %v3131, %v3133
        %3151 = vrot.lane.b32.xlu0 %v2977, 106
        %v3152 = vpop.permute.xlu0 %3151
        %3153 = vrot.lane.b32.xlu0 %v2966, 106
        %v3154 = vpop.permute.xlu0 %3153
        %3155 = vrot.lane.b32.xlu0 %v2967, 106
        %v3156 = vpop.permute.xlu0 %3155
        %3157 = vrot.lane.b32.xlu0 %v2968, 106
        %v3158 = vpop.permute.xlu0 %3157
        %3159 = vrot.lane.b32.xlu0 %v2978, 106
        %v3160 = vpop.permute.xlu0 %3159
        %v3161 = vsel %vm771, %v3152, %v3154
        %v3162 = vsel %vm771, %v3154, %v3156
        %v3163 = vsel %vm771, %v3156, %v3158
        %v3164 = vsel %vm771, %v3158, %v3160
        %3173 = vrot.lane.b32.xlu0 %v2977, 105
        %v3174 = vpop.permute.xlu0 %3173
        %3175 = vrot.lane.b32.xlu0 %v2966, 105
        %v3176 = vpop.permute.xlu0 %3175
        %3177 = vrot.lane.b32.xlu0 %v2967, 105
        %v3178 = vpop.permute.xlu0 %3177
        %3179 = vrot.lane.b32.xlu0 %v2968, 105
        %v3180 = vpop.permute.xlu0 %3179
        %3181 = vrot.lane.b32.xlu0 %v2978, 105
        %v3182 = vpop.permute.xlu0 %3181
        %v3183 = vsel %vm786, %v3174, %v3176
        %v3184 = vsel %vm786, %v3176, %v3178
        %v3185 = vsel %vm786, %v3178, %v3180
        %v3186 = vsel %vm786, %v3180, %v3182
        %3191 = vrot.lane.b32.xlu0 %v2977, 104
        %v3192 = vpop.permute.xlu0 %3191
        %3193 = vrot.lane.b32.xlu0 %v2966, 104
        %v3194 = vpop.permute.xlu0 %3193
        %3195 = vrot.lane.b32.xlu0 %v2967, 104
        %v3196 = vpop.permute.xlu0 %3195
        %3197 = vrot.lane.b32.xlu0 %v2968, 104
        %v3198 = vpop.permute.xlu0 %3197
        %3199 = vrot.lane.b32.xlu0 %v2978, 104
        %v3200 = vpop.permute.xlu0 %3199
        %v3201 = vsel %vm801, %v3192, %v3194
        %v3202 = vsel %vm801, %v3194, %v3196
        %v3203 = vsel %vm801, %v3196, %v3198
        %v3204 = vsel %vm801, %v3198, %v3200
        %3213 = vrot.lane.b32.xlu0 %v2977, 103
        %v3214 = vpop.permute.xlu0 %3213
        %3215 = vrot.lane.b32.xlu0 %v2966, 103
        %v3216 = vpop.permute.xlu0 %3215
        %3217 = vrot.lane.b32.xlu0 %v2967, 103
        %v3218 = vpop.permute.xlu0 %3217
        %3219 = vrot.lane.b32.xlu0 %v2968, 103
        %v3220 = vpop.permute.xlu0 %3219
        %3221 = vrot.lane.b32.xlu0 %v2978, 103
        %v3222 = vpop.permute.xlu0 %3221
        %v3223 = vsel %vm1332, %v3214, %v3216
        %v3224 = vsel %vm1332, %v3216, %v3218
        %v3225 = vsel %vm1332, %v3218, %v3220
        %v3226 = vsel %vm1332, %v3220, %v3222
        %3235 = vrot.lane.b32.xlu0 %v2977, 102
        %v3236 = vpop.permute.xlu0 %3235
        %3237 = vrot.lane.b32.xlu0 %v2966, 102
        %v3238 = vpop.permute.xlu0 %3237
        %3239 = vrot.lane.b32.xlu0 %v2967, 102
        %v3240 = vpop.permute.xlu0 %3239
        %3241 = vrot.lane.b32.xlu0 %v2968, 102
        %v3242 = vpop.permute.xlu0 %3241
        %3243 = vrot.lane.b32.xlu0 %v2978, 102
        %v3244 = vpop.permute.xlu0 %3243
        %v3245 = vsel %vm1361, %v3236, %v3238
        %v3246 = vsel %vm1361, %v3238, %v3240
        %v3247 = vsel %vm1361, %v3240, %v3242
        %v3248 = vsel %vm1361, %v3242, %v3244
        %3257 = vrot.lane.b32.xlu0 %v1175, 101
        %v3258 = vpop.permute.xlu0 %3257
        %3259 = vrot.lane.b32.xlu0 %v1170, 101
        %v3260 = vpop.permute.xlu0 %3259
        %3261 = vrot.lane.b32.xlu0 %v1171, 101
        %v3262 = vpop.permute.xlu0 %3261
        %3263 = vrot.lane.b32.xlu0 %v1172, 101
        %v3264 = vpop.permute.xlu0 %3263
        %3265 = vrot.lane.b32.xlu0 %v1176, 101
        %v3266 = vpop.permute.xlu0 %3265
        %3267 = vrot.lane.b32.xlu0 %v2977, 101
        %v3268 = vpop.permute.xlu0 %3267
        %3269 = vrot.lane.b32.xlu0 %v2966, 101
        %v3270 = vpop.permute.xlu0 %3269
        %3271 = vrot.lane.b32.xlu0 %v2967, 101
        %v3272 = vpop.permute.xlu0 %3271
        %3273 = vrot.lane.b32.xlu0 %v2968, 101
        %v3274 = vpop.permute.xlu0 %3273
        %3275 = vrot.lane.b32.xlu0 %v2978, 101
        %v3276 = vpop.permute.xlu0 %3275
        %vm3277 = vcmask 826368
        %v3278 = vsel %vm3277, %v3258, %v3260
        %v3279 = vsel %vm3277, %v3260, %v3262
        %v3280 = vsel %vm3277, %v3262, %v3264
        %v3281 = vsel %vm3277, %v3264, %v3266
        %v3282 = vsel %vm3277, %v3268, %v3270
        %v3283 = vsel %vm3277, %v3270, %v3272
        %v3284 = vsel %vm3277, %v3272, %v3274
        %v3285 = vsel %vm3277, %v3274, %v3276
        %3294 = vrot.lane.b32.xlu0 %v1175, 100
        %v3295 = vpop.permute.xlu0 %3294
        %3296 = vrot.lane.b32.xlu0 %v1170, 100
        %v3297 = vpop.permute.xlu0 %3296
        %3298 = vrot.lane.b32.xlu0 %v1171, 100
        %v3299 = vpop.permute.xlu0 %3298
        %3300 = vrot.lane.b32.xlu0 %v1172, 100
        %v3301 = vpop.permute.xlu0 %3300
        %3302 = vrot.lane.b32.xlu0 %v1176, 100
        %v3303 = vpop.permute.xlu0 %3302
        %3304 = vrot.lane.b32.xlu0 %v2977, 100
        %v3305 = vpop.permute.xlu0 %3304
        %3306 = vrot.lane.b32.xlu0 %v2966, 100
        %v3307 = vpop.permute.xlu0 %3306
        %3308 = vrot.lane.b32.xlu0 %v2967, 100
        %v3309 = vpop.permute.xlu0 %3308
        %3310 = vrot.lane.b32.xlu0 %v2968, 100
        %v3311 = vpop.permute.xlu0 %3310
        %3312 = vrot.lane.b32.xlu0 %v2978, 100
        %v3313 = vpop.permute.xlu0 %3312
        %vm3314 = vcmask 818176
        %v3315 = vsel %vm3314, %v3295, %v3297
        %v3316 = vsel %vm3314, %v3297, %v3299
        %v3317 = vsel %vm3314, %v3299, %v3301
        %v3318 = vsel %vm3314, %v3301, %v3303
        %v3319 = vsel %vm3314, %v3305, %v3307
        %v3320 = vsel %vm3314, %v3307, %v3309
        %v3321 = vsel %vm3314, %v3309, %v3311
        %v3322 = vsel %vm3314, %v3311, %v3313
        %3331 = vrot.lane.b32.xlu0 %v2977, 84
        %v3332 = vpop.permute.xlu0 %3331
        %3333 = vrot.lane.b32.xlu0 %v2966, 84
        %v3334 = vpop.permute.xlu0 %3333
        %3335 = vrot.lane.b32.xlu0 %v2967, 84
        %v3336 = vpop.permute.xlu0 %3335
        %3337 = vrot.lane.b32.xlu0 %v2968, 84
        %v3338 = vpop.permute.xlu0 %3337
        %3339 = vrot.lane.b32.xlu0 %v2978, 84
        %v3340 = vpop.permute.xlu0 %3339
        %v3341 = vsel %vm816, %v3332, %v3334
        %v3342 = vsel %vm816, %v3334, %v3336
        %v3343 = vsel %vm816, %v3336, %v3338
        %v3344 = vsel %vm816, %v3338, %v3340
        %3353 = vrot.lane.b32.xlu0 %v2977, 83
        %v3354 = vpop.permute.xlu0 %3353
        %3355 = vrot.lane.b32.xlu0 %v2966, 83
        %v3356 = vpop.permute.xlu0 %3355
        %3357 = vrot.lane.b32.xlu0 %v2967, 83
        %v3358 = vpop.permute.xlu0 %3357
        %3359 = vrot.lane.b32.xlu0 %v2968, 83
        %v3360 = vpop.permute.xlu0 %3359
        %3361 = vrot.lane.b32.xlu0 %v2978, 83
        %v3362 = vpop.permute.xlu0 %3361
        %v3363 = vsel %vm831, %v3354, %v3356
        %v3364 = vsel %vm831, %v3356, %v3358
        %v3365 = vsel %vm831, %v3358, %v3360
        %v3366 = vsel %vm831, %v3360, %v3362
        %3375 = vrot.lane.b32.xlu0 %v1175, 108
        %v3376 = vpop.permute.xlu0 %3375
        %3377 = vrot.lane.b32.xlu0 %v1170, 108
        %v3378 = vpop.permute.xlu0 %3377
        %3379 = vrot.lane.b32.xlu0 %v1171, 108
        %v3380 = vpop.permute.xlu0 %3379
        %3381 = vrot.lane.b32.xlu0 %v1172, 108
        %v3382 = vpop.permute.xlu0 %3381
        %3383 = vrot.lane.b32.xlu0 %v1176, 108
        %v3384 = vpop.permute.xlu0 %3383
        %3385 = vrot.lane.b32.xlu0 %v2977, 108
        %v3386 = vpop.permute.xlu0 %3385
        %3387 = vrot.lane.b32.xlu0 %v2966, 108
        %v3388 = vpop.permute.xlu0 %3387
        %3389 = vrot.lane.b32.xlu0 %v2967, 108
        %v3390 = vpop.permute.xlu0 %3389
        %3391 = vrot.lane.b32.xlu0 %v2968, 108
        %v3392 = vpop.permute.xlu0 %3391
        %3393 = vrot.lane.b32.xlu0 %v2978, 108
        %v3394 = vpop.permute.xlu0 %3393
        %vm3395 = vcmask 883712
        %v3396 = vsel %vm3395, %v3376, %v3378
        %v3397 = vsel %vm3395, %v3378, %v3380
        %v3398 = vsel %vm3395, %v3380, %v3382
        %v3399 = vsel %vm3395, %v3382, %v3384
        %v3400 = vsel %vm3395, %v3386, %v3388
        %v3401 = vsel %vm3395, %v3388, %v3390
        %v3402 = vsel %vm3395, %v3390, %v3392
        %v3403 = vsel %vm3395, %v3392, %v3394
        %3404 = vrot.lane.b32.xlu0 %v2977, 107
        %v3405 = vpop.permute.xlu0 %3404
        %3406 = vrot.lane.b32.xlu0 %v2966, 107
        %v3407 = vpop.permute.xlu0 %3406
        %3408 = vrot.lane.b32.xlu0 %v2967, 107
        %v3409 = vpop.permute.xlu0 %3408
        %3410 = vrot.lane.b32.xlu0 %v2968, 107
        %v3411 = vpop.permute.xlu0 %3410
        %3412 = vrot.lane.b32.xlu0 %v2978, 107
        %v3413 = vpop.permute.xlu0 %3412
        %v3414 = vsel %vm1519, %v3405, %v3407
        %v3415 = vsel %vm1519, %v3407, %v3409
        %v3416 = vsel %vm1519, %v3409, %v3411
        %v3417 = vsel %vm1519, %v3411, %v3413
        %3418 = vrot.lane.b32.xlu0 %v1175, 86
        %v3419 = vpop.permute.xlu0 %3418
        %3420 = vrot.lane.b32.xlu0 %v1170, 86
        %v3421 = vpop.permute.xlu0 %3420
        %3422 = vrot.lane.b32.xlu0 %v1171, 86
        %v3423 = vpop.permute.xlu0 %3422
        %3424 = vrot.lane.b32.xlu0 %v1172, 86
        %v3425 = vpop.permute.xlu0 %3424
        %3426 = vrot.lane.b32.xlu0 %v1176, 86
        %v3427 = vpop.permute.xlu0 %3426
        %3428 = vrot.lane.b32.xlu0 %v2977, 86
        %v3429 = vpop.permute.xlu0 %3428
        %3430 = vrot.lane.b32.xlu0 %v2966, 86
        %v3431 = vpop.permute.xlu0 %3430
        %3432 = vrot.lane.b32.xlu0 %v2967, 86
        %v3433 = vpop.permute.xlu0 %3432
        %3434 = vrot.lane.b32.xlu0 %v2968, 86
        %v3435 = vpop.permute.xlu0 %3434
        %3436 = vrot.lane.b32.xlu0 %v2978, 86
        %v3437 = vpop.permute.xlu0 %3436
        %vm3438 = vcmask 703488
        %v3439 = vsel %vm3438, %v3419, %v3421
        %v3440 = vsel %vm3438, %v3421, %v3423
        %v3441 = vsel %vm3438, %v3423, %v3425
        %v3442 = vsel %vm3438, %v3425, %v3427
        %v3443 = vsel %vm3438, %v3429, %v3431
        %v3444 = vsel %vm3438, %v3431, %v3433
        %v3445 = vsel %vm3438, %v3433, %v3435
        %v3446 = vsel %vm3438, %v3435, %v3437
        %3447 = vrot.lane.b32.xlu0 %v1175, 85
        %v3448 = vpop.permute.xlu0 %3447
        %3449 = vrot.lane.b32.xlu0 %v1170, 85
        %v3450 = vpop.permute.xlu0 %3449
        %3451 = vrot.lane.b32.xlu0 %v1171, 85
        %v3452 = vpop.permute.xlu0 %3451
        %3453 = vrot.lane.b32.xlu0 %v1172, 85
        %v3454 = vpop.permute.xlu0 %3453
        %3455 = vrot.lane.b32.xlu0 %v1176, 85
        %v3456 = vpop.permute.xlu0 %3455
        %3457 = vrot.lane.b32.xlu0 %v2977, 85
        %v3458 = vpop.permute.xlu0 %3457
        %3459 = vrot.lane.b32.xlu0 %v2966, 85
        %v3460 = vpop.permute.xlu0 %3459
        %3461 = vrot.lane.b32.xlu0 %v2967, 85
        %v3462 = vpop.permute.xlu0 %3461
        %3463 = vrot.lane.b32.xlu0 %v2968, 85
        %v3464 = vpop.permute.xlu0 %3463
        %3465 = vrot.lane.b32.xlu0 %v2978, 85
        %v3466 = vpop.permute.xlu0 %3465
        %vm3467 = vcmask 695296
        %v3468 = vsel %vm3467, %v3448, %v3450
        %v3469 = vsel %vm3467, %v3450, %v3452
        %v3470 = vsel %vm3467, %v3452, %v3454
        %v3471 = vsel %vm3467, %v3454, %v3456
        %v3472 = vsel %vm3467, %v3458, %v3460
        %v3473 = vsel %vm3467, %v3460, %v3462
        %v3474 = vsel %vm3467, %v3462, %v3464
        %v3475 = vsel %vm3467, %v3464, %v3466
        %3476 = vrot.lane.b32.xlu0 %v1175, 110
        %v3477 = vpop.permute.xlu0 %3476
        %3478 = vrot.lane.b32.xlu0 %v1170, 110
        %v3479 = vpop.permute.xlu0 %3478
        %3480 = vrot.lane.b32.xlu0 %v1171, 110
        %v3481 = vpop.permute.xlu0 %3480
        %3482 = vrot.lane.b32.xlu0 %v1172, 110
        %v3483 = vpop.permute.xlu0 %3482
        %3484 = vrot.lane.b32.xlu0 %v1176, 110
        %v3485 = vpop.permute.xlu0 %3484
        %3486 = vrot.lane.b32.xlu0 %v2977, 110
        %v3487 = vpop.permute.xlu0 %3486
        %3488 = vrot.lane.b32.xlu0 %v2966, 110
        %v3489 = vpop.permute.xlu0 %3488
        %3490 = vrot.lane.b32.xlu0 %v2967, 110
        %v3491 = vpop.permute.xlu0 %3490
        %3492 = vrot.lane.b32.xlu0 %v2968, 110
        %v3493 = vpop.permute.xlu0 %3492
        %3494 = vrot.lane.b32.xlu0 %v2978, 110
        %v3495 = vpop.permute.xlu0 %3494
        %vm3496 = vcmask 900096
        %v3497 = vsel %vm3496, %v3477, %v3479
        %v3498 = vsel %vm3496, %v3479, %v3481
        %v3499 = vsel %vm3496, %v3481, %v3483
        %v3500 = vsel %vm3496, %v3483, %v3485
        %v3501 = vsel %vm3496, %v3487, %v3489
        %v3502 = vsel %vm3496, %v3489, %v3491
        %v3503 = vsel %vm3496, %v3491, %v3493
        %v3504 = vsel %vm3496, %v3493, %v3495
        %3505 = vrot.lane.b32.xlu0 %v1175, 109
        %v3506 = vpop.permute.xlu0 %3505
        %3507 = vrot.lane.b32.xlu0 %v1170, 109
        %v3508 = vpop.permute.xlu0 %3507
        %3509 = vrot.lane.b32.xlu0 %v1171, 109
        %v3510 = vpop.permute.xlu0 %3509
        %3511 = vrot.lane.b32.xlu0 %v1172, 109
        %v3512 = vpop.permute.xlu0 %3511
        %3513 = vrot.lane.b32.xlu0 %v1176, 109
        %v3514 = vpop.permute.xlu0 %3513
        %3515 = vrot.lane.b32.xlu0 %v2977, 109
        %v3516 = vpop.permute.xlu0 %3515
        %3517 = vrot.lane.b32.xlu0 %v2966, 109
        %v3518 = vpop.permute.xlu0 %3517
        %3519 = vrot.lane.b32.xlu0 %v2967, 109
        %v3520 = vpop.permute.xlu0 %3519
        %3521 = vrot.lane.b32.xlu0 %v2968, 109
        %v3522 = vpop.permute.xlu0 %3521
        %3523 = vrot.lane.b32.xlu0 %v2978, 109
        %v3524 = vpop.permute.xlu0 %3523
        %vm3525 = vcmask 891904
        %v3526 = vsel %vm3525, %v3506, %v3508
        %v3527 = vsel %vm3525, %v3508, %v3510
        %v3528 = vsel %vm3525, %v3510, %v3512
        %v3529 = vsel %vm3525, %v3512, %v3514
        %v3530 = vsel %vm3525, %v3516, %v3518
        %v3531 = vsel %vm3525, %v3518, %v3520
        %v3532 = vsel %vm3525, %v3520, %v3522
        %v3533 = vsel %vm3525, %v3522, %v3524
        %3535 = vrot.lane.b32.xlu0 %v1170, 88
        %v3536 = vpop.permute.xlu0 %3535
        %3537 = vrot.lane.b32.xlu0 %v1171, 88
        %v3538 = vpop.permute.xlu0 %3537
        %3539 = vrot.lane.b32.xlu0 %v1172, 88
        %v3540 = vpop.permute.xlu0 %3539
        %3541 = vrot.lane.b32.xlu0 %v1176, 88
        %v3542 = vpop.permute.xlu0 %3541
        %3543 = vrot.lane.b32.xlu0 0.0, 88
        %v3544 = vpop.permute.xlu0 %3543
        %3545 = vrot.lane.b32.xlu0 %v2966, 88
        %v3546 = vpop.permute.xlu0 %3545
        %3547 = vrot.lane.b32.xlu0 %v2967, 88
        %v3548 = vpop.permute.xlu0 %3547
        %3549 = vrot.lane.b32.xlu0 %v2968, 88
        %v3550 = vpop.permute.xlu0 %3549
        %3551 = vrot.lane.b32.xlu0 %v2978, 88
        %v3552 = vpop.permute.xlu0 %3551
        %vm3553 = vcmask 719872
        %v3554 = vsel %vm3553, %v3536, %v3538
        %v3555 = vsel %vm3553, %v3538, %v3540
        %v3556 = vsel %vm3553, %v3540, %v3542
        %v3557 = vsel %vm3553, %v3542, %v3544
        %v3558 = vsel %vm3553, %v3546, %v3548
        %v3559 = vsel %vm3553, %v3548, %v3550
        %v3560 = vsel %vm3553, %v3550, %v3552
        %v3561 = vsel %vm3553, %v3552, %v3544
        %3562 = vrot.lane.b32.xlu0 %v1170, 87
        %v3563 = vpop.permute.xlu0 %3562
        %3564 = vrot.lane.b32.xlu0 %v1171, 87
        %v3565 = vpop.permute.xlu0 %3564
        %3566 = vrot.lane.b32.xlu0 %v1172, 87
        %v3567 = vpop.permute.xlu0 %3566
        %3568 = vrot.lane.b32.xlu0 %v1176, 87
        %v3569 = vpop.permute.xlu0 %3568
        %3570 = vrot.lane.b32.xlu0 0.0, 87
        %v3571 = vpop.permute.xlu0 %3570
        %3572 = vrot.lane.b32.xlu0 %v2966, 87
        %v3573 = vpop.permute.xlu0 %3572
        %3574 = vrot.lane.b32.xlu0 %v2967, 87
        %v3575 = vpop.permute.xlu0 %3574
        %3576 = vrot.lane.b32.xlu0 %v2968, 87
        %v3577 = vpop.permute.xlu0 %3576
        %3578 = vrot.lane.b32.xlu0 %v2978, 87
        %v3579 = vpop.permute.xlu0 %3578
        %vm3580 = vcmask 711680
        %v3581 = vsel %vm3580, %v3563, %v3565
        %v3582 = vsel %vm3580, %v3565, %v3567
        %v3583 = vsel %vm3580, %v3567, %v3569
        %v3584 = vsel %vm3580, %v3569, %v3571
        %v3585 = vsel %vm3580, %v3573, %v3575
        %v3586 = vsel %vm3580, %v3575, %v3577
        %v3587 = vsel %vm3580, %v3577, %v3579
        %v3588 = vsel %vm3580, %v3579, %v3571
        %3589 = vrot.lane.b32.xlu0 0.0, 86
        %v3590 = vpop.permute.xlu0 %3589
        %v3591 = vsel %vm3438, %v3427, %v3590
        %v3592 = vsel %vm3438, %v3437, %v3590
        %3593 = vrot.lane.b32.xlu0 0.0, 85
        %v3594 = vpop.permute.xlu0 %3593
        %v3595 = vsel %vm3467, %v3456, %v3594
        %v3596 = vsel %vm3467, %v3466, %v3594
        %3597 = vrot.lane.b32.xlu0 0.0, 84
        %v3598 = vpop.permute.xlu0 %3597
        %v3599 = vsel %vm816, %v1379, %v3598
        %v3600 = vsel %vm816, %v3340, %v3598
        %3601 = vrot.lane.b32.xlu0 0.0, 83
        %v3602 = vpop.permute.xlu0 %3601
        %v3603 = vsel %vm831, %v1393, %v3602
        %v3604 = vsel %vm831, %v3362, %v3602
        %3605 = vrot.lane.b32.xlu0 %v2977, 82
        %v3606 = vpop.permute.xlu0 %3605
        %3607 = vrot.lane.b32.xlu0 %v2966, 82
        %v3608 = vpop.permute.xlu0 %3607
        %3609 = vrot.lane.b32.xlu0 %v2967, 82
        %v3610 = vpop.permute.xlu0 %3609
        %3611 = vrot.lane.b32.xlu0 %v2968, 82
        %v3612 = vpop.permute.xlu0 %3611
        %3613 = vrot.lane.b32.xlu0 %v2978, 82
        %v3614 = vpop.permute.xlu0 %3613
        %3615 = vrot.lane.b32.xlu0 %v1194, 82
        %v3616 = vpop.permute.xlu0 %3615
        %3617 = vrot.lane.b32.xlu0 %v1195, 82
        %v3618 = vpop.permute.xlu0 %3617
        %3619 = vrot.lane.b32.xlu0 %v1196, 82
        %v3620 = vpop.permute.xlu0 %3619
        %3621 = vrot.lane.b32.xlu0 %v1197, 82
        %v3622 = vpop.permute.xlu0 %3621
        %3623 = vrot.lane.b32.xlu0 %v1193, 82
        %v3624 = vpop.permute.xlu0 %3623
        %3625 = vrot.lane.b32.xlu0 %v2999, 82
        %v3626 = vpop.permute.xlu0 %3625
        %3627 = vrot.lane.b32.xlu0 %v3000, 82
        %v3628 = vpop.permute.xlu0 %3627
        %3629 = vrot.lane.b32.xlu0 %v3001, 82
        %v3630 = vpop.permute.xlu0 %3629
        %3631 = vrot.lane.b32.xlu0 %v3002, 82
        %v3632 = vpop.permute.xlu0 %3631
        %3633 = vrot.lane.b32.xlu0 %v2998, 82
        %v3634 = vpop.permute.xlu0 %3633
        %3635 = vrot.lane.b32.xlu0 %v1208, 82
        %v3636 = vpop.permute.xlu0 %3635
        %3637 = vrot.lane.b32.xlu0 %v1209, 82
        %v3638 = vpop.permute.xlu0 %3637
        %3639 = vrot.lane.b32.xlu0 %v1210, 82
        %v3640 = vpop.permute.xlu0 %3639
        %3641 = vrot.lane.b32.xlu0 %v1211, 82
        %v3642 = vpop.permute.xlu0 %3641
        %3643 = vrot.lane.b32.xlu0 %v1207, 82
        %v3644 = vpop.permute.xlu0 %3643
        %3645 = vrot.lane.b32.xlu0 %v3021, 82
        %v3646 = vpop.permute.xlu0 %3645
        %3647 = vrot.lane.b32.xlu0 %v3022, 82
        %v3648 = vpop.permute.xlu0 %3647
        %3649 = vrot.lane.b32.xlu0 %v3023, 82
        %v3650 = vpop.permute.xlu0 %3649
        %3651 = vrot.lane.b32.xlu0 %v3024, 82
        %v3652 = vpop.permute.xlu0 %3651
        %3653 = vrot.lane.b32.xlu0 %v3020, 82
        %v3654 = vpop.permute.xlu0 %3653
        %3655 = vrot.lane.b32.xlu0 %v1237, 82
        %v3656 = vpop.permute.xlu0 %3655
        %3657 = vrot.lane.b32.xlu0 %v1238, 82
        %v3658 = vpop.permute.xlu0 %3657
        %3659 = vrot.lane.b32.xlu0 %v1239, 82
        %v3660 = vpop.permute.xlu0 %3659
        %3661 = vrot.lane.b32.xlu0 %v1240, 82
        %v3662 = vpop.permute.xlu0 %3661
        %3663 = vrot.lane.b32.xlu0 %v1231, 82
        %v3664 = vpop.permute.xlu0 %3663
        %3665 = vrot.lane.b32.xlu0 %v3043, 82
        %v3666 = vpop.permute.xlu0 %3665
        %3667 = vrot.lane.b32.xlu0 %v3044, 82
        %v3668 = vpop.permute.xlu0 %3667
        %3669 = vrot.lane.b32.xlu0 %v3045, 82
        %v3670 = vpop.permute.xlu0 %3669
        %3671 = vrot.lane.b32.xlu0 %v3046, 82
        %v3672 = vpop.permute.xlu0 %3671
        %3673 = vrot.lane.b32.xlu0 %v3042, 82
        %v3674 = vpop.permute.xlu0 %3673
        %3675 = vrot.lane.b32.xlu0 %v1266, 82
        %v3676 = vpop.permute.xlu0 %3675
        %3677 = vrot.lane.b32.xlu0 %v1267, 82
        %v3678 = vpop.permute.xlu0 %3677
        %3679 = vrot.lane.b32.xlu0 %v1268, 82
        %v3680 = vpop.permute.xlu0 %3679
        %3681 = vrot.lane.b32.xlu0 %v1269, 82
        %v3682 = vpop.permute.xlu0 %3681
        %3683 = vrot.lane.b32.xlu0 %v1260, 82
        %v3684 = vpop.permute.xlu0 %3683
        %3685 = vrot.lane.b32.xlu0 %v3065, 82
        %v3686 = vpop.permute.xlu0 %3685
        %3687 = vrot.lane.b32.xlu0 %v3066, 82
        %v3688 = vpop.permute.xlu0 %3687
        %3689 = vrot.lane.b32.xlu0 %v3067, 82
        %v3690 = vpop.permute.xlu0 %3689
        %3691 = vrot.lane.b32.xlu0 %v3068, 82
        %v3692 = vpop.permute.xlu0 %3691
        %3693 = vrot.lane.b32.xlu0 %v3064, 82
        %v3694 = vpop.permute.xlu0 %3693
        %3695 = vrot.lane.b32.xlu0 %v3396, 82
        %v3696 = vpop.permute.xlu0 %3695
        %3697 = vrot.lane.b32.xlu0 %v3397, 82
        %v3698 = vpop.permute.xlu0 %3697
        %3699 = vrot.lane.b32.xlu0 %v3398, 82
        %v3700 = vpop.permute.xlu0 %3699
        %3701 = vrot.lane.b32.xlu0 %v3399, 82
        %v3702 = vpop.permute.xlu0 %3701
        %3703 = vrot.lane.b32.xlu0 %v3384, 82
        %v3704 = vpop.permute.xlu0 %3703
        %3705 = vrot.lane.b32.xlu0 %v3400, 82
        %v3706 = vpop.permute.xlu0 %3705
        %3707 = vrot.lane.b32.xlu0 %v3401, 82
        %v3708 = vpop.permute.xlu0 %3707
        %3709 = vrot.lane.b32.xlu0 %v3402, 82
        %v3710 = vpop.permute.xlu0 %3709
        %3711 = vrot.lane.b32.xlu0 %v3403, 82
        %v3712 = vpop.permute.xlu0 %3711
        %3713 = vrot.lane.b32.xlu0 %v3394, 82
        %v3714 = vpop.permute.xlu0 %3713
        %3715 = vrot.lane.b32.xlu0 %v1524, 82
        %v3716 = vpop.permute.xlu0 %3715
        %3717 = vrot.lane.b32.xlu0 %v1525, 82
        %v3718 = vpop.permute.xlu0 %3717
        %3719 = vrot.lane.b32.xlu0 %v1526, 82
        %v3720 = vpop.permute.xlu0 %3719
        %3721 = vrot.lane.b32.xlu0 %v1527, 82
        %v3722 = vpop.permute.xlu0 %3721
        %3723 = vrot.lane.b32.xlu0 %v1518, 82
        %v3724 = vpop.permute.xlu0 %3723
        %3725 = vrot.lane.b32.xlu0 %v3414, 82
        %v3726 = vpop.permute.xlu0 %3725
        %3727 = vrot.lane.b32.xlu0 %v3415, 82
        %v3728 = vpop.permute.xlu0 %3727
        %3729 = vrot.lane.b32.xlu0 %v3416, 82
        %v3730 = vpop.permute.xlu0 %3729
        %3731 = vrot.lane.b32.xlu0 %v3417, 82
        %v3732 = vpop.permute.xlu0 %3731
        %3733 = vrot.lane.b32.xlu0 %v3413, 82
        %v3734 = vpop.permute.xlu0 %3733
        %3735 = vrot.lane.b32.xlu0 %v1280, 82
        %v3736 = vpop.permute.xlu0 %3735
        %3737 = vrot.lane.b32.xlu0 %v1281, 82
        %v3738 = vpop.permute.xlu0 %3737
        %3739 = vrot.lane.b32.xlu0 %v1282, 82
        %v3740 = vpop.permute.xlu0 %3739
        %3741 = vrot.lane.b32.xlu0 %v1283, 82
        %v3742 = vpop.permute.xlu0 %3741
        %3743 = vrot.lane.b32.xlu0 %v1279, 82
        %v3744 = vpop.permute.xlu0 %3743
        %3745 = vrot.lane.b32.xlu0 %v3161, 82
        %v3746 = vpop.permute.xlu0 %3745
        %3747 = vrot.lane.b32.xlu0 %v3162, 82
        %v3748 = vpop.permute.xlu0 %3747
        %3749 = vrot.lane.b32.xlu0 %v3163, 82
        %v3750 = vpop.permute.xlu0 %3749
        %3751 = vrot.lane.b32.xlu0 %v3164, 82
        %v3752 = vpop.permute.xlu0 %3751
        %3753 = vrot.lane.b32.xlu0 %v3160, 82
        %v3754 = vpop.permute.xlu0 %3753
        %3755 = vrot.lane.b32.xlu0 %v1294, 82
        %v3756 = vpop.permute.xlu0 %3755
        %3757 = vrot.lane.b32.xlu0 %v1295, 82
        %v3758 = vpop.permute.xlu0 %3757
        %3759 = vrot.lane.b32.xlu0 %v1296, 82
        %v3760 = vpop.permute.xlu0 %3759
        %3761 = vrot.lane.b32.xlu0 %v1297, 82
        %v3762 = vpop.permute.xlu0 %3761
        %3763 = vrot.lane.b32.xlu0 %v1293, 82
        %v3764 = vpop.permute.xlu0 %3763
        %3765 = vrot.lane.b32.xlu0 %v3183, 82
        %v3766 = vpop.permute.xlu0 %3765
        %3767 = vrot.lane.b32.xlu0 %v3184, 82
        %v3768 = vpop.permute.xlu0 %3767
        %3769 = vrot.lane.b32.xlu0 %v3185, 82
        %v3770 = vpop.permute.xlu0 %3769
        %3771 = vrot.lane.b32.xlu0 %v3186, 82
        %v3772 = vpop.permute.xlu0 %3771
        %3773 = vrot.lane.b32.xlu0 %v3182, 82
        %v3774 = vpop.permute.xlu0 %3773
        %3775 = vrot.lane.b32.xlu0 %v1308, 82
        %v3776 = vpop.permute.xlu0 %3775
        %3777 = vrot.lane.b32.xlu0 %v1309, 82
        %v3778 = vpop.permute.xlu0 %3777
        %3779 = vrot.lane.b32.xlu0 %v1310, 82
        %v3780 = vpop.permute.xlu0 %3779
        %3781 = vrot.lane.b32.xlu0 %v1311, 82
        %v3782 = vpop.permute.xlu0 %3781
        %3783 = vrot.lane.b32.xlu0 %v1307, 82
        %v3784 = vpop.permute.xlu0 %3783
        %3785 = vrot.lane.b32.xlu0 %v3201, 82
        %v3786 = vpop.permute.xlu0 %3785
        %3787 = vrot.lane.b32.xlu0 %v3202, 82
        %v3788 = vpop.permute.xlu0 %3787
        %3789 = vrot.lane.b32.xlu0 %v3203, 82
        %v3790 = vpop.permute.xlu0 %3789
        %3791 = vrot.lane.b32.xlu0 %v3204, 82
        %v3792 = vpop.permute.xlu0 %3791
        %3793 = vrot.lane.b32.xlu0 %v3200, 82
        %v3794 = vpop.permute.xlu0 %3793
        %3795 = vrot.lane.b32.xlu0 %v1337, 82
        %v3796 = vpop.permute.xlu0 %3795
        %3797 = vrot.lane.b32.xlu0 %v1338, 82
        %v3798 = vpop.permute.xlu0 %3797
        %3799 = vrot.lane.b32.xlu0 %v1339, 82
        %v3800 = vpop.permute.xlu0 %3799
        %3801 = vrot.lane.b32.xlu0 %v1340, 82
        %v3802 = vpop.permute.xlu0 %3801
        %3803 = vrot.lane.b32.xlu0 %v1331, 82
        %v3804 = vpop.permute.xlu0 %3803
        %3805 = vrot.lane.b32.xlu0 %v3223, 82
        %v3806 = vpop.permute.xlu0 %3805
        %3807 = vrot.lane.b32.xlu0 %v3224, 82
        %v3808 = vpop.permute.xlu0 %3807
        %3809 = vrot.lane.b32.xlu0 %v3225, 82
        %v3810 = vpop.permute.xlu0 %3809
        %3811 = vrot.lane.b32.xlu0 %v3226, 82
        %v3812 = vpop.permute.xlu0 %3811
        %3813 = vrot.lane.b32.xlu0 %v3222, 82
        %v3814 = vpop.permute.xlu0 %3813
        %3815 = vrot.lane.b32.xlu0 %v1366, 82
        %v3816 = vpop.permute.xlu0 %3815
        %3817 = vrot.lane.b32.xlu0 %v1367, 82
        %v3818 = vpop.permute.xlu0 %3817
        %3819 = vrot.lane.b32.xlu0 %v1368, 82
        %v3820 = vpop.permute.xlu0 %3819
        %3821 = vrot.lane.b32.xlu0 %v1369, 82
        %v3822 = vpop.permute.xlu0 %3821
        %3823 = vrot.lane.b32.xlu0 %v1360, 82
        %v3824 = vpop.permute.xlu0 %3823
        %3825 = vrot.lane.b32.xlu0 %v3245, 82
        %v3826 = vpop.permute.xlu0 %3825
        %3827 = vrot.lane.b32.xlu0 %v3246, 82
        %v3828 = vpop.permute.xlu0 %3827
        %3829 = vrot.lane.b32.xlu0 %v3247, 82
        %v3830 = vpop.permute.xlu0 %3829
        %3831 = vrot.lane.b32.xlu0 %v3248, 82
        %v3832 = vpop.permute.xlu0 %3831
        %3833 = vrot.lane.b32.xlu0 %v3244, 82
        %v3834 = vpop.permute.xlu0 %3833
        %3835 = vrot.lane.b32.xlu0 %v3439, 82
        %v3836 = vpop.permute.xlu0 %3835
        %3837 = vrot.lane.b32.xlu0 %v3440, 82
        %v3838 = vpop.permute.xlu0 %3837
        %3839 = vrot.lane.b32.xlu0 %v3441, 82
        %v3840 = vpop.permute.xlu0 %3839
        %3841 = vrot.lane.b32.xlu0 %v3442, 82
        %v3842 = vpop.permute.xlu0 %3841
        %3843 = vrot.lane.b32.xlu0 %v3427, 82
        %v3844 = vpop.permute.xlu0 %3843
        %3845 = vrot.lane.b32.xlu0 %v3443, 82
        %v3846 = vpop.permute.xlu0 %3845
        %3847 = vrot.lane.b32.xlu0 %v3444, 82
        %v3848 = vpop.permute.xlu0 %3847
        %3849 = vrot.lane.b32.xlu0 %v3445, 82
        %v3850 = vpop.permute.xlu0 %3849
        %3851 = vrot.lane.b32.xlu0 %v3446, 82
        %v3852 = vpop.permute.xlu0 %3851
        %3853 = vrot.lane.b32.xlu0 %v3437, 82
        %v3854 = vpop.permute.xlu0 %3853
        %3855 = vrot.lane.b32.xlu0 %v3468, 82
        %v3856 = vpop.permute.xlu0 %3855
        %3857 = vrot.lane.b32.xlu0 %v3469, 82
        %v3858 = vpop.permute.xlu0 %3857
        %3859 = vrot.lane.b32.xlu0 %v3470, 82
        %v3860 = vpop.permute.xlu0 %3859
        %3861 = vrot.lane.b32.xlu0 %v3471, 82
        %v3862 = vpop.permute.xlu0 %3861
        %3863 = vrot.lane.b32.xlu0 %v3456, 82
        %v3864 = vpop.permute.xlu0 %3863
        %3865 = vrot.lane.b32.xlu0 %v3472, 82
        %v3866 = vpop.permute.xlu0 %3865
        %3867 = vrot.lane.b32.xlu0 %v3473, 82
        %v3868 = vpop.permute.xlu0 %3867
        %3869 = vrot.lane.b32.xlu0 %v3474, 82
        %v3870 = vpop.permute.xlu0 %3869
        %3871 = vrot.lane.b32.xlu0 %v3475, 82
        %v3872 = vpop.permute.xlu0 %3871
        %3873 = vrot.lane.b32.xlu0 %v3466, 82
        %v3874 = vpop.permute.xlu0 %3873
        %3875 = vrot.lane.b32.xlu0 %v1380, 82
        %v3876 = vpop.permute.xlu0 %3875
        %3877 = vrot.lane.b32.xlu0 %v1381, 82
        %v3878 = vpop.permute.xlu0 %3877
        %3879 = vrot.lane.b32.xlu0 %v1382, 82
        %v3880 = vpop.permute.xlu0 %3879
        %3881 = vrot.lane.b32.xlu0 %v1383, 82
        %v3882 = vpop.permute.xlu0 %3881
        %3883 = vrot.lane.b32.xlu0 %v1379, 82
        %v3884 = vpop.permute.xlu0 %3883
        %3885 = vrot.lane.b32.xlu0 %v3341, 82
        %v3886 = vpop.permute.xlu0 %3885
        %3887 = vrot.lane.b32.xlu0 %v3342, 82
        %v3888 = vpop.permute.xlu0 %3887
        %3889 = vrot.lane.b32.xlu0 %v3343, 82
        %v3890 = vpop.permute.xlu0 %3889
        %3891 = vrot.lane.b32.xlu0 %v3344, 82
        %v3892 = vpop.permute.xlu0 %3891
        %3893 = vrot.lane.b32.xlu0 %v3340, 82
        %v3894 = vpop.permute.xlu0 %3893
        %3895 = vrot.lane.b32.xlu0 %v1394, 82
        %v3896 = vpop.permute.xlu0 %3895
        %3897 = vrot.lane.b32.xlu0 %v1395, 82
        %v3898 = vpop.permute.xlu0 %3897
        %3899 = vrot.lane.b32.xlu0 %v1396, 82
        %v3900 = vpop.permute.xlu0 %3899
        %3901 = vrot.lane.b32.xlu0 %v1397, 82
        %v3902 = vpop.permute.xlu0 %3901
        %3903 = vrot.lane.b32.xlu0 %v1393, 82
        %v3904 = vpop.permute.xlu0 %3903
        %3905 = vrot.lane.b32.xlu0 %v3363, 82
        %v3906 = vpop.permute.xlu0 %3905
        %3907 = vrot.lane.b32.xlu0 %v3364, 82
        %v3908 = vpop.permute.xlu0 %3907
        %3909 = vrot.lane.b32.xlu0 %v3365, 82
        %v3910 = vpop.permute.xlu0 %3909
        %3911 = vrot.lane.b32.xlu0 %v3366, 82
        %v3912 = vpop.permute.xlu0 %3911
        %3913 = vrot.lane.b32.xlu0 %v3362, 82
        %v3914 = vpop.permute.xlu0 %3913
        %v3915 = vsel %vm846, %v3606, %v3608
        %v3916 = vsel %vm846, %v3608, %v3610
        %v3917 = vsel %vm846, %v3610, %v3612
        %v3918 = vsel %vm846, %v3612, %v3614
        %v3919 = vsel %vm846, %v3616, %v3618
        %v3920 = vsel %vm846, %v3618, %v3620
        %v3921 = vsel %vm846, %v3620, %v3622
        %v3922 = vsel %vm846, %v3622, %v3624
        %v3923 = vsel %vm846, %v3626, %v3628
        %v3924 = vsel %vm846, %v3628, %v3630
        %v3925 = vsel %vm846, %v3630, %v3632
        %v3926 = vsel %vm846, %v3632, %v3634
        %v3927 = vsel %vm846, %v3636, %v3638
        %v3928 = vsel %vm846, %v3638, %v3640
        %v3929 = vsel %vm846, %v3640, %v3642
        %v3930 = vsel %vm846, %v3642, %v3644
        %v3931 = vsel %vm846, %v3646, %v3648
        %v3932 = vsel %vm846, %v3648, %v3650
        %v3933 = vsel %vm846, %v3650, %v3652
        %v3934 = vsel %vm846, %v3652, %v3654
        %v3935 = vsel %vm846, %v3656, %v3658
        %v3936 = vsel %vm846, %v3658, %v3660
        %v3937 = vsel %vm846, %v3660, %v3662
        %v3938 = vsel %vm846, %v3662, %v3664
        %v3939 = vsel %vm846, %v3666, %v3668
        %v3940 = vsel %vm846, %v3668, %v3670
        %v3941 = vsel %vm846, %v3670, %v3672
        %v3942 = vsel %vm846, %v3672, %v3674
        %v3943 = vsel %vm846, %v3676, %v3678
        %v3944 = vsel %vm846, %v3678, %v3680
        %v3945 = vsel %vm846, %v3680, %v3682
        %v3946 = vsel %vm846, %v3682, %v3684
        %v3947 = vsel %vm846, %v3686, %v3688
        %v3948 = vsel %vm846, %v3688, %v3690
        %v3949 = vsel %vm846, %v3690, %v3692
        %v3950 = vsel %vm846, %v3692, %v3694
        %v3951 = vsel %vm846, %v3696, %v3698
        %v3952 = vsel %vm846, %v3698, %v3700
        %v3953 = vsel %vm846, %v3700, %v3702
        %v3954 = vsel %vm846, %v3702, %v3704
        %v3955 = vsel %vm846, %v3706, %v3708
        %v3956 = vsel %vm846, %v3708, %v3710
        %v3957 = vsel %vm846, %v3710, %v3712
        %v3958 = vsel %vm846, %v3712, %v3714
        %v3959 = vsel %vm846, %v3716, %v3718
        %v3960 = vsel %vm846, %v3718, %v3720
        %v3961 = vsel %vm846, %v3720, %v3722
        %v3962 = vsel %vm846, %v3722, %v3724
        %v3963 = vsel %vm846, %v3726, %v3728
        %v3964 = vsel %vm846, %v3728, %v3730
        %v3965 = vsel %vm846, %v3730, %v3732
        %v3966 = vsel %vm846, %v3732, %v3734
        %v3967 = vsel %vm846, %v3736, %v3738
        %v3968 = vsel %vm846, %v3738, %v3740
        %v3969 = vsel %vm846, %v3740, %v3742
        %v3970 = vsel %vm846, %v3742, %v3744
        %v3971 = vsel %vm846, %v3746, %v3748
        %v3972 = vsel %vm846, %v3748, %v3750
        %v3973 = vsel %vm846, %v3750, %v3752
        %v3974 = vsel %vm846, %v3752, %v3754
        %v3975 = vsel %vm846, %v3756, %v3758
        %v3976 = vsel %vm846, %v3758, %v3760
        %v3977 = vsel %vm846, %v3760, %v3762
        %v3978 = vsel %vm846, %v3762, %v3764
        %v3979 = vsel %vm846, %v3766, %v3768
        %v3980 = vsel %vm846, %v3768, %v3770
        %v3981 = vsel %vm846, %v3770, %v3772
        %v3982 = vsel %vm846, %v3772, %v3774
        %v3983 = vsel %vm846, %v3776, %v3778
        %v3984 = vsel %vm846, %v3778, %v3780
        %v3985 = vsel %vm846, %v3780, %v3782
        %v3986 = vsel %vm846, %v3782, %v3784
        %v3987 = vsel %vm846, %v3786, %v3788
        %v3988 = vsel %vm846, %v3788, %v3790
        %v3989 = vsel %vm846, %v3790, %v3792
        %v3990 = vsel %vm846, %v3792, %v3794
        %v3991 = vsel %vm846, %v3796, %v3798
        %v3992 = vsel %vm846, %v3798, %v3800
        %v3993 = vsel %vm846, %v3800, %v3802
        %v3994 = vsel %vm846, %v3802, %v3804
        %v3995 = vsel %vm846, %v3806, %v3808
        %v3996 = vsel %vm846, %v3808, %v3810
        %v3997 = vsel %vm846, %v3810, %v3812
        %v3998 = vsel %vm846, %v3812, %v3814
        %v3999 = vsel %vm846, %v3816, %v3818
        %v4000 = vsel %vm846, %v3818, %v3820
        %v4001 = vsel %vm846, %v3820, %v3822
        %v4002 = vsel %vm846, %v3822, %v3824
        %v4003 = vsel %vm846, %v3826, %v3828
        %v4004 = vsel %vm846, %v3828, %v3830
        %v4005 = vsel %vm846, %v3830, %v3832
        %v4006 = vsel %vm846, %v3832, %v3834
        %v4007 = vsel %vm846, %v3836, %v3838
        %v4008 = vsel %vm846, %v3838, %v3840
        %v4009 = vsel %vm846, %v3840, %v3842
        %v4010 = vsel %vm846, %v3842, %v3844
        %v4011 = vsel %vm846, %v3846, %v3848
        %v4012 = vsel %vm846, %v3848, %v3850
        %v4013 = vsel %vm846, %v3850, %v3852
        %v4014 = vsel %vm846, %v3852, %v3854
        %v4015 = vsel %vm846, %v3856, %v3858
        %v4016 = vsel %vm846, %v3858, %v3860
        %v4017 = vsel %vm846, %v3860, %v3862
        %v4018 = vsel %vm846, %v3862, %v3864
        %v4019 = vsel %vm846, %v3866, %v3868
        %v4020 = vsel %vm846, %v3868, %v3870
        %v4021 = vsel %vm846, %v3870, %v3872
        %v4022 = vsel %vm846, %v3872, %v3874
        %v4023 = vsel %vm846, %v3876, %v3878
        %v4024 = vsel %vm846, %v3878, %v3880
        %v4025 = vsel %vm846, %v3880, %v3882
        %v4026 = vsel %vm846, %v3882, %v3884
        %v4027 = vsel %vm846, %v3886, %v3888
        %v4028 = vsel %vm846, %v3888, %v3890
        %v4029 = vsel %vm846, %v3890, %v3892
        %v4030 = vsel %vm846, %v3892, %v3894
        %v4031 = vsel %vm846, %v3896, %v3898
        %v4032 = vsel %vm846, %v3898, %v3900
        %v4033 = vsel %vm846, %v3900, %v3902
        %v4034 = vsel %vm846, %v3902, %v3904
        %v4035 = vsel %vm846, %v3906, %v3908
        %v4036 = vsel %vm846, %v3908, %v3910
        %v4037 = vsel %vm846, %v3910, %v3912
        %v4038 = vsel %vm846, %v3912, %v3914
        %4167 = vrot.lane.b32.xlu0 %v1175, 36
        %v4168 = vpop.permute.xlu0 %4167
        %4169 = vrot.lane.b32.xlu0 %v1170, 36
        %v4170 = vpop.permute.xlu0 %4169
        %4171 = vrot.lane.b32.xlu0 %v1171, 36
        %v4172 = vpop.permute.xlu0 %4171
        %4173 = vrot.lane.b32.xlu0 %v1172, 36
        %v4174 = vpop.permute.xlu0 %4173
        %4175 = vrot.lane.b32.xlu0 %v1176, 36
        %v4176 = vpop.permute.xlu0 %4175
        %4177 = vrot.lane.b32.xlu0 %v2977, 36
        %v4178 = vpop.permute.xlu0 %4177
        %4179 = vrot.lane.b32.xlu0 %v2966, 36
        %v4180 = vpop.permute.xlu0 %4179
        %4181 = vrot.lane.b32.xlu0 %v2967, 36
        %v4182 = vpop.permute.xlu0 %4181
        %4183 = vrot.lane.b32.xlu0 %v2968, 36
        %v4184 = vpop.permute.xlu0 %4183
        %4185 = vrot.lane.b32.xlu0 %v2978, 36
        %v4186 = vpop.permute.xlu0 %4185
        %4187 = vrot.lane.b32.xlu0 %v1194, 36
        %v4188 = vpop.permute.xlu0 %4187
        %4189 = vrot.lane.b32.xlu0 %v1195, 36
        %v4190 = vpop.permute.xlu0 %4189
        %4191 = vrot.lane.b32.xlu0 %v1196, 36
        %v4192 = vpop.permute.xlu0 %4191
        %4193 = vrot.lane.b32.xlu0 %v1197, 36
        %v4194 = vpop.permute.xlu0 %4193
        %4195 = vrot.lane.b32.xlu0 %v1193, 36
        %v4196 = vpop.permute.xlu0 %4195
        %4197 = vrot.lane.b32.xlu0 %v2999, 36
        %v4198 = vpop.permute.xlu0 %4197
        %4199 = vrot.lane.b32.xlu0 %v3000, 36
        %v4200 = vpop.permute.xlu0 %4199
        %4201 = vrot.lane.b32.xlu0 %v3001, 36
        %v4202 = vpop.permute.xlu0 %4201
        %4203 = vrot.lane.b32.xlu0 %v3002, 36
        %v4204 = vpop.permute.xlu0 %4203
        %4205 = vrot.lane.b32.xlu0 %v2998, 36
        %v4206 = vpop.permute.xlu0 %4205
        %4207 = vrot.lane.b32.xlu0 %v1208, 36
        %v4208 = vpop.permute.xlu0 %4207
        %4209 = vrot.lane.b32.xlu0 %v1209, 36
        %v4210 = vpop.permute.xlu0 %4209
        %4211 = vrot.lane.b32.xlu0 %v1210, 36
        %v4212 = vpop.permute.xlu0 %4211
        %4213 = vrot.lane.b32.xlu0 %v1211, 36
        %v4214 = vpop.permute.xlu0 %4213
        %4215 = vrot.lane.b32.xlu0 %v1207, 36
        %v4216 = vpop.permute.xlu0 %4215
        %4217 = vrot.lane.b32.xlu0 %v3021, 36
        %v4218 = vpop.permute.xlu0 %4217
        %4219 = vrot.lane.b32.xlu0 %v3022, 36
        %v4220 = vpop.permute.xlu0 %4219
        %4221 = vrot.lane.b32.xlu0 %v3023, 36
        %v4222 = vpop.permute.xlu0 %4221
        %4223 = vrot.lane.b32.xlu0 %v3024, 36
        %v4224 = vpop.permute.xlu0 %4223
        %4225 = vrot.lane.b32.xlu0 %v3020, 36
        %v4226 = vpop.permute.xlu0 %4225
        %4227 = vrot.lane.b32.xlu0 %v3497, 36
        %v4228 = vpop.permute.xlu0 %4227
        %4229 = vrot.lane.b32.xlu0 %v3498, 36
        %v4230 = vpop.permute.xlu0 %4229
        %4231 = vrot.lane.b32.xlu0 %v3499, 36
        %v4232 = vpop.permute.xlu0 %4231
        %4233 = vrot.lane.b32.xlu0 %v3500, 36
        %v4234 = vpop.permute.xlu0 %4233
        %4235 = vrot.lane.b32.xlu0 %v3485, 36
        %v4236 = vpop.permute.xlu0 %4235
        %4237 = vrot.lane.b32.xlu0 %v3501, 36
        %v4238 = vpop.permute.xlu0 %4237
        %4239 = vrot.lane.b32.xlu0 %v3502, 36
        %v4240 = vpop.permute.xlu0 %4239
        %4241 = vrot.lane.b32.xlu0 %v3503, 36
        %v4242 = vpop.permute.xlu0 %4241
        %4243 = vrot.lane.b32.xlu0 %v3504, 36
        %v4244 = vpop.permute.xlu0 %4243
        %4245 = vrot.lane.b32.xlu0 %v3495, 36
        %v4246 = vpop.permute.xlu0 %4245
        %4247 = vrot.lane.b32.xlu0 %v3526, 36
        %v4248 = vpop.permute.xlu0 %4247
        %4249 = vrot.lane.b32.xlu0 %v3527, 36
        %v4250 = vpop.permute.xlu0 %4249
        %4251 = vrot.lane.b32.xlu0 %v3528, 36
        %v4252 = vpop.permute.xlu0 %4251
        %4253 = vrot.lane.b32.xlu0 %v3529, 36
        %v4254 = vpop.permute.xlu0 %4253
        %4255 = vrot.lane.b32.xlu0 %v3514, 36
        %v4256 = vpop.permute.xlu0 %4255
        %4257 = vrot.lane.b32.xlu0 %v3530, 36
        %v4258 = vpop.permute.xlu0 %4257
        %4259 = vrot.lane.b32.xlu0 %v3531, 36
        %v4260 = vpop.permute.xlu0 %4259
        %4261 = vrot.lane.b32.xlu0 %v3532, 36
        %v4262 = vpop.permute.xlu0 %4261
        %4263 = vrot.lane.b32.xlu0 %v3533, 36
        %v4264 = vpop.permute.xlu0 %4263
        %4265 = vrot.lane.b32.xlu0 %v3524, 36
        %v4266 = vpop.permute.xlu0 %4265
        %4267 = vrot.lane.b32.xlu0 %v3396, 36
        %v4268 = vpop.permute.xlu0 %4267
        %4269 = vrot.lane.b32.xlu0 %v3397, 36
        %v4270 = vpop.permute.xlu0 %4269
        %4271 = vrot.lane.b32.xlu0 %v3398, 36
        %v4272 = vpop.permute.xlu0 %4271
        %4273 = vrot.lane.b32.xlu0 %v3399, 36
        %v4274 = vpop.permute.xlu0 %4273
        %4275 = vrot.lane.b32.xlu0 %v3384, 36
        %v4276 = vpop.permute.xlu0 %4275
        %4277 = vrot.lane.b32.xlu0 %v3400, 36
        %v4278 = vpop.permute.xlu0 %4277
        %4279 = vrot.lane.b32.xlu0 %v3401, 36
        %v4280 = vpop.permute.xlu0 %4279
        %4281 = vrot.lane.b32.xlu0 %v3402, 36
        %v4282 = vpop.permute.xlu0 %4281
        %4283 = vrot.lane.b32.xlu0 %v3403, 36
        %v4284 = vpop.permute.xlu0 %4283
        %4285 = vrot.lane.b32.xlu0 %v3394, 36
        %v4286 = vpop.permute.xlu0 %4285
        %4287 = vrot.lane.b32.xlu0 %v1524, 36
        %v4288 = vpop.permute.xlu0 %4287
        %4289 = vrot.lane.b32.xlu0 %v1525, 36
        %v4290 = vpop.permute.xlu0 %4289
        %4291 = vrot.lane.b32.xlu0 %v1526, 36
        %v4292 = vpop.permute.xlu0 %4291
        %4293 = vrot.lane.b32.xlu0 %v1527, 36
        %v4294 = vpop.permute.xlu0 %4293
        %4295 = vrot.lane.b32.xlu0 %v1518, 36
        %v4296 = vpop.permute.xlu0 %4295
        %4297 = vrot.lane.b32.xlu0 %v3414, 36
        %v4298 = vpop.permute.xlu0 %4297
        %4299 = vrot.lane.b32.xlu0 %v3415, 36
        %v4300 = vpop.permute.xlu0 %4299
        %4301 = vrot.lane.b32.xlu0 %v3416, 36
        %v4302 = vpop.permute.xlu0 %4301
        %4303 = vrot.lane.b32.xlu0 %v3417, 36
        %v4304 = vpop.permute.xlu0 %4303
        %4305 = vrot.lane.b32.xlu0 %v3413, 36
        %v4306 = vpop.permute.xlu0 %4305
        %4307 = vrot.lane.b32.xlu0 %v1280, 36
        %v4308 = vpop.permute.xlu0 %4307
        %4309 = vrot.lane.b32.xlu0 %v1281, 36
        %v4310 = vpop.permute.xlu0 %4309
        %4311 = vrot.lane.b32.xlu0 %v1282, 36
        %v4312 = vpop.permute.xlu0 %4311
        %4313 = vrot.lane.b32.xlu0 %v1283, 36
        %v4314 = vpop.permute.xlu0 %4313
        %4315 = vrot.lane.b32.xlu0 %v1279, 36
        %v4316 = vpop.permute.xlu0 %4315
        %4317 = vrot.lane.b32.xlu0 %v3161, 36
        %v4318 = vpop.permute.xlu0 %4317
        %4319 = vrot.lane.b32.xlu0 %v3162, 36
        %v4320 = vpop.permute.xlu0 %4319
        %4321 = vrot.lane.b32.xlu0 %v3163, 36
        %v4322 = vpop.permute.xlu0 %4321
        %4323 = vrot.lane.b32.xlu0 %v3164, 36
        %v4324 = vpop.permute.xlu0 %4323
        %4325 = vrot.lane.b32.xlu0 %v3160, 36
        %v4326 = vpop.permute.xlu0 %4325
        %4327 = vrot.lane.b32.xlu0 %v1294, 36
        %v4328 = vpop.permute.xlu0 %4327
        %4329 = vrot.lane.b32.xlu0 %v1295, 36
        %v4330 = vpop.permute.xlu0 %4329
        %4331 = vrot.lane.b32.xlu0 %v1296, 36
        %v4332 = vpop.permute.xlu0 %4331
        %4333 = vrot.lane.b32.xlu0 %v1297, 36
        %v4334 = vpop.permute.xlu0 %4333
        %4335 = vrot.lane.b32.xlu0 %v1293, 36
        %v4336 = vpop.permute.xlu0 %4335
        %4337 = vrot.lane.b32.xlu0 %v3183, 36
        %v4338 = vpop.permute.xlu0 %4337
        %4339 = vrot.lane.b32.xlu0 %v3184, 36
        %v4340 = vpop.permute.xlu0 %4339
        %4341 = vrot.lane.b32.xlu0 %v3185, 36
        %v4342 = vpop.permute.xlu0 %4341
        %4343 = vrot.lane.b32.xlu0 %v3186, 36
        %v4344 = vpop.permute.xlu0 %4343
        %4345 = vrot.lane.b32.xlu0 %v3182, 36
        %v4346 = vpop.permute.xlu0 %4345
        %4347 = vrot.lane.b32.xlu0 %v1308, 36
        %v4348 = vpop.permute.xlu0 %4347
        %4349 = vrot.lane.b32.xlu0 %v1309, 36
        %v4350 = vpop.permute.xlu0 %4349
        %4351 = vrot.lane.b32.xlu0 %v1310, 36
        %v4352 = vpop.permute.xlu0 %4351
        %4353 = vrot.lane.b32.xlu0 %v1311, 36
        %v4354 = vpop.permute.xlu0 %4353
        %4355 = vrot.lane.b32.xlu0 %v1307, 36
        %v4356 = vpop.permute.xlu0 %4355
        %4357 = vrot.lane.b32.xlu0 %v3201, 36
        %v4358 = vpop.permute.xlu0 %4357
        %4359 = vrot.lane.b32.xlu0 %v3202, 36
        %v4360 = vpop.permute.xlu0 %4359
        %4361 = vrot.lane.b32.xlu0 %v3203, 36
        %v4362 = vpop.permute.xlu0 %4361
        %4363 = vrot.lane.b32.xlu0 %v3204, 36
        %v4364 = vpop.permute.xlu0 %4363
        %4365 = vrot.lane.b32.xlu0 %v3200, 36
        %v4366 = vpop.permute.xlu0 %4365
        %4367 = vrot.lane.b32.xlu0 %v3536, 36
        %v4368 = vpop.permute.xlu0 %4367
        %4369 = vrot.lane.b32.xlu0 %v3554, 36
        %v4370 = vpop.permute.xlu0 %4369
        %4371 = vrot.lane.b32.xlu0 %v3555, 36
        %v4372 = vpop.permute.xlu0 %4371
        %4373 = vrot.lane.b32.xlu0 %v3556, 36
        %v4374 = vpop.permute.xlu0 %4373
        %4375 = vrot.lane.b32.xlu0 %v3557, 36
        %v4376 = vpop.permute.xlu0 %4375
        %4377 = vrot.lane.b32.xlu0 %v3546, 36
        %v4378 = vpop.permute.xlu0 %4377
        %4379 = vrot.lane.b32.xlu0 %v3558, 36
        %v4380 = vpop.permute.xlu0 %4379
        %4381 = vrot.lane.b32.xlu0 %v3559, 36
        %v4382 = vpop.permute.xlu0 %4381
        %4383 = vrot.lane.b32.xlu0 %v3560, 36
        %v4384 = vpop.permute.xlu0 %4383
        %4385 = vrot.lane.b32.xlu0 %v3561, 36
        %v4386 = vpop.permute.xlu0 %4385
        %4387 = vrot.lane.b32.xlu0 %v3563, 36
        %v4388 = vpop.permute.xlu0 %4387
        %4389 = vrot.lane.b32.xlu0 %v3581, 36
        %v4390 = vpop.permute.xlu0 %4389
        %4391 = vrot.lane.b32.xlu0 %v3582, 36
        %v4392 = vpop.permute.xlu0 %4391
        %4393 = vrot.lane.b32.xlu0 %v3583, 36
        %v4394 = vpop.permute.xlu0 %4393
        %4395 = vrot.lane.b32.xlu0 %v3584, 36
        %v4396 = vpop.permute.xlu0 %4395
        %4397 = vrot.lane.b32.xlu0 %v3573, 36
        %v4398 = vpop.permute.xlu0 %4397
        %4399 = vrot.lane.b32.xlu0 %v3585, 36
        %v4400 = vpop.permute.xlu0 %4399
        %4401 = vrot.lane.b32.xlu0 %v3586, 36
        %v4402 = vpop.permute.xlu0 %4401
        %4403 = vrot.lane.b32.xlu0 %v3587, 36
        %v4404 = vpop.permute.xlu0 %4403
        %4405 = vrot.lane.b32.xlu0 %v3588, 36
        %v4406 = vpop.permute.xlu0 %4405
        %4407 = vrot.lane.b32.xlu0 %v3421, 36
        %v4408 = vpop.permute.xlu0 %4407
        %4409 = vrot.lane.b32.xlu0 %v3440, 36
        %v4410 = vpop.permute.xlu0 %4409
        %4411 = vrot.lane.b32.xlu0 %v3441, 36
        %v4412 = vpop.permute.xlu0 %4411
        %4413 = vrot.lane.b32.xlu0 %v3442, 36
        %v4414 = vpop.permute.xlu0 %4413
        %4415 = vrot.lane.b32.xlu0 %v3591, 36
        %v4416 = vpop.permute.xlu0 %4415
        %4417 = vrot.lane.b32.xlu0 %v3431, 36
        %v4418 = vpop.permute.xlu0 %4417
        %4419 = vrot.lane.b32.xlu0 %v3444, 36
        %v4420 = vpop.permute.xlu0 %4419
        %4421 = vrot.lane.b32.xlu0 %v3445, 36
        %v4422 = vpop.permute.xlu0 %4421
        %4423 = vrot.lane.b32.xlu0 %v3446, 36
        %v4424 = vpop.permute.xlu0 %4423
        %4425 = vrot.lane.b32.xlu0 %v3592, 36
        %v4426 = vpop.permute.xlu0 %4425
        %4427 = vrot.lane.b32.xlu0 %v3450, 36
        %v4428 = vpop.permute.xlu0 %4427
        %4429 = vrot.lane.b32.xlu0 %v3469, 36
        %v4430 = vpop.permute.xlu0 %4429
        %4431 = vrot.lane.b32.xlu0 %v3470, 36
        %v4432 = vpop.permute.xlu0 %4431
        %4433 = vrot.lane.b32.xlu0 %v3471, 36
        %v4434 = vpop.permute.xlu0 %4433
        %4435 = vrot.lane.b32.xlu0 %v3595, 36
        %v4436 = vpop.permute.xlu0 %4435
        %4437 = vrot.lane.b32.xlu0 %v3460, 36
        %v4438 = vpop.permute.xlu0 %4437
        %4439 = vrot.lane.b32.xlu0 %v3473, 36
        %v4440 = vpop.permute.xlu0 %4439
        %4441 = vrot.lane.b32.xlu0 %v3474, 36
        %v4442 = vpop.permute.xlu0 %4441
        %4443 = vrot.lane.b32.xlu0 %v3475, 36
        %v4444 = vpop.permute.xlu0 %4443
        %4445 = vrot.lane.b32.xlu0 %v3596, 36
        %v4446 = vpop.permute.xlu0 %4445
        %4447 = vrot.lane.b32.xlu0 %v1373, 36
        %v4448 = vpop.permute.xlu0 %4447
        %4449 = vrot.lane.b32.xlu0 %v1381, 36
        %v4450 = vpop.permute.xlu0 %4449
        %4451 = vrot.lane.b32.xlu0 %v1382, 36
        %v4452 = vpop.permute.xlu0 %4451
        %4453 = vrot.lane.b32.xlu0 %v1383, 36
        %v4454 = vpop.permute.xlu0 %4453
        %4455 = vrot.lane.b32.xlu0 %v3599, 36
        %v4456 = vpop.permute.xlu0 %4455
        %4457 = vrot.lane.b32.xlu0 %v3334, 36
        %v4458 = vpop.permute.xlu0 %4457
        %4459 = vrot.lane.b32.xlu0 %v3342, 36
        %v4460 = vpop.permute.xlu0 %4459
        %4461 = vrot.lane.b32.xlu0 %v3343, 36
        %v4462 = vpop.permute.xlu0 %4461
        %4463 = vrot.lane.b32.xlu0 %v3344, 36
        %v4464 = vpop.permute.xlu0 %4463
        %4465 = vrot.lane.b32.xlu0 %v3600, 36
        %v4466 = vpop.permute.xlu0 %4465
        %4467 = vrot.lane.b32.xlu0 %v1387, 36
        %v4468 = vpop.permute.xlu0 %4467
        %4469 = vrot.lane.b32.xlu0 %v1395, 36
        %v4470 = vpop.permute.xlu0 %4469
        %4471 = vrot.lane.b32.xlu0 %v1396, 36
        %v4472 = vpop.permute.xlu0 %4471
        %4473 = vrot.lane.b32.xlu0 %v1397, 36
        %v4474 = vpop.permute.xlu0 %4473
        %4475 = vrot.lane.b32.xlu0 %v3603, 36
        %v4476 = vpop.permute.xlu0 %4475
        %4477 = vrot.lane.b32.xlu0 %v3356, 36
        %v4478 = vpop.permute.xlu0 %4477
        %4479 = vrot.lane.b32.xlu0 %v3364, 36
        %v4480 = vpop.permute.xlu0 %4479
        %4481 = vrot.lane.b32.xlu0 %v3365, 36
        %v4482 = vpop.permute.xlu0 %4481
        %4483 = vrot.lane.b32.xlu0 %v3366, 36
        %v4484 = vpop.permute.xlu0 %4483
        %4485 = vrot.lane.b32.xlu0 %v3604, 36
        %v4486 = vpop.permute.xlu0 %4485
        %vm4487 = vcmask 293888
        %v4488 = vsel %vm4487, %v4168, %v4170
        %v4489 = vsel %vm4487, %v4170, %v4172
        %v4490 = vsel %vm4487, %v4172, %v4174
        %v4491 = vsel %vm4487, %v4174, %v4176
        %v4492 = vsel %vm4487, %v4178, %v4180
        %v4493 = vsel %vm4487, %v4180, %v4182
        %v4494 = vsel %vm4487, %v4182, %v4184
        %v4495 = vsel %vm4487, %v4184, %v4186
        %v4496 = vsel %vm4487, %v4188, %v4190
        %v4497 = vsel %vm4487, %v4190, %v4192
        %v4498 = vsel %vm4487, %v4192, %v4194
        %v4499 = vsel %vm4487, %v4194, %v4196
        %v4500 = vsel %vm4487, %v4198, %v4200
        %v4501 = vsel %vm4487, %v4200, %v4202
        %v4502 = vsel %vm4487, %v4202, %v4204
        %v4503 = vsel %vm4487, %v4204, %v4206
        %v4504 = vsel %vm4487, %v4208, %v4210
        %v4505 = vsel %vm4487, %v4210, %v4212
        %v4506 = vsel %vm4487, %v4212, %v4214
        %v4507 = vsel %vm4487, %v4214, %v4216
        %v4508 = vsel %vm4487, %v4218, %v4220
        %v4509 = vsel %vm4487, %v4220, %v4222
        %v4510 = vsel %vm4487, %v4222, %v4224
        %v4511 = vsel %vm4487, %v4224, %v4226
        %v4512 = vsel %vm4487, %v4228, %v4230
        %v4513 = vsel %vm4487, %v4230, %v4232
        %v4514 = vsel %vm4487, %v4232, %v4234
        %v4515 = vsel %vm4487, %v4234, %v4236
        %v4516 = vsel %vm4487, %v4238, %v4240
        %v4517 = vsel %vm4487, %v4240, %v4242
        %v4518 = vsel %vm4487, %v4242, %v4244
        %v4519 = vsel %vm4487, %v4244, %v4246
        %v4520 = vsel %vm4487, %v4248, %v4250
        %v4521 = vsel %vm4487, %v4250, %v4252
        %v4522 = vsel %vm4487, %v4252, %v4254
        %v4523 = vsel %vm4487, %v4254, %v4256
        %v4524 = vsel %vm4487, %v4258, %v4260
        %v4525 = vsel %vm4487, %v4260, %v4262
        %v4526 = vsel %vm4487, %v4262, %v4264
        %v4527 = vsel %vm4487, %v4264, %v4266
        %v4528 = vsel %vm4487, %v4268, %v4270
        %v4529 = vsel %vm4487, %v4270, %v4272
        %v4530 = vsel %vm4487, %v4272, %v4274
        %v4531 = vsel %vm4487, %v4274, %v4276
        %v4532 = vsel %vm4487, %v4278, %v4280
        %v4533 = vsel %vm4487, %v4280, %v4282
        %v4534 = vsel %vm4487, %v4282, %v4284
        %v4535 = vsel %vm4487, %v4284, %v4286
        %v4536 = vsel %vm4487, %v4288, %v4290
        %v4537 = vsel %vm4487, %v4290, %v4292
        %v4538 = vsel %vm4487, %v4292, %v4294
        %v4539 = vsel %vm4487, %v4294, %v4296
        %v4540 = vsel %vm4487, %v4298, %v4300
        %v4541 = vsel %vm4487, %v4300, %v4302
        %v4542 = vsel %vm4487, %v4302, %v4304
        %v4543 = vsel %vm4487, %v4304, %v4306
        %v4544 = vsel %vm4487, %v4308, %v4310
        %v4545 = vsel %vm4487, %v4310, %v4312
        %v4546 = vsel %vm4487, %v4312, %v4314
        %v4547 = vsel %vm4487, %v4314, %v4316
        %v4548 = vsel %vm4487, %v4318, %v4320
        %v4549 = vsel %vm4487, %v4320, %v4322
        %v4550 = vsel %vm4487, %v4322, %v4324
        %v4551 = vsel %vm4487, %v4324, %v4326
        %v4552 = vsel %vm4487, %v4328, %v4330
        %v4553 = vsel %vm4487, %v4330, %v4332
        %v4554 = vsel %vm4487, %v4332, %v4334
        %v4555 = vsel %vm4487, %v4334, %v4336
        %v4556 = vsel %vm4487, %v4338, %v4340
        %v4557 = vsel %vm4487, %v4340, %v4342
        %v4558 = vsel %vm4487, %v4342, %v4344
        %v4559 = vsel %vm4487, %v4344, %v4346
        %v4560 = vsel %vm4487, %v4348, %v4350
        %v4561 = vsel %vm4487, %v4350, %v4352
        %v4562 = vsel %vm4487, %v4352, %v4354
        %v4563 = vsel %vm4487, %v4354, %v4356
        %v4564 = vsel %vm4487, %v4358, %v4360
        %v4565 = vsel %vm4487, %v4360, %v4362
        %v4566 = vsel %vm4487, %v4362, %v4364
        %v4567 = vsel %vm4487, %v4364, %v4366
        %v4568 = vsel %vm4487, %v4368, %v4370
        %v4569 = vsel %vm4487, %v4370, %v4372
        %v4570 = vsel %vm4487, %v4372, %v4374
        %v4571 = vsel %vm4487, %v4374, %v4376
        %v4572 = vsel %vm4487, %v4378, %v4380
        %v4573 = vsel %vm4487, %v4380, %v4382
        %v4574 = vsel %vm4487, %v4382, %v4384
        %v4575 = vsel %vm4487, %v4384, %v4386
        %v4576 = vsel %vm4487, %v4388, %v4390
        %v4577 = vsel %vm4487, %v4390, %v4392
        %v4578 = vsel %vm4487, %v4392, %v4394
        %v4579 = vsel %vm4487, %v4394, %v4396
        %v4580 = vsel %vm4487, %v4398, %v4400
        %v4581 = vsel %vm4487, %v4400, %v4402
        %v4582 = vsel %vm4487, %v4402, %v4404
        %v4583 = vsel %vm4487, %v4404, %v4406
        %v4584 = vsel %vm4487, %v4408, %v4410
        %v4585 = vsel %vm4487, %v4410, %v4412
        %v4586 = vsel %vm4487, %v4412, %v4414
        %v4587 = vsel %vm4487, %v4414, %v4416
        %v4588 = vsel %vm4487, %v4418, %v4420
        %v4589 = vsel %vm4487, %v4420, %v4422
        %v4590 = vsel %vm4487, %v4422, %v4424
        %v4591 = vsel %vm4487, %v4424, %v4426
        %v4592 = vsel %vm4487, %v4428, %v4430
        %v4593 = vsel %vm4487, %v4430, %v4432
        %v4594 = vsel %vm4487, %v4432, %v4434
        %v4595 = vsel %vm4487, %v4434, %v4436
        %v4596 = vsel %vm4487, %v4438, %v4440
        %v4597 = vsel %vm4487, %v4440, %v4442
        %v4598 = vsel %vm4487, %v4442, %v4444
        %v4599 = vsel %vm4487, %v4444, %v4446
        %v4600 = vsel %vm4487, %v4448, %v4450
        %v4601 = vsel %vm4487, %v4450, %v4452
        %v4602 = vsel %vm4487, %v4452, %v4454
        %v4603 = vsel %vm4487, %v4454, %v4456
        %v4604 = vsel %vm4487, %v4458, %v4460
        %v4605 = vsel %vm4487, %v4460, %v4462
        %v4606 = vsel %vm4487, %v4462, %v4464
        %v4607 = vsel %vm4487, %v4464, %v4466
        %v4608 = vsel %vm4487, %v4468, %v4470
        %v4609 = vsel %vm4487, %v4470, %v4472
        %v4610 = vsel %vm4487, %v4472, %v4474
        %v4611 = vsel %vm4487, %v4474, %v4476
        %v4612 = vsel %vm4487, %v4478, %v4480
        %v4613 = vsel %vm4487, %v4480, %v4482
        %v4614 = vsel %vm4487, %v4482, %v4484
        %v4615 = vsel %vm4487, %v4484, %v4486
        %4744 = vrot.lane.b32.xlu0 %v1170, 118
        %v4745 = vpop.permute.xlu0 %4744
        %4746 = vrot.lane.b32.xlu0 %v1171, 118
        %v4747 = vpop.permute.xlu0 %4746
        %4748 = vrot.lane.b32.xlu0 %v1172, 118
        %v4749 = vpop.permute.xlu0 %4748
        %4750 = vrot.lane.b32.xlu0 %v1176, 118
        %v4751 = vpop.permute.xlu0 %4750
        %4752 = vrot.lane.b32.xlu0 0.0, 118
        %v4753 = vpop.permute.xlu0 %4752
        %4754 = vrot.lane.b32.xlu0 %v2966, 118
        %v4755 = vpop.permute.xlu0 %4754
        %4756 = vrot.lane.b32.xlu0 %v2967, 118
        %v4757 = vpop.permute.xlu0 %4756
        %4758 = vrot.lane.b32.xlu0 %v2968, 118
        %v4759 = vpop.permute.xlu0 %4758
        %4760 = vrot.lane.b32.xlu0 %v2978, 118
        %v4761 = vpop.permute.xlu0 %4760
        %vm4762 = vcmask 965632
        %v4763 = vsel %vm4762, %v4745, %v4747
        %v4764 = vsel %vm4762, %v4747, %v4749
        %v4765 = vsel %vm4762, %v4749, %v4751
        %v4766 = vsel %vm4762, %v4751, %v4753
        %v4767 = vsel %vm4762, %v4755, %v4757
        %v4768 = vsel %vm4762, %v4757, %v4759
        %v4769 = vsel %vm4762, %v4759, %v4761
        %v4770 = vsel %vm4762, %v4761, %v4753
        %4780 = vset.pattern.permute.xlu0 0
        %4781 = vperm.xlu0 %4780, %v2986
        %v4782 = vpop.permute.xlu0 %4781
        %v4785 = vsel %vm2658, %v2985, 0
        %4787 = vmatprep.subr.mxu0 %v1170
        %4788 = vmatpush1.msra.mxu0 %v1175
        %4789 = vmatprep.subr.mxu0 %v2966
        %4790 = vmatpush1.msra.mxu0 %v2977
        %4791 = vmatprep.subr.mxu0 %v1195
        %4792 = vmatpush1.msra.mxu0 %v1194
        %4793 = vmatprep.subr.mxu0 %v3000
        %4794 = vmatpush1.msra.mxu0 %v2999
        %4795 = vmatprep.subr.mxu0 %v1209
        %4796 = vmatpush1.msra.mxu0 %v1208
        %4797 = vmatprep.subr.mxu0 %v3022
        %4798 = vmatpush1.msra.mxu0 %v3021
        %4799 = vmatprep.subr.mxu0 %v1238
        %4800 = vmatpush1.msra.mxu0 %v1237
        %4801 = vmatprep.subr.mxu0 %v3044
        %4802 = vmatpush1.msra.mxu0 %v3043
        %4803 = vmatprep.subr.mxu0 %v1267
        %4804 = vmatpush1.msra.mxu0 %v1266
        %4805 = vmatprep.subr.mxu0 %v3066
        %4806 = vmatpush1.msra.mxu0 %v3065
        %4807 = vmatprep.subr.mxu0 %v3099
        %4808 = vmatpush1.msra.mxu0 %v3098
        %4809 = vmatprep.subr.mxu0 %v3103
        %4810 = vmatpush1.msra.mxu0 %v3102
        %4811 = vmatprep.subr.mxu0 %v3136
        %4812 = vmatpush1.msra.mxu0 %v3135
        %4813 = vmatprep.subr.mxu0 %v3140
        %4814 = vmatpush1.msra.mxu0 %v3139
        %4815 = vmatprep.subr.mxu0 %v1281
        %4816 = vmatpush1.msra.mxu0 %v1280
        %4817 = vmatprep.subr.mxu0 %v3162
        %4818 = vmatpush1.msra.mxu0 %v3161
        %4819 = vmatprep.subr.mxu0 %v1295
        %4820 = vmatpush1.msra.mxu0 %v1294
        %4821 = vmatprep.subr.mxu0 %v3184
        %4822 = vmatpush1.msra.mxu0 %v3183
        %4823 = vmatprep.subr.mxu0 %v1309
        %4824 = vmatpush1.msra.mxu0 %v1308
        %4825 = vmatprep.subr.mxu0 %v3202
        %4826 = vmatpush1.msra.mxu0 %v3201
        %4827 = vmatprep.subr.mxu0 %v1338
        %4828 = vmatpush1.msra.mxu0 %v1337
        %4829 = vmatprep.subr.mxu0 %v3224
        %4830 = vmatpush1.msra.mxu0 %v3223
        %4831 = vmatprep.subr.mxu0 %v1367
        %4832 = vmatpush1.msra.mxu0 %v1366
        %4833 = vmatprep.subr.mxu0 %v3246
        %4834 = vmatpush1.msra.mxu0 %v3245
        %4835 = vmatprep.subr.mxu0 %v3279
        %4836 = vmatpush1.msra.mxu0 %v3278
        %4837 = vmatprep.subr.mxu0 %v3283
        %4838 = vmatpush1.msra.mxu0 %v3282
        %4839 = vmatprep.subr.mxu0 %v3316
        %4840 = vmatpush1.msra.mxu0 %v3315
        %4841 = vmatprep.subr.mxu0 %v3320
        %4842 = vmatpush1.msra.mxu0 %v3319
        %4843 = vmatprep.subr.mxu0 %v1381
        %4844 = vmatpush1.msra.mxu0 %v1380
        %4845 = vmatprep.subr.mxu0 %v3342
        %4846 = vmatpush1.msra.mxu0 %v3341
        %4847 = vmatprep.subr.mxu0 %v1395
        %4848 = vmatpush1.msra.mxu0 %v1394
        %4849 = vmatprep.subr.mxu0 %v3364
        %4850 = vmatpush1.msra.mxu0 %v3363
        %4851 = vmatprep.mubr.f32.mxu0 %v2980
        %4852 = vmatmul.mubr.f32.gmra.mrb[0].mxu0 %v2979
        %v4853 = vpop.f32.mrb[0].mxu0
        %v4854 = vadd.f32 %v4782, %v4853
        %v4855 = vpop.f32.mrb[0].mxu0
        %v4856 = vadd.f32 %v4782, %v4855
        %4857 = vdwg.mxu0
        %4858 = vmatprep.subr.mxu0 %v1409
        %4859 = vmatpush1.msra.mxu0 %v1408
        %4860 = vmatprep.subr.mxu0 %v3916
        %4861 = vmatpush1.msra.mxu0 %v3915
        %4862 = vmatprep.subr.mxu0 %v3920
        %4863 = vmatpush1.msra.mxu0 %v3919
        %4864 = vmatprep.subr.mxu0 %v3924
        %4865 = vmatpush1.msra.mxu0 %v3923
        %4866 = vmatprep.subr.mxu0 %v3928
        %4867 = vmatpush1.msra.mxu0 %v3927
        %4868 = vmatprep.subr.mxu0 %v3932
        %4869 = vmatpush1.msra.mxu0 %v3931
        %4870 = vmatprep.subr.mxu0 %v3936
        %4871 = vmatpush1.msra.mxu0 %v3935
        %4872 = vmatprep.subr.mxu0 %v3940
        %4873 = vmatpush1.msra.mxu0 %v3939
        %4874 = vmatprep.subr.mxu0 %v3944
        %4875 = vmatpush1.msra.mxu0 %v3943
        %4876 = vmatprep.subr.mxu0 %v3948
        %4877 = vmatpush1.msra.mxu0 %v3947
        %4878 = vmatprep.subr.mxu0 %v3952
        %4879 = vmatpush1.msra.mxu0 %v3951
        %4880 = vmatprep.subr.mxu0 %v3956
        %4881 = vmatpush1.msra.mxu0 %v3955
        %4882 = vmatprep.subr.mxu0 %v3960
        %4883 = vmatpush1.msra.mxu0 %v3959
        %4884 = vmatprep.subr.mxu0 %v3964
        %4885 = vmatpush1.msra.mxu0 %v3963
        %4886 = vmatprep.subr.mxu0 %v3968
        %4887 = vmatpush1.msra.mxu0 %v3967
        %4888 = vmatprep.subr.mxu0 %v3972
        %4889 = vmatpush1.msra.mxu0 %v3971
        %4890 = vmatprep.subr.mxu0 %v3976
        %4891 = vmatpush1.msra.mxu0 %v3975
        %4892 = vmatprep.subr.mxu0 %v3980
        %4893 = vmatpush1.msra.mxu0 %v3979
        %4894 = vmatprep.subr.mxu0 %v3984
        %4895 = vmatpush1.msra.mxu0 %v3983
        %4896 = vmatprep.subr.mxu0 %v3988
        %4897 = vmatpush1.msra.mxu0 %v3987
        %4898 = vmatprep.subr.mxu0 %v3992
        %4899 = vmatpush1.msra.mxu0 %v3991
        %4900 = vmatprep.subr.mxu0 %v3996
        %4901 = vmatpush1.msra.mxu0 %v3995
        %4902 = vmatprep.subr.mxu0 %v4000
        %4903 = vmatpush1.msra.mxu0 %v3999
        %4904 = vmatprep.subr.mxu0 %v4004
        %4905 = vmatpush1.msra.mxu0 %v4003
        %4906 = vmatprep.subr.mxu0 %v4008
        %4907 = vmatpush1.msra.mxu0 %v4007
        %4908 = vmatprep.subr.mxu0 %v4012
        %4909 = vmatpush1.msra.mxu0 %v4011
        %4910 = vmatprep.subr.mxu0 %v4016
        %4911 = vmatpush1.msra.mxu0 %v4015
        %4912 = vmatprep.subr.mxu0 %v4020
        %4913 = vmatpush1.msra.mxu0 %v4019
        %4914 = vmatprep.subr.mxu0 %v4024
        %4915 = vmatpush1.msra.mxu0 %v4023
        %4916 = vmatprep.subr.mxu0 %v4028
        %4917 = vmatpush1.msra.mxu0 %v4027
        %4918 = vmatprep.subr.mxu0 %v4032
        %4919 = vmatpush1.msra.mxu0 %v4031
        %4920 = vmatprep.subr.mxu0 %v4036
        %4921 = vmatpush1.msra.mxu0 %v4035
        %4922 = vmatprep.mubr.f32.mxu0 %v2982
        %4923 = vmatmul.mubr.f32.gmra.mrb[0].mxu0 %v2981
        %v4924 = vpop.f32.mrb[0].mxu0
        %v4925 = vadd.f32 %v4854, %v4924
        %v4926 = vpop.f32.mrb[0].mxu0
        %v4927 = vadd.f32 %v4856, %v4926
        %4928 = vdwg.mxu0
        %4929 = vmatprep.subr.mxu0 %v4489
        %4930 = vmatpush1.msra.mxu0 %v4488
        %4931 = vmatprep.subr.mxu0 %v4493
        %4932 = vmatpush1.msra.mxu0 %v4492
        %4933 = vmatprep.subr.mxu0 %v4497
        %4934 = vmatpush1.msra.mxu0 %v4496
        %4935 = vmatprep.subr.mxu0 %v4501
        %4936 = vmatpush1.msra.mxu0 %v4500
        %4937 = vmatprep.subr.mxu0 %v4505
        %4938 = vmatpush1.msra.mxu0 %v4504
        %4939 = vmatprep.subr.mxu0 %v4509
        %4940 = vmatpush1.msra.mxu0 %v4508
        %4941 = vmatprep.subr.mxu0 %v4513
        %4942 = vmatpush1.msra.mxu0 %v4512
        %4943 = vmatprep.subr.mxu0 %v4517
        %4944 = vmatpush1.msra.mxu0 %v4516
        %4945 = vmatprep.subr.mxu0 %v4521
        %4946 = vmatpush1.msra.mxu0 %v4520
        %4947 = vmatprep.subr.mxu0 %v4525
        %4948 = vmatpush1.msra.mxu0 %v4524
        %4949 = vmatprep.subr.mxu0 %v4529
        %4950 = vmatpush1.msra.mxu0 %v4528
        %4951 = vmatprep.subr.mxu0 %v4533
        %4952 = vmatpush1.msra.mxu0 %v4532
        %4953 = vmatprep.subr.mxu0 %v4537
        %4954 = vmatpush1.msra.mxu0 %v4536
        %4955 = vmatprep.subr.mxu0 %v4541
        %4956 = vmatpush1.msra.mxu0 %v4540
        %4957 = vmatprep.subr.mxu0 %v4545
        %4958 = vmatpush1.msra.mxu0 %v4544
        %4959 = vmatprep.subr.mxu0 %v4549
        %4960 = vmatpush1.msra.mxu0 %v4548
        %4961 = vmatprep.subr.mxu0 %v4553
        %4962 = vmatpush1.msra.mxu0 %v4552
        %4963 = vmatprep.subr.mxu0 %v4557
        %4964 = vmatpush1.msra.mxu0 %v4556
        %4965 = vmatprep.subr.mxu0 %v4561
        %4966 = vmatpush1.msra.mxu0 %v4560
        %4967 = vmatprep.subr.mxu0 %v4565
        %4968 = vmatpush1.msra.mxu0 %v4564
        %4969 = vmatprep.subr.mxu0 %v4569
        %4970 = vmatpush1.msra.mxu0 %v4568
        %4971 = vmatprep.subr.mxu0 %v4573
        %4972 = vmatpush1.msra.mxu0 %v4572
        %4973 = vmatprep.subr.mxu0 %v4577
        %4974 = vmatpush1.msra.mxu0 %v4576
        %4975 = vmatprep.subr.mxu0 %v4581
        %4976 = vmatpush1.msra.mxu0 %v4580
        %4977 = vmatprep.subr.mxu0 %v4585
        %4978 = vmatpush1.msra.mxu0 %v4584
        %4979 = vmatprep.subr.mxu0 %v4589
        %4980 = vmatpush1.msra.mxu0 %v4588
        %4981 = vmatprep.subr.mxu0 %v4593
        %4982 = vmatpush1.msra.mxu0 %v4592
        %4983 = vmatprep.subr.mxu0 %v4597
        %4984 = vmatpush1.msra.mxu0 %v4596
        %4985 = vmatprep.subr.mxu0 %v4601
        %4986 = vmatpush1.msra.mxu0 %v4600
        %4987 = vmatprep.subr.mxu0 %v4605
        %4988 = vmatpush1.msra.mxu0 %v4604
        %4989 = vmatprep.subr.mxu0 %v4609
        %4990 = vmatpush1.msra.mxu0 %v4608
        %4991 = vmatprep.subr.mxu0 %v4613
        %4992 = vmatpush1.msra.mxu0 %v4612
        %4993 = vmatprep.mubr.f32.mxu0 %v2984
        %4994 = vmatmul.mubr.f32.gmra.mrb[0].mxu0 %v2983
        %v4995 = vpop.f32.mrb[0].mxu0
        %v4996 = vadd.f32 %v4925, %v4995
        %v4997 = vpop.f32.mrb[0].mxu0
        %v4998 = vadd.f32 %v4927, %v4997
        %4999 = vdwg.mxu0
        %5000 = vmatprep.subr.mxu0 %v4764
        %5001 = vmatpush1.msra.mxu0 %v4763
        %5002 = vmatprep.subr.mxu0 %v4768
        %5003 = vmatpush1.msra.mxu0 %v4767
        %5004 = vmatprep.subr.mxu0 0.0
        %5005 = vmatpush1.msra.mxu0 0.0
        %5006 = vmatprep.subr.mxu0 0.0
        %5007 = vmatpush1.msra.mxu0 0.0
        %5008 = vmatprep.subr.mxu0 0.0
        %5009 = vmatpush1.msra.mxu0 0.0
        %5010 = vmatprep.subr.mxu0 0.0
        %5011 = vmatpush1.msra.mxu0 0.0
        %5012 = vmatprep.subr.mxu0 0.0
        %5013 = vmatpush1.msra.mxu0 0.0
        %5014 = vmatprep.subr.mxu0 0.0
        %5015 = vmatpush1.msra.mxu0 0.0
        %5016 = vmatprep.subr.mxu0 0.0
        %5017 = vmatpush1.msra.mxu0 0.0
        %5018 = vmatprep.subr.mxu0 0.0
        %5019 = vmatpush1.msra.mxu0 0.0
        %5020 = vmatprep.subr.mxu0 0.0
        %5021 = vmatpush1.msra.mxu0 0.0
        %5022 = vmatprep.subr.mxu0 0.0
        %5023 = vmatpush1.msra.mxu0 0.0
        %5024 = vmatprep.subr.mxu0 0.0
        %5025 = vmatpush1.msra.mxu0 0.0
        %5026 = vmatprep.subr.mxu0 0.0
        %5027 = vmatpush1.msra.mxu0 0.0
        %5028 = vmatprep.subr.mxu0 0.0
        %5029 = vmatpush1.msra.mxu0 0.0
        %5030 = vmatprep.subr.mxu0 0.0
        %5031 = vmatpush1.msra.mxu0 0.0
        %5032 = vmatprep.subr.mxu0 0.0
        %5033 = vmatpush1.msra.mxu0 0.0
        %5034 = vmatprep.subr.mxu0 0.0
        %5035 = vmatpush1.msra.mxu0 0.0
        %5036 = vmatprep.subr.mxu0 0.0
        %5037 = vmatpush1.msra.mxu0 0.0
        %5038 = vmatprep.subr.mxu0 0.0
        %5039 = vmatpush1.msra.mxu0 0.0
        %5040 = vmatprep.subr.mxu0 0.0
        %5041 = vmatpush1.msra.mxu0 0.0
        %5042 = vmatprep.subr.mxu0 0.0
        %5043 = vmatpush1.msra.mxu0 0.0
        %5044 = vmatprep.subr.mxu0 0.0
        %5045 = vmatpush1.msra.mxu0 0.0
        %5046 = vmatprep.subr.mxu0 0.0
        %5047 = vmatpush1.msra.mxu0 0.0
        %5048 = vmatprep.subr.mxu0 0.0
        %5049 = vmatpush1.msra.mxu0 0.0
        %5050 = vmatprep.subr.mxu0 0.0
        %5051 = vmatpush1.msra.mxu0 0.0
        %5052 = vmatprep.subr.mxu0 0.0
        %5053 = vmatpush1.msra.mxu0 0.0
        %5054 = vmatprep.subr.mxu0 0.0
        %5055 = vmatpush1.msra.mxu0 0.0
        %5056 = vmatprep.subr.mxu0 0.0
        %5057 = vmatpush1.msra.mxu0 0.0
        %5058 = vmatprep.subr.mxu0 0.0
        %5059 = vmatpush1.msra.mxu0 0.0
        %5060 = vmatprep.subr.mxu0 0.0
        %5061 = vmatpush1.msra.mxu0 0.0
        %5062 = vmatprep.subr.mxu0 0.0
        %5063 = vmatpush1.msra.mxu0 0.0
        %5064 = vmatprep.mubr.f32.mxu0 0.0
        %5065 = vmatmul.mubr.f32.gmra.mrb[0].mxu0 %v4785
        %v5066 = vpop.f32.mrb[0].mxu0
        %v5067 = vadd.f32 %v4996, %v5066
        %v5068 = vpop.f32.mrb[0].mxu0
        %v5069 = vadd.f32 %v4998, %v5068
        %5070 = vdwg.mxu0
        %5071 = vmatprep.subr.mxu0 %v1172
        %5072 = vmatpush1.msra.mxu0 %v1171
        %5073 = vmatprep.subr.mxu0 %v2968
        %5074 = vmatpush1.msra.mxu0 %v2967
        %5075 = vmatprep.subr.mxu0 %v1197
        %5076 = vmatpush1.msra.mxu0 %v1196
        %5077 = vmatprep.subr.mxu0 %v3002
        %5078 = vmatpush1.msra.mxu0 %v3001
        %5079 = vmatprep.subr.mxu0 %v1211
        %5080 = vmatpush1.msra.mxu0 %v1210
        %5081 = vmatprep.subr.mxu0 %v3024
        %5082 = vmatpush1.msra.mxu0 %v3023
        %5083 = vmatprep.subr.mxu0 %v1240
        %5084 = vmatpush1.msra.mxu0 %v1239
        %5085 = vmatprep.subr.mxu0 %v3046
        %5086 = vmatpush1.msra.mxu0 %v3045
        %5087 = vmatprep.subr.mxu0 %v1269
        %5088 = vmatpush1.msra.mxu0 %v1268
        %5089 = vmatprep.subr.mxu0 %v3068
        %5090 = vmatpush1.msra.mxu0 %v3067
        %5091 = vmatprep.subr.mxu0 %v3101
        %5092 = vmatpush1.msra.mxu0 %v3100
        %5093 = vmatprep.subr.mxu0 %v3105
        %5094 = vmatpush1.msra.mxu0 %v3104
        %5095 = vmatprep.subr.mxu0 %v3138
        %5096 = vmatpush1.msra.mxu0 %v3137
        %5097 = vmatprep.subr.mxu0 %v3142
        %5098 = vmatpush1.msra.mxu0 %v3141
        %5099 = vmatprep.subr.mxu0 %v1283
        %5100 = vmatpush1.msra.mxu0 %v1282
        %5101 = vmatprep.subr.mxu0 %v3164
        %5102 = vmatpush1.msra.mxu0 %v3163
        %5103 = vmatprep.subr.mxu0 %v1297
        %5104 = vmatpush1.msra.mxu0 %v1296
        %5105 = vmatprep.subr.mxu0 %v3186
        %5106 = vmatpush1.msra.mxu0 %v3185
        %5107 = vmatprep.subr.mxu0 %v1311
        %5108 = vmatpush1.msra.mxu0 %v1310
        %5109 = vmatprep.subr.mxu0 %v3204
        %5110 = vmatpush1.msra.mxu0 %v3203
        %5111 = vmatprep.subr.mxu0 %v1340
        %5112 = vmatpush1.msra.mxu0 %v1339
        %5113 = vmatprep.subr.mxu0 %v3226
        %5114 = vmatpush1.msra.mxu0 %v3225
        %5115 = vmatprep.subr.mxu0 %v1369
        %5116 = vmatpush1.msra.mxu0 %v1368
        %5117 = vmatprep.subr.mxu0 %v3248
        %5118 = vmatpush1.msra.mxu0 %v3247
        %5119 = vmatprep.subr.mxu0 %v3281
        %5120 = vmatpush1.msra.mxu0 %v3280
        %5121 = vmatprep.subr.mxu0 %v3285
        %5122 = vmatpush1.msra.mxu0 %v3284
        %5123 = vmatprep.subr.mxu0 %v3318
        %5124 = vmatpush1.msra.mxu0 %v3317
        %5125 = vmatprep.subr.mxu0 %v3322
        %5126 = vmatpush1.msra.mxu0 %v3321
        %5127 = vmatprep.subr.mxu0 %v1383
        %5128 = vmatpush1.msra.mxu0 %v1382
        %5129 = vmatprep.subr.mxu0 %v3344
        %5130 = vmatpush1.msra.mxu0 %v3343
        %5131 = vmatprep.subr.mxu0 %v1397
        %5132 = vmatpush1.msra.mxu0 %v1396
        %5133 = vmatprep.subr.mxu0 %v3366
        %5134 = vmatpush1.msra.mxu0 %v3365
        %5135 = vmatprep.mubr.f32.mxu0 %v2980
        %5136 = vmatmul.mubr.f32.gmra.mrb[0].mxu0 %v2979
        %v5137 = vpop.f32.mrb[0].mxu0
        %v5138 = vadd.f32 %v4782, %v5137
        %v5139 = vpop.f32.mrb[0].mxu0
        %v5140 = vadd.f32 %v4782, %v5139
        %5141 = vdwg.mxu0
        %5142 = vmatprep.subr.mxu0 %v1411
        %5143 = vmatpush1.msra.mxu0 %v1410
        %5144 = vmatprep.subr.mxu0 %v3918
        %5145 = vmatpush1.msra.mxu0 %v3917
        %5146 = vmatprep.subr.mxu0 %v3922
        %5147 = vmatpush1.msra.mxu0 %v3921
        %5148 = vmatprep.subr.mxu0 %v3926
        %5149 = vmatpush1.msra.mxu0 %v3925
        %5150 = vmatprep.subr.mxu0 %v3930
        %5151 = vmatpush1.msra.mxu0 %v3929
        %5152 = vmatprep.subr.mxu0 %v3934
        %5153 = vmatpush1.msra.mxu0 %v3933
        %5154 = vmatprep.subr.mxu0 %v3938
        %5155 = vmatpush1.msra.mxu0 %v3937
        %5156 = vmatprep.subr.mxu0 %v3942
        %5157 = vmatpush1.msra.mxu0 %v3941
        %5158 = vmatprep.subr.mxu0 %v3946
        %5159 = vmatpush1.msra.mxu0 %v3945
        %5160 = vmatprep.subr.mxu0 %v3950
        %5161 = vmatpush1.msra.mxu0 %v3949
        %5162 = vmatprep.subr.mxu0 %v3954
        %5163 = vmatpush1.msra.mxu0 %v3953
        %5164 = vmatprep.subr.mxu0 %v3958
        %5165 = vmatpush1.msra.mxu0 %v3957
        %5166 = vmatprep.subr.mxu0 %v3962
        %5167 = vmatpush1.msra.mxu0 %v3961
        %5168 = vmatprep.subr.mxu0 %v3966
        %5169 = vmatpush1.msra.mxu0 %v3965
        %5170 = vmatprep.subr.mxu0 %v3970
        %5171 = vmatpush1.msra.mxu0 %v3969
        %5172 = vmatprep.subr.mxu0 %v3974
        %5173 = vmatpush1.msra.mxu0 %v3973
        %5174 = vmatprep.subr.mxu0 %v3978
        %5175 = vmatpush1.msra.mxu0 %v3977
        %5176 = vmatprep.subr.mxu0 %v3982
        %5177 = vmatpush1.msra.mxu0 %v3981
        %5178 = vmatprep.subr.mxu0 %v3986
        %5179 = vmatpush1.msra.mxu0 %v3985
        %5180 = vmatprep.subr.mxu0 %v3990
        %5181 = vmatpush1.msra.mxu0 %v3989
        %5182 = vmatprep.subr.mxu0 %v3994
        %5183 = vmatpush1.msra.mxu0 %v3993
        %5184 = vmatprep.subr.mxu0 %v3998
        %5185 = vmatpush1.msra.mxu0 %v3997
        %5186 = vmatprep.subr.mxu0 %v4002
        %5187 = vmatpush1.msra.mxu0 %v4001
        %5188 = vmatprep.subr.mxu0 %v4006
        %5189 = vmatpush1.msra.mxu0 %v4005
        %5190 = vmatprep.subr.mxu0 %v4010
        %5191 = vmatpush1.msra.mxu0 %v4009
        %5192 = vmatprep.subr.mxu0 %v4014
        %5193 = vmatpush1.msra.mxu0 %v4013
        %5194 = vmatprep.subr.mxu0 %v4018
        %5195 = vmatpush1.msra.mxu0 %v4017
        %5196 = vmatprep.subr.mxu0 %v4022
        %5197 = vmatpush1.msra.mxu0 %v4021
        %5198 = vmatprep.subr.mxu0 %v4026
        %5199 = vmatpush1.msra.mxu0 %v4025
        %5200 = vmatprep.subr.mxu0 %v4030
        %5201 = vmatpush1.msra.mxu0 %v4029
        %5202 = vmatprep.subr.mxu0 %v4034
        %5203 = vmatpush1.msra.mxu0 %v4033
        %5204 = vmatprep.subr.mxu0 %v4038
        %5205 = vmatpush1.msra.mxu0 %v4037
        %5206 = vmatprep.mubr.f32.mxu0 %v2982
        %5207 = vmatmul.mubr.f32.gmra.mrb[0].mxu0 %v2981
        %v5208 = vpop.f32.mrb[0].mxu0
        %v5209 = vadd.f32 %v5138, %v5208
        %v5210 = vpop.f32.mrb[0].mxu0
        %v5211 = vadd.f32 %v5140, %v5210
        %5212 = vdwg.mxu0
        %5213 = vmatprep.subr.mxu0 %v4491
        %5214 = vmatpush1.msra.mxu0 %v4490
        %5215 = vmatprep.subr.mxu0 %v4495
        %5216 = vmatpush1.msra.mxu0 %v4494
        %5217 = vmatprep.subr.mxu0 %v4499
        %5218 = vmatpush1.msra.mxu0 %v4498
        %5219 = vmatprep.subr.mxu0 %v4503
        %5220 = vmatpush1.msra.mxu0 %v4502
        %5221 = vmatprep.subr.mxu0 %v4507
        %5222 = vmatpush1.msra.mxu0 %v4506
        %5223 = vmatprep.subr.mxu0 %v4511
        %5224 = vmatpush1.msra.mxu0 %v4510
        %5225 = vmatprep.subr.mxu0 %v4515
        %5226 = vmatpush1.msra.mxu0 %v4514
        %5227 = vmatprep.subr.mxu0 %v4519
        %5228 = vmatpush1.msra.mxu0 %v4518
        %5229 = vmatprep.subr.mxu0 %v4523
        %5230 = vmatpush1.msra.mxu0 %v4522
        %5231 = vmatprep.subr.mxu0 %v4527
        %5232 = vmatpush1.msra.mxu0 %v4526
        %5233 = vmatprep.subr.mxu0 %v4531
        %5234 = vmatpush1.msra.mxu0 %v4530
        %5235 = vmatprep.subr.mxu0 %v4535
        %5236 = vmatpush1.msra.mxu0 %v4534
        %5237 = vmatprep.subr.mxu0 %v4539
        %5238 = vmatpush1.msra.mxu0 %v4538
        %5239 = vmatprep.subr.mxu0 %v4543
        %5240 = vmatpush1.msra.mxu0 %v4542
        %5241 = vmatprep.subr.mxu0 %v4547
        %5242 = vmatpush1.msra.mxu0 %v4546
        %5243 = vmatprep.subr.mxu0 %v4551
        %5244 = vmatpush1.msra.mxu0 %v4550
        %5245 = vmatprep.subr.mxu0 %v4555
        %5246 = vmatpush1.msra.mxu0 %v4554
        %5247 = vmatprep.subr.mxu0 %v4559
        %5248 = vmatpush1.msra.mxu0 %v4558
        %5249 = vmatprep.subr.mxu0 %v4563
        %5250 = vmatpush1.msra.mxu0 %v4562
        %5251 = vmatprep.subr.mxu0 %v4567
        %5252 = vmatpush1.msra.mxu0 %v4566
        %5253 = vmatprep.subr.mxu0 %v4571
        %5254 = vmatpush1.msra.mxu0 %v4570
        %5255 = vmatprep.subr.mxu0 %v4575
        %5256 = vmatpush1.msra.mxu0 %v4574
        %5257 = vmatprep.subr.mxu0 %v4579
        %5258 = vmatpush1.msra.mxu0 %v4578
        %5259 = vmatprep.subr.mxu0 %v4583
        %5260 = vmatpush1.msra.mxu0 %v4582
        %5261 = vmatprep.subr.mxu0 %v4587
        %5262 = vmatpush1.msra.mxu0 %v4586
        %5263 = vmatprep.subr.mxu0 %v4591
        %5264 = vmatpush1.msra.mxu0 %v4590
        %5265 = vmatprep.subr.mxu0 %v4595
        %5266 = vmatpush1.msra.mxu0 %v4594
        %5267 = vmatprep.subr.mxu0 %v4599
        %5268 = vmatpush1.msra.mxu0 %v4598
        %5269 = vmatprep.subr.mxu0 %v4603
        %5270 = vmatpush1.msra.mxu0 %v4602
        %5271 = vmatprep.subr.mxu0 %v4607
        %5272 = vmatpush1.msra.mxu0 %v4606
        %5273 = vmatprep.subr.mxu0 %v4611
        %5274 = vmatpush1.msra.mxu0 %v4610
        %5275 = vmatprep.subr.mxu0 %v4615
        %5276 = vmatpush1.msra.mxu0 %v4614
        %5277 = vmatprep.mubr.f32.mxu0 %v2984
        %5278 = vmatmul.mubr.f32.gmra.mrb[0].mxu0 %v2983
        %v5279 = vpop.f32.mrb[0].mxu0
        %v5280 = vadd.f32 %v5209, %v5279
        %v5281 = vpop.f32.mrb[0].mxu0
        %v5282 = vadd.f32 %v5211, %v5281
        %5283 = vdwg.mxu0
        %5284 = vmatprep.subr.mxu0 %v4766
        %5285 = vmatpush1.msra.mxu0 %v4765
        %5286 = vmatprep.subr.mxu0 %v4770
        %5287 = vmatpush1.msra.mxu0 %v4769
        %5288 = vmatprep.subr.mxu0 0.0
        %5289 = vmatpush1.msra.mxu0 0.0
        %5290 = vmatprep.subr.mxu0 0.0
        %5291 = vmatpush1.msra.mxu0 0.0
        %5292 = vmatprep.subr.mxu0 0.0
        %5293 = vmatpush1.msra.mxu0 0.0
        %5294 = vmatprep.subr.mxu0 0.0
        %5295 = vmatpush1.msra.mxu0 0.0
        %5296 = vmatprep.subr.mxu0 0.0
        %5297 = vmatpush1.msra.mxu0 0.0
        %5298 = vmatprep.subr.mxu0 0.0
        %5299 = vmatpush1.msra.mxu0 0.0
        %5300 = vmatprep.subr.mxu0 0.0
        %5301 = vmatpush1.msra.mxu0 0.0
        %5302 = vmatprep.subr.mxu0 0.0
        %5303 = vmatpush1.msra.mxu0 0.0
        %5304 = vmatprep.subr.mxu0 0.0
        %5305 = vmatpush1.msra.mxu0 0.0
        %5306 = vmatprep.subr.mxu0 0.0
        %5307 = vmatpush1.msra.mxu0 0.0
        %5308 = vmatprep.subr.mxu0 0.0
        %5309 = vmatpush1.msra.mxu0 0.0
        %5310 = vmatprep.subr.mxu0 0.0
        %5311 = vmatpush1.msra.mxu0 0.0
        %5312 = vmatprep.subr.mxu0 0.0
        %5313 = vmatpush1.msra.mxu0 0.0
        %5314 = vmatprep.subr.mxu0 0.0
        %5315 = vmatpush1.msra.mxu0 0.0
        %5316 = vmatprep.subr.mxu0 0.0
        %5317 = vmatpush1.msra.mxu0 0.0
        %5318 = vmatprep.subr.mxu0 0.0
        %5319 = vmatpush1.msra.mxu0 0.0
        %5320 = vmatprep.subr.mxu0 0.0
        %5321 = vmatpush1.msra.mxu0 0.0
        %5322 = vmatprep.subr.mxu0 0.0
        %5323 = vmatpush1.msra.mxu0 0.0
        %5324 = vmatprep.subr.mxu0 0.0
        %5325 = vmatpush1.msra.mxu0 0.0
        %5326 = vmatprep.subr.mxu0 0.0
        %5327 = vmatpush1.msra.mxu0 0.0
        %5328 = vmatprep.subr.mxu0 0.0
        %5329 = vmatpush1.msra.mxu0 0.0
        %5330 = vmatprep.subr.mxu0 0.0
        %5331 = vmatpush1.msra.mxu0 0.0
        %5332 = vmatprep.subr.mxu0 0.0
        %5333 = vmatpush1.msra.mxu0 0.0
        %5334 = vmatprep.subr.mxu0 0.0
        %5335 = vmatpush1.msra.mxu0 0.0
        %5336 = vmatprep.subr.mxu0 0.0
        %5337 = vmatpush1.msra.mxu0 0.0
        %5338 = vmatprep.subr.mxu0 0.0
        %5339 = vmatpush1.msra.mxu0 0.0
        %5340 = vmatprep.subr.mxu0 0.0
        %5341 = vmatpush1.msra.mxu0 0.0
        %5342 = vmatprep.subr.mxu0 0.0
        %5343 = vmatpush1.msra.mxu0 0.0
        %5344 = vmatprep.subr.mxu0 0.0
        %5345 = vmatpush1.msra.mxu0 0.0
        %5346 = vmatprep.subr.mxu0 0.0
        %5347 = vmatpush1.msra.mxu0 0.0
        %5348 = vmatprep.mubr.f32.mxu0 0.0
        %5349 = vmatmul.mubr.f32.gmra.mrb[0].mxu0 %v4785
        %v5350 = vpop.f32.mrb[0].mxu0
        %v5351 = vadd.f32 %v5280, %v5350
        %v5352 = vpop.f32.mrb[0].mxu0
        %v5353 = vadd.f32 %v5282, %v5352
        %5354 = vdwg.mxu0
        %v5355 = vmax.f32 %v5067, 0.0
        %v5356 = vmax.f32 %v5069, 0.0
        %v5357 = vmax.f32 %v5351, 0.0
        %v5358 = vmax.f32 %v5353, 0.0
        %v5359 = vmul.f32 %v5355, %v687
        %v5360 = vmul.f32 %v5356, %v691
        %v5361 = vmul.f32 %v5357, %v695
        %v5362 = vmul.f32 %v5358, %v699
        %5367 = vrot.lane.b32.xlu0 %v5359, 69
        %v5368 = vpop.permute.xlu0 %5367
        %5369 = vrot.lane.b32.xlu0 %v5360, 69
        %v5370 = vpop.permute.xlu0 %5369
        %5371 = vrot.lane.b32.xlu0 %v5361, 69
        %v5372 = vpop.permute.xlu0 %5371
        %5373 = vrot.lane.b32.xlu0 %v5362, 69
        %v5374 = vpop.permute.xlu0 %5373
        %v5375 = vsel %vm497, %v5368, %v5370
        %v5376 = vsel %vm497, %v5370, %v5372
        %v5377 = vsel %vm497, %v5372, %v5374
        %v5380 = vsel %vm497, 0.0, %v5368
        %v5381 = vsel %vm497, %v5374, 0.0
        %v5382 = vld [vmem:[%s10] sm:$0xff]
        %v5383 = vld [vmem:[%s10 + $0x8] sm:$0xff]
        %v5384 = vld [vmem:[%s10 + $0x10] sm:$0xff]
        %v5385 = vld [vmem:[%s11] sm:$0xff]
        %5388 = vrot.lane.b32.xlu0 %v5380, 127
        %v5389 = vpop.permute.xlu0 %5388
        %5390 = vrot.lane.b32.xlu0 %v5375, 127
        %v5391 = vpop.permute.xlu0 %5390
        %5392 = vrot.lane.b32.xlu0 %v5376, 127
        %v5393 = vpop.permute.xlu0 %5392
        %5394 = vrot.lane.b32.xlu0 %v5377, 127
        %v5395 = vpop.permute.xlu0 %5394
        %5396 = vrot.lane.b32.xlu0 %v5381, 127
        %v5397 = vpop.permute.xlu0 %5396
        %v5398 = vsel %vm741, %v5389, %v5391
        %v5399 = vsel %vm741, %v5391, %v5393
        %v5400 = vsel %vm741, %v5393, %v5395
        %v5401 = vsel %vm741, %v5395, %v5397
        %5402 = vrot.lane.b32.xlu0 %v5380, 126
        %v5403 = vpop.permute.xlu0 %5402
        %5404 = vrot.lane.b32.xlu0 %v5375, 126
        %v5405 = vpop.permute.xlu0 %5404
        %5406 = vrot.lane.b32.xlu0 %v5376, 126
        %v5407 = vpop.permute.xlu0 %5406
        %5408 = vrot.lane.b32.xlu0 %v5377, 126
        %v5409 = vpop.permute.xlu0 %5408
        %5410 = vrot.lane.b32.xlu0 %v5381, 126
        %v5411 = vpop.permute.xlu0 %5410
        %v5412 = vsel %vm756, %v5403, %v5405
        %v5413 = vsel %vm756, %v5405, %v5407
        %v5414 = vsel %vm756, %v5407, %v5409
        %v5415 = vsel %vm756, %v5409, %v5411
        %5416 = vrot.lane.b32.xlu0 %v5380, 106
        %v5417 = vpop.permute.xlu0 %5416
        %5418 = vrot.lane.b32.xlu0 %v5375, 106
        %v5419 = vpop.permute.xlu0 %5418
        %5420 = vrot.lane.b32.xlu0 %v5376, 106
        %v5421 = vpop.permute.xlu0 %5420
        %5422 = vrot.lane.b32.xlu0 %v5377, 106
        %v5423 = vpop.permute.xlu0 %5422
        %5424 = vrot.lane.b32.xlu0 %v5381, 106
        %v5425 = vpop.permute.xlu0 %5424
        %v5426 = vsel %vm771, %v5417, %v5419
        %v5427 = vsel %vm771, %v5419, %v5421
        %v5428 = vsel %vm771, %v5421, %v5423
        %v5429 = vsel %vm771, %v5423, %v5425
        %5430 = vrot.lane.b32.xlu0 %v5380, 105
        %v5431 = vpop.permute.xlu0 %5430
        %5432 = vrot.lane.b32.xlu0 %v5375, 105
        %v5433 = vpop.permute.xlu0 %5432
        %5434 = vrot.lane.b32.xlu0 %v5376, 105
        %v5435 = vpop.permute.xlu0 %5434
        %5436 = vrot.lane.b32.xlu0 %v5377, 105
        %v5437 = vpop.permute.xlu0 %5436
        %5438 = vrot.lane.b32.xlu0 %v5381, 105
        %v5439 = vpop.permute.xlu0 %5438
        %v5440 = vsel %vm786, %v5431, %v5433
        %v5441 = vsel %vm786, %v5433, %v5435
        %v5442 = vsel %vm786, %v5435, %v5437
        %v5443 = vsel %vm786, %v5437, %v5439
        %5444 = vrot.lane.b32.xlu0 %v5380, 104
        %v5445 = vpop.permute.xlu0 %5444
        %5446 = vrot.lane.b32.xlu0 %v5375, 104
        %v5447 = vpop.permute.xlu0 %5446
        %5448 = vrot.lane.b32.xlu0 %v5376, 104
        %v5449 = vpop.permute.xlu0 %5448
        %5450 = vrot.lane.b32.xlu0 %v5377, 104
        %v5451 = vpop.permute.xlu0 %5450
        %5452 = vrot.lane.b32.xlu0 %v5381, 104
        %v5453 = vpop.permute.xlu0 %5452
        %v5454 = vsel %vm801, %v5445, %v5447
        %v5455 = vsel %vm801, %v5447, %v5449
        %v5456 = vsel %vm801, %v5449, %v5451
        %v5457 = vsel %vm801, %v5451, %v5453
        %5458 = vrot.lane.b32.xlu0 %v5380, 84
        %v5459 = vpop.permute.xlu0 %5458
        %5460 = vrot.lane.b32.xlu0 %v5375, 84
        %v5461 = vpop.permute.xlu0 %5460
        %5462 = vrot.lane.b32.xlu0 %v5376, 84
        %v5463 = vpop.permute.xlu0 %5462
        %5464 = vrot.lane.b32.xlu0 %v5377, 84
        %v5465 = vpop.permute.xlu0 %5464
        %5466 = vrot.lane.b32.xlu0 %v5381, 84
        %v5467 = vpop.permute.xlu0 %5466
        %v5468 = vsel %vm816, %v5459, %v5461
        %v5469 = vsel %vm816, %v5461, %v5463
        %v5470 = vsel %vm816, %v5463, %v5465
        %v5471 = vsel %vm816, %v5465, %v5467
        %5472 = vrot.lane.b32.xlu0 %v5380, 83
        %v5473 = vpop.permute.xlu0 %5472
        %5474 = vrot.lane.b32.xlu0 %v5375, 83
        %v5475 = vpop.permute.xlu0 %5474
        %5476 = vrot.lane.b32.xlu0 %v5376, 83
        %v5477 = vpop.permute.xlu0 %5476
        %5478 = vrot.lane.b32.xlu0 %v5377, 83
        %v5479 = vpop.permute.xlu0 %5478
        %5480 = vrot.lane.b32.xlu0 %v5381, 83
        %v5481 = vpop.permute.xlu0 %5480
        %v5482 = vsel %vm831, %v5473, %v5475
        %v5483 = vsel %vm831, %v5475, %v5477
        %v5484 = vsel %vm831, %v5477, %v5479
        %v5485 = vsel %vm831, %v5479, %v5481
        %5486 = vrot.lane.b32.xlu0 %v5380, 82
        %v5487 = vpop.permute.xlu0 %5486
        %5488 = vrot.lane.b32.xlu0 %v5375, 82
        %v5489 = vpop.permute.xlu0 %5488
        %5490 = vrot.lane.b32.xlu0 %v5376, 82
        %v5491 = vpop.permute.xlu0 %5490
        %5492 = vrot.lane.b32.xlu0 %v5377, 82
        %v5493 = vpop.permute.xlu0 %5492
        %5494 = vrot.lane.b32.xlu0 %v5381, 82
        %v5495 = vpop.permute.xlu0 %5494
        %v5496 = vsel %vm846, %v5487, %v5489
        %v5497 = vsel %vm846, %v5489, %v5491
        %v5498 = vsel %vm846, %v5491, %v5493
        %v5499 = vsel %vm846, %v5493, %v5495
        %5501 = vset.pattern.permute.xlu0 0
        %5502 = vperm.xlu0 %5501, %v5385
        %v5503 = vpop.permute.xlu0 %5502
        %5505 = vrot.lane.b32.xlu0 %v5398, 82
        %v5506 = vpop.permute.xlu0 %5505
        %5507 = vrot.lane.b32.xlu0 %v5399, 82
        %v5508 = vpop.permute.xlu0 %5507
        %5509 = vrot.lane.b32.xlu0 %v5400, 82
        %v5510 = vpop.permute.xlu0 %5509
        %5511 = vrot.lane.b32.xlu0 %v5401, 82
        %v5512 = vpop.permute.xlu0 %5511
        %5513 = vrot.lane.b32.xlu0 %v5397, 82
        %v5514 = vpop.permute.xlu0 %5513
        %5515 = vrot.lane.b32.xlu0 %v5412, 82
        %v5516 = vpop.permute.xlu0 %5515
        %5517 = vrot.lane.b32.xlu0 %v5413, 82
        %v5518 = vpop.permute.xlu0 %5517
        %5519 = vrot.lane.b32.xlu0 %v5414, 82
        %v5520 = vpop.permute.xlu0 %5519
        %5521 = vrot.lane.b32.xlu0 %v5415, 82
        %v5522 = vpop.permute.xlu0 %5521
        %5523 = vrot.lane.b32.xlu0 %v5411, 82
        %v5524 = vpop.permute.xlu0 %5523
        %5525 = vrot.lane.b32.xlu0 %v5426, 82
        %v5526 = vpop.permute.xlu0 %5525
        %5527 = vrot.lane.b32.xlu0 %v5427, 82
        %v5528 = vpop.permute.xlu0 %5527
        %5529 = vrot.lane.b32.xlu0 %v5428, 82
        %v5530 = vpop.permute.xlu0 %5529
        %5531 = vrot.lane.b32.xlu0 %v5429, 82
        %v5532 = vpop.permute.xlu0 %5531
        %5533 = vrot.lane.b32.xlu0 %v5425, 82
        %v5534 = vpop.permute.xlu0 %5533
        %5535 = vrot.lane.b32.xlu0 %v5440, 82
        %v5536 = vpop.permute.xlu0 %5535
        %5537 = vrot.lane.b32.xlu0 %v5441, 82
        %v5538 = vpop.permute.xlu0 %5537
        %5539 = vrot.lane.b32.xlu0 %v5442, 82
        %v5540 = vpop.permute.xlu0 %5539
        %5541 = vrot.lane.b32.xlu0 %v5443, 82
        %v5542 = vpop.permute.xlu0 %5541
        %5543 = vrot.lane.b32.xlu0 %v5439, 82
        %v5544 = vpop.permute.xlu0 %5543
        %5545 = vrot.lane.b32.xlu0 %v5454, 82
        %v5546 = vpop.permute.xlu0 %5545
        %5547 = vrot.lane.b32.xlu0 %v5455, 82
        %v5548 = vpop.permute.xlu0 %5547
        %5549 = vrot.lane.b32.xlu0 %v5456, 82
        %v5550 = vpop.permute.xlu0 %5549
        %5551 = vrot.lane.b32.xlu0 %v5457, 82
        %v5552 = vpop.permute.xlu0 %5551
        %5553 = vrot.lane.b32.xlu0 %v5453, 82
        %v5554 = vpop.permute.xlu0 %5553
        %5555 = vrot.lane.b32.xlu0 %v5468, 82
        %v5556 = vpop.permute.xlu0 %5555
        %5557 = vrot.lane.b32.xlu0 %v5469, 82
        %v5558 = vpop.permute.xlu0 %5557
        %5559 = vrot.lane.b32.xlu0 %v5470, 82
        %v5560 = vpop.permute.xlu0 %5559
        %5561 = vrot.lane.b32.xlu0 %v5471, 82
        %v5562 = vpop.permute.xlu0 %5561
        %5563 = vrot.lane.b32.xlu0 %v5467, 82
        %v5564 = vpop.permute.xlu0 %5563
        %5565 = vrot.lane.b32.xlu0 %v5482, 82
        %v5566 = vpop.permute.xlu0 %5565
        %5567 = vrot.lane.b32.xlu0 %v5483, 82
        %v5568 = vpop.permute.xlu0 %5567
        %5569 = vrot.lane.b32.xlu0 %v5484, 82
        %v5570 = vpop.permute.xlu0 %5569
        %5571 = vrot.lane.b32.xlu0 %v5485, 82
        %v5572 = vpop.permute.xlu0 %5571
        %5573 = vrot.lane.b32.xlu0 %v5481, 82
        %v5574 = vpop.permute.xlu0 %5573
        %5575 = vrot.lane.b32.xlu0 %v1408, 82
        %v5576 = vpop.permute.xlu0 %5575
        %5577 = vrot.lane.b32.xlu0 %v1409, 82
        %v5578 = vpop.permute.xlu0 %5577
        %5579 = vrot.lane.b32.xlu0 %v1410, 82
        %v5580 = vpop.permute.xlu0 %5579
        %5581 = vrot.lane.b32.xlu0 %v1411, 82
        %v5582 = vpop.permute.xlu0 %5581
        %5583 = vrot.lane.b32.xlu0 %v1407, 82
        %v5584 = vpop.permute.xlu0 %5583
        %5585 = vrot.lane.b32.xlu0 %v3915, 82
        %v5586 = vpop.permute.xlu0 %5585
        %5587 = vrot.lane.b32.xlu0 %v3916, 82
        %v5588 = vpop.permute.xlu0 %5587
        %5589 = vrot.lane.b32.xlu0 %v3917, 82
        %v5590 = vpop.permute.xlu0 %5589
        %5591 = vrot.lane.b32.xlu0 %v3918, 82
        %v5592 = vpop.permute.xlu0 %5591
        %5593 = vrot.lane.b32.xlu0 %v3614, 82
        %v5594 = vpop.permute.xlu0 %5593
        %5595 = vrot.lane.b32.xlu0 %v5496, 82
        %v5596 = vpop.permute.xlu0 %5595
        %5597 = vrot.lane.b32.xlu0 %v5497, 82
        %v5598 = vpop.permute.xlu0 %5597
        %5599 = vrot.lane.b32.xlu0 %v5498, 82
        %v5600 = vpop.permute.xlu0 %5599
        %5601 = vrot.lane.b32.xlu0 %v5499, 82
        %v5602 = vpop.permute.xlu0 %5601
        %5603 = vrot.lane.b32.xlu0 %v5495, 82
        %v5604 = vpop.permute.xlu0 %5603
        %v5605 = vsel %vm846, %v5506, %v5508
        %v5606 = vsel %vm846, %v5508, %v5510
        %v5607 = vsel %vm846, %v5510, %v5512
        %v5608 = vsel %vm846, %v5512, %v5514
        %v5609 = vsel %vm846, %v5516, %v5518
        %v5610 = vsel %vm846, %v5518, %v5520
        %v5611 = vsel %vm846, %v5520, %v5522
        %v5612 = vsel %vm846, %v5522, %v5524
        %v5613 = vsel %vm846, %v5526, %v5528
        %v5614 = vsel %vm846, %v5528, %v5530
        %v5615 = vsel %vm846, %v5530, %v5532
        %v5616 = vsel %vm846, %v5532, %v5534
        %v5617 = vsel %vm846, %v5536, %v5538
        %v5618 = vsel %vm846, %v5538, %v5540
        %v5619 = vsel %vm846, %v5540, %v5542
        %v5620 = vsel %vm846, %v5542, %v5544
        %v5621 = vsel %vm846, %v5546, %v5548
        %v5622 = vsel %vm846, %v5548, %v5550
        %v5623 = vsel %vm846, %v5550, %v5552
        %v5624 = vsel %vm846, %v5552, %v5554
        %v5625 = vsel %vm846, %v5556, %v5558
        %v5626 = vsel %vm846, %v5558, %v5560
        %v5627 = vsel %vm846, %v5560, %v5562
        %v5628 = vsel %vm846, %v5562, %v5564
        %v5629 = vsel %vm846, %v5566, %v5568
        %v5630 = vsel %vm846, %v5568, %v5570
        %v5631 = vsel %vm846, %v5570, %v5572
        %v5632 = vsel %vm846, %v5572, %v5574
        %v5633 = vsel %vm846, %v5576, %v5578
        %v5634 = vsel %vm846, %v5578, %v5580
        %v5635 = vsel %vm846, %v5580, %v5582
        %v5636 = vsel %vm846, %v5582, %v5584
        %v5637 = vsel %vm846, %v5586, %v5588
        %v5638 = vsel %vm846, %v5588, %v5590
        %v5639 = vsel %vm846, %v5590, %v5592
        %v5640 = vsel %vm846, %v5592, %v5594
        %v5641 = vsel %vm846, %v5596, %v5598
        %v5642 = vsel %vm846, %v5598, %v5600
        %v5643 = vsel %vm846, %v5600, %v5602
        %v5644 = vsel %vm846, %v5602, %v5604
        %vm5689 = vcmask 261120
        %v5691 = vsel %vm5689, %v5384, 0
        %5693 = vmatprep.subr.mxu0 %v848
        %5694 = vmatpush1.msra.mxu0 %v847
        %5695 = vmatprep.subr.mxu0 %v1409
        %5696 = vmatpush1.msra.mxu0 %v1408
        %5697 = vmatprep.subr.mxu0 %v3916
        %5698 = vmatpush1.msra.mxu0 %v3915
        %5699 = vmatprep.subr.mxu0 %v5497
        %5700 = vmatpush1.msra.mxu0 %v5496
        %5701 = vmatprep.subr.mxu0 %v937
        %5702 = vmatpush1.msra.mxu0 %v936
        %5703 = vmatprep.subr.mxu0 %v3920
        %5704 = vmatpush1.msra.mxu0 %v3919
        %5705 = vmatprep.subr.mxu0 %v3924
        %5706 = vmatpush1.msra.mxu0 %v3923
        %5707 = vmatprep.subr.mxu0 %v5606
        %5708 = vmatpush1.msra.mxu0 %v5605
        %5709 = vmatprep.subr.mxu0 %v941
        %5710 = vmatpush1.msra.mxu0 %v940
        %5711 = vmatprep.subr.mxu0 %v3928
        %5712 = vmatpush1.msra.mxu0 %v3927
        %5713 = vmatprep.subr.mxu0 %v3932
        %5714 = vmatpush1.msra.mxu0 %v3931
        %5715 = vmatprep.subr.mxu0 %v5610
        %5716 = vmatpush1.msra.mxu0 %v5609
        %5717 = vmatprep.subr.mxu0 %v945
        %5718 = vmatpush1.msra.mxu0 %v944
        %5719 = vmatprep.subr.mxu0 %v3968
        %5720 = vmatpush1.msra.mxu0 %v3967
        %5721 = vmatprep.subr.mxu0 %v3972
        %5722 = vmatpush1.msra.mxu0 %v3971
        %5723 = vmatprep.subr.mxu0 %v5614
        %5724 = vmatpush1.msra.mxu0 %v5613
        %5725 = vmatprep.subr.mxu0 %v949
        %5726 = vmatpush1.msra.mxu0 %v948
        %5727 = vmatprep.subr.mxu0 %v3976
        %5728 = vmatpush1.msra.mxu0 %v3975
        %5729 = vmatprep.subr.mxu0 %v3980
        %5730 = vmatpush1.msra.mxu0 %v3979
        %5731 = vmatprep.subr.mxu0 %v5618
        %5732 = vmatpush1.msra.mxu0 %v5617
        %5733 = vmatprep.subr.mxu0 %v953
        %5734 = vmatpush1.msra.mxu0 %v952
        %5735 = vmatprep.subr.mxu0 %v3984
        %5736 = vmatpush1.msra.mxu0 %v3983
        %5737 = vmatprep.subr.mxu0 %v3988
        %5738 = vmatpush1.msra.mxu0 %v3987
        %5739 = vmatprep.subr.mxu0 %v5622
        %5740 = vmatpush1.msra.mxu0 %v5621
        %5741 = vmatprep.subr.mxu0 %v957
        %5742 = vmatpush1.msra.mxu0 %v956
        %5743 = vmatprep.subr.mxu0 %v4024
        %5744 = vmatpush1.msra.mxu0 %v4023
        %5745 = vmatprep.subr.mxu0 %v4028
        %5746 = vmatpush1.msra.mxu0 %v4027
        %5747 = vmatprep.subr.mxu0 %v5626
        %5748 = vmatpush1.msra.mxu0 %v5625
        %5749 = vmatprep.subr.mxu0 %v961
        %5750 = vmatpush1.msra.mxu0 %v960
        %5751 = vmatprep.subr.mxu0 %v4032
        %5752 = vmatpush1.msra.mxu0 %v4031
        %5753 = vmatprep.subr.mxu0 %v4036
        %5754 = vmatpush1.msra.mxu0 %v4035
        %5755 = vmatprep.subr.mxu0 %v5630
        %5756 = vmatpush1.msra.mxu0 %v5629
        %5757 = vmatprep.mubr.f32.mxu0 %v5383
        %5758 = vmatmul.mubr.f32.gmra.mrb[0].mxu0 %v5382
        %v5759 = vpop.f32.mrb[0].mxu0
        %v5760 = vadd.f32 %v5503, %v5759
        %v5761 = vpop.f32.mrb[0].mxu0
        %v5762 = vadd.f32 %v5503, %v5761
        %5763 = vdwg.mxu0
        %5764 = vmatprep.subr.mxu0 %v965
        %5765 = vmatpush1.msra.mxu0 %v964
        %5766 = vmatprep.subr.mxu0 %v5634
        %5767 = vmatpush1.msra.mxu0 %v5633
        %5768 = vmatprep.subr.mxu0 %v5638
        %5769 = vmatpush1.msra.mxu0 %v5637
        %5770 = vmatprep.subr.mxu0 %v5642
        %5771 = vmatpush1.msra.mxu0 %v5641
        %5772 = vmatprep.subr.mxu0 0.0
        %5773 = vmatpush1.msra.mxu0 0.0
        %5774 = vmatprep.subr.mxu0 0.0
        %5775 = vmatpush1.msra.mxu0 0.0
        %5776 = vmatprep.subr.mxu0 0.0
        %5777 = vmatpush1.msra.mxu0 0.0
        %5778 = vmatprep.subr.mxu0 0.0
        %5779 = vmatpush1.msra.mxu0 0.0
        %5780 = vmatprep.subr.mxu0 0.0
        %5781 = vmatpush1.msra.mxu0 0.0
        %5782 = vmatprep.subr.mxu0 0.0
        %5783 = vmatpush1.msra.mxu0 0.0
        %5784 = vmatprep.subr.mxu0 0.0
        %5785 = vmatpush1.msra.mxu0 0.0
        %5786 = vmatprep.subr.mxu0 0.0
        %5787 = vmatpush1.msra.mxu0 0.0
        %5788 = vmatprep.subr.mxu0 0.0
        %5789 = vmatpush1.msra.mxu0 0.0
        %5790 = vmatprep.subr.mxu0 0.0
        %5791 = vmatpush1.msra.mxu0 0.0
        %5792 = vmatprep.subr.mxu0 0.0
        %5793 = vmatpush1.msra.mxu0 0.0
        %5794 = vmatprep.subr.mxu0 0.0
        %5795 = vmatpush1.msra.mxu0 0.0
        %5796 = vmatprep.subr.mxu0 0.0
        %5797 = vmatpush1.msra.mxu0 0.0
        %5798 = vmatprep.subr.mxu0 0.0
        %5799 = vmatpush1.msra.mxu0 0.0
        %5800 = vmatprep.subr.mxu0 0.0
        %5801 = vmatpush1.msra.mxu0 0.0
        %5802 = vmatprep.subr.mxu0 0.0
        %5803 = vmatpush1.msra.mxu0 0.0
        %5804 = vmatprep.subr.mxu0 0.0
        %5805 = vmatpush1.msra.mxu0 0.0
        %5806 = vmatprep.subr.mxu0 0.0
        %5807 = vmatpush1.msra.mxu0 0.0
        %5808 = vmatprep.subr.mxu0 0.0
        %5809 = vmatpush1.msra.mxu0 0.0
        %5810 = vmatprep.subr.mxu0 0.0
        %5811 = vmatpush1.msra.mxu0 0.0
        %5812 = vmatprep.subr.mxu0 0.0
        %5813 = vmatpush1.msra.mxu0 0.0
        %5814 = vmatprep.subr.mxu0 0.0
        %5815 = vmatpush1.msra.mxu0 0.0
        %5816 = vmatprep.subr.mxu0 0.0
        %5817 = vmatpush1.msra.mxu0 0.0
        %5818 = vmatprep.subr.mxu0 0.0
        %5819 = vmatpush1.msra.mxu0 0.0
        %5820 = vmatprep.subr.mxu0 0.0
        %5821 = vmatpush1.msra.mxu0 0.0
        %5822 = vmatprep.subr.mxu0 0.0
        %5823 = vmatpush1.msra.mxu0 0.0
        %5824 = vmatprep.subr.mxu0 0.0
        %5825 = vmatpush1.msra.mxu0 0.0
        %5826 = vmatprep.subr.mxu0 0.0
        %5827 = vmatpush1.msra.mxu0 0.0
        %5828 = vmatprep.mubr.f32.mxu0 0.0
        %5829 = vmatmul.mubr.f32.gmra.mrb[0].mxu0 %v5691
        %v5830 = vpop.f32.mrb[0].mxu0
        %v5831 = vadd.f32 %v5760, %v5830
        %v5832 = vpop.f32.mrb[0].mxu0
        %v5833 = vadd.f32 %v5762, %v5832
        %5834 = vdwg.mxu0
        %5835 = vmatprep.subr.mxu0 %v850
        %5836 = vmatpush1.msra.mxu0 %v849
        %5837 = vmatprep.subr.mxu0 %v1411
        %5838 = vmatpush1.msra.mxu0 %v1410
        %5839 = vmatprep.subr.mxu0 %v3918
        %5840 = vmatpush1.msra.mxu0 %v3917
        %5841 = vmatprep.subr.mxu0 %v5499
        %5842 = vmatpush1.msra.mxu0 %v5498
        %5843 = vmatprep.subr.mxu0 %v939
        %5844 = vmatpush1.msra.mxu0 %v938
        %5845 = vmatprep.subr.mxu0 %v3922
        %5846 = vmatpush1.msra.mxu0 %v3921
        %5847 = vmatprep.subr.mxu0 %v3926
        %5848 = vmatpush1.msra.mxu0 %v3925
        %5849 = vmatprep.subr.mxu0 %v5608
        %5850 = vmatpush1.msra.mxu0 %v5607
        %5851 = vmatprep.subr.mxu0 %v943
        %5852 = vmatpush1.msra.mxu0 %v942
        %5853 = vmatprep.subr.mxu0 %v3930
        %5854 = vmatpush1.msra.mxu0 %v3929
        %5855 = vmatprep.subr.mxu0 %v3934
        %5856 = vmatpush1.msra.mxu0 %v3933
        %5857 = vmatprep.subr.mxu0 %v5612
        %5858 = vmatpush1.msra.mxu0 %v5611
        %5859 = vmatprep.subr.mxu0 %v947
        %5860 = vmatpush1.msra.mxu0 %v946
        %5861 = vmatprep.subr.mxu0 %v3970
        %5862 = vmatpush1.msra.mxu0 %v3969
        %5863 = vmatprep.subr.mxu0 %v3974
        %5864 = vmatpush1.msra.mxu0 %v3973
        %5865 = vmatprep.subr.mxu0 %v5616
        %5866 = vmatpush1.msra.mxu0 %v5615
        %5867 = vmatprep.subr.mxu0 %v951
        %5868 = vmatpush1.msra.mxu0 %v950
        %5869 = vmatprep.subr.mxu0 %v3978
        %5870 = vmatpush1.msra.mxu0 %v3977
        %5871 = vmatprep.subr.mxu0 %v3982
        %5872 = vmatpush1.msra.mxu0 %v3981
        %5873 = vmatprep.subr.mxu0 %v5620
        %5874 = vmatpush1.msra.mxu0 %v5619
        %5875 = vmatprep.subr.mxu0 %v955
        %5876 = vmatpush1.msra.mxu0 %v954
        %5877 = vmatprep.subr.mxu0 %v3986
        %5878 = vmatpush1.msra.mxu0 %v3985
        %5879 = vmatprep.subr.mxu0 %v3990
        %5880 = vmatpush1.msra.mxu0 %v3989
        %5881 = vmatprep.subr.mxu0 %v5624
        %5882 = vmatpush1.msra.mxu0 %v5623
        %5883 = vmatprep.subr.mxu0 %v959
        %5884 = vmatpush1.msra.mxu0 %v958
        %5885 = vmatprep.subr.mxu0 %v4026
        %5886 = vmatpush1.msra.mxu0 %v4025
        %5887 = vmatprep.subr.mxu0 %v4030
        %5888 = vmatpush1.msra.mxu0 %v4029
        %5889 = vmatprep.subr.mxu0 %v5628
        %5890 = vmatpush1.msra.mxu0 %v5627
        %5891 = vmatprep.subr.mxu0 %v963
        %5892 = vmatpush1.msra.mxu0 %v962
        %5893 = vmatprep.subr.mxu0 %v4034
        %5894 = vmatpush1.msra.mxu0 %v4033
        %5895 = vmatprep.subr.mxu0 %v4038
        %5896 = vmatpush1.msra.mxu0 %v4037
        %5897 = vmatprep.subr.mxu0 %v5632
        %5898 = vmatpush1.msra.mxu0 %v5631
        %5899 = vmatprep.mubr.f32.mxu0 %v5383
        %5900 = vmatmul.mubr.f32.gmra.mrb[0].mxu0 %v5382
        %v5901 = vpop.f32.mrb[0].mxu0
        %v5902 = vadd.f32 %v5503, %v5901
        %v5903 = vpop.f32.mrb[0].mxu0
        %v5904 = vadd.f32 %v5503, %v5903
        %5905 = vdwg.mxu0
        %5906 = vmatprep.subr.mxu0 %v967
        %5907 = vmatpush1.msra.mxu0 %v966
        %5908 = vmatprep.subr.mxu0 %v5636
        %5909 = vmatpush1.msra.mxu0 %v5635
        %5910 = vmatprep.subr.mxu0 %v5640
        %5911 = vmatpush1.msra.mxu0 %v5639
        %5912 = vmatprep.subr.mxu0 %v5644
        %5913 = vmatpush1.msra.mxu0 %v5643
        %5914 = vmatprep.subr.mxu0 0.0
        %5915 = vmatpush1.msra.mxu0 0.0
        %5916 = vmatprep.subr.mxu0 0.0
        %5917 = vmatpush1.msra.mxu0 0.0
        %5918 = vmatprep.subr.mxu0 0.0
        %5919 = vmatpush1.msra.mxu0 0.0
        %5920 = vmatprep.subr.mxu0 0.0
        %5921 = vmatpush1.msra.mxu0 0.0
        %5922 = vmatprep.subr.mxu0 0.0
        %5923 = vmatpush1.msra.mxu0 0.0
        %5924 = vmatprep.subr.mxu0 0.0
        %5925 = vmatpush1.msra.mxu0 0.0
        %5926 = vmatprep.subr.mxu0 0.0
        %5927 = vmatpush1.msra.mxu0 0.0
        %5928 = vmatprep.subr.mxu0 0.0
        %5929 = vmatpush1.msra.mxu0 0.0
        %5930 = vmatprep.subr.mxu0 0.0
        %5931 = vmatpush1.msra.mxu0 0.0
        %5932 = vmatprep.subr.mxu0 0.0
        %5933 = vmatpush1.msra.mxu0 0.0
        %5934 = vmatprep.subr.mxu0 0.0
        %5935 = vmatpush1.msra.mxu0 0.0
        %5936 = vmatprep.subr.mxu0 0.0
        %5937 = vmatpush1.msra.mxu0 0.0
        %5938 = vmatprep.subr.mxu0 0.0
        %5939 = vmatpush1.msra.mxu0 0.0
        %5940 = vmatprep.subr.mxu0 0.0
        %5941 = vmatpush1.msra.mxu0 0.0
        %5942 = vmatprep.subr.mxu0 0.0
        %5943 = vmatpush1.msra.mxu0 0.0
        %5944 = vmatprep.subr.mxu0 0.0
        %5945 = vmatpush1.msra.mxu0 0.0
        %5946 = vmatprep.subr.mxu0 0.0
        %5947 = vmatpush1.msra.mxu0 0.0
        %5948 = vmatprep.subr.mxu0 0.0
        %5949 = vmatpush1.msra.mxu0 0.0
        %5950 = vmatprep.subr.mxu0 0.0
        %5951 = vmatpush1.msra.mxu0 0.0
        %5952 = vmatprep.subr.mxu0 0.0
        %5953 = vmatpush1.msra.mxu0 0.0
        %5954 = vmatprep.subr.mxu0 0.0
        %5955 = vmatpush1.msra.mxu0 0.0
        %5956 = vmatprep.subr.mxu0 0.0
        %5957 = vmatpush1.msra.mxu0 0.0
        %5958 = vmatprep.subr.mxu0 0.0
        %5959 = vmatpush1.msra.mxu0 0.0
        %5960 = vmatprep.subr.mxu0 0.0
        %5961 = vmatpush1.msra.mxu0 0.0
        %5962 = vmatprep.subr.mxu0 0.0
        %5963 = vmatpush1.msra.mxu0 0.0
        %5964 = vmatprep.subr.mxu0 0.0
        %5965 = vmatpush1.msra.mxu0 0.0
        %5966 = vmatprep.subr.mxu0 0.0
        %5967 = vmatpush1.msra.mxu0 0.0
        %5968 = vmatprep.subr.mxu0 0.0
        %5969 = vmatpush1.msra.mxu0 0.0
        %5970 = vmatprep.mubr.f32.mxu0 0.0
        %5971 = vmatmul.mubr.f32.gmra.mrb[0].mxu0 %v5691
        %v5972 = vpop.f32.mrb[0].mxu0
        %v5973 = vadd.f32 %v5902, %v5972
        %v5974 = vpop.f32.mrb[0].mxu0
        %v5975 = vadd.f32 %v5904, %v5974
        %5976 = vdwg.mxu0
        %v5977 = vmax.f32 %v5831, 0.0
        %v5978 = vmax.f32 %v5833, 0.0
        %v5979 = vmax.f32 %v5973, 0.0
        %v5980 = vmax.f32 %v5975, 0.0
        %v5981 = vmul.f32 %v5977, %v480
        %v5982 = vmul.f32 %v5978, %v481
        %v5983 = vmul.f32 %v5979, %v482
        %v5984 = vmul.f32 %v5980, %v483
        %v5985 = vsub.f32 %v5981, %v5977
        %v5986 = vsub.f32 %v5982, %v5978
        %v5987 = vsub.f32 %v5983, %v5979
        %v5988 = vsub.f32 %v5984, %v5980
        %v5989 = vadd.f32 %v5985, 1.0
        %v5990 = vadd.f32 %v5986, 1.0
        %v5991 = vadd.f32 %v5987, 1.0
        %v5992 = vadd.f32 %v5988, 1.0
        %v5993 = vmax.f32 %v5989, 0.0
        %v5994 = vmax.f32 %v5990, 0.0
        %v5995 = vmax.f32 %v5991, 0.0
        %v5996 = vmax.f32 %v5992, 0.0
        %5997 = vst [vmem:[%s479] sm:$0xff] %v5993
        %5998 = vst [vmem:[%s479 + $0x8] sm:$0xff] %v5994
        %5999 = vst [vmem:[%s479 + $0x10] sm:$0xff] %v5995
        %6000 = vst [vmem:[%s479 + $0x18] sm:$0xff] %v5996
        %s6001 = sand.u32 %s296, 1
        %s6002 = scalar_lea.sflag [#allocation4], %s6001
        %s6003 = sand.u32 %s296, 1
        %s6004 = smul.addr %s6003, 32
        %s6005 = scalar_lea.vmem [#allocation11], %s6004
        // Predicated region
        $region89: #{tpu_custom_call.1} parent=67 // pred_check
          %p6006 = pneg %p306
        $region90: #{tpu_custom_call.1} parent=67 // pred_check_branch
          %6008 = sbr.rel (%p6006) target = $region92
        $region91: #{tpu_custom_call.1} parent=67 // pred_region
          %s6010 = ssub.s32 512, 512
          %6011 = vsyncadd %s6002, %s6010
          %s6012 = smul.addr %s31, 4
          %s6013 = smul.addr %s6012, 128
          %s6014 = scalar_lea.hbm %s12, %s6013
          %s6016 = sshll.u32 %s6005, 4
          %s6017 = int_to_ptr.vmem [resolvable:$true] %s6016
          %6019 = dma.vmem_to_hbm [thread:$0]  %s6017, 512, %s6014, %s6002
        $region92: #{tpu_custom_call.1} parent=67 // pred_fallthru
          _
      $region68: #{tpu_custom_call.1} parent=5 // pred_fallthru
        _
      %p6020 = scmp.le.s32.totalorder 2, %s26
      // Predicated region
      $region93: #{tpu_custom_call.1} parent=5 // pred_check
        %p6021 = pneg %p6020
      $region94: #{tpu_custom_call.1} parent=5 // pred_check_branch
        %6023 = sbr.rel (%p6021) target = $region96
      $region95: #{tpu_custom_call.1} parent=5 // pred_region
        %s6024 = ssub.s32 %s26, 2
        // Predicated region
        $region97: #{tpu_custom_call.1} parent=95 // pred_check
          %p6025 = pneg %p312
        $region98: #{tpu_custom_call.1} parent=95 // pred_check_branch
          %6027 = sbr.rel (%p6025) target = $region100
        $region99: #{tpu_custom_call.1} parent=95 // pred_region
          %s6028 = sand.u32 %s297, 1
          %s6029 = scalar_lea.sflag [#allocation4], %s6028
          %s6030 = sand.u32 %s297, 1
          %s6031 = smul.addr %s6030, 32
          %s6032 = scalar_lea.vmem [#allocation11], %s6031
          %6033 = dma.done %s6029, 512
        $region100: #{tpu_custom_call.1} parent=95 // pred_fallthru
          _
      $region96: #{tpu_custom_call.1} parent=5 // pred_fallthru
        _
    $region6: #{tpu_custom_call.1} parent=1 // loop_footer
      %s30 = sadd.s32 1, %s26
    $region7: #{tpu_custom_call.1} parent=1 // loop_footer_branch
      %25 = sbr.rel target = $region3
    $region8: #{tpu_custom_call.1} parent=1 // loop_exit
      _
    %6034 = vsyncpa [#allocation3], 1
    %s6035 = scalar_lea.sflag [#allocation3], 1
    %6036 = vsyncpa %s6035, 1
    %6037 = vsyncpa [#allocation6], 1
    %6038 = vsyncpa [#allocation9], 1
    %6039 = vsyncpa [#allocation4], 1
    %s6040 = scalar_lea.sflag [#allocation4], 1
    %6041 = vsyncpa %s6040, 1

</llo_original>
